<compile_context>
chip_gen: v6e
topology: v6e:2x2x1
jax: 0.10.0
libtpu: 0.0.40
codegen_flags: <defaults>
</compile_context>

<pallas_src>
import functools

import jax
import jax.numpy as jnp
from jax.experimental import pallas as pl
from jax.experimental.pallas import tpu as pltpu

SUBLANE = 8
LANE = 128


def _round_up(x, m):
    return (x + m - 1) // m * m


# ----------------------------------------------------------------------------
# Bi-directional LSTM layer: one pallas_call, grid=(2,) over direction.
# ----------------------------------------------------------------------------
def _bilstm_kernel(x_ref, wih_ref, whh_ref, b_ref, y_ref, gx_ref, *,
                   seq, batch, hidden):
    """Single-direction LSTM over the whole sequence (direction = grid axis 0).

    x_ref:   (seq*batch, in_features)  f32  time-major rows (shared by dirs)
    wih_ref: (in_features, 4*hidden)   bf16 this direction (gate-lane padded)
    whh_ref: (hidden, 4*hidden)        bf16 this direction
    b_ref:   (1, 4*hidden)             f32  (b_ih + b_hh)
    y_ref:   (seq, batch, hidden)      f32  outputs at ORIGINAL time positions
    gx_ref:  (seq*batch, 4*hidden)     f32  VMEM scratch (hoisted projection)
    """
    d = pl.program_id(0)  # 0 = forward, 1 = reverse

    # Hoisted input projection: one big MXU matmul covering every time step.
    gx_ref[...] = (
        jnp.dot(x_ref[...].astype(jnp.bfloat16), wih_ref[...],
                preferred_element_type=jnp.float32)
        + b_ref[...])

    whh = whh_ref[...]

    def run(time_indices):
        h = jnp.zeros((batch, hidden), jnp.float32)
        c = jnp.zeros((batch, hidden), jnp.float32)
        for tau in time_indices:  # fully unrolled, static indices
            gx_t = gx_ref[pl.ds(tau * batch, batch), :]
            gates = gx_t + jnp.dot(h.astype(whh.dtype), whh,
                                   preferred_element_type=jnp.float32)
            # PyTorch gate order i, f, g, o — slices are 128-lane aligned.
            i = jax.nn.sigmoid(gates[:, 0 * hidden:1 * hidden])
            f = jax.nn.sigmoid(gates[:, 1 * hidden:2 * hidden])
            g = jnp.tanh(gates[:, 2 * hidden:3 * hidden])
            o = jax.nn.sigmoid(gates[:, 3 * hidden:4 * hidden])
            c = f * c + i * g
            h = o * jnp.tanh(c)
            y_ref[tau] = h  # lane-dense (batch, hidden) store, VMEM-resident

    @pl.when(d == 0)
    def _fwd():
        run(range(seq))

    @pl.when(d == 1)
    def _rev():
        run(range(seq - 1, -1, -1))


def bilstm_layer(x2d, w_ih, w_hh, b, *, seq, batch):
    """x2d: (seq*batch, I) f32. w_ih: (2, I, 4Hp) bf16. w_hh: (2, Hp, 4Hp) bf16.
    b: (2, 1, 4Hp) f32. Returns (2, seq, batch, Hp) f32 (dir, time, batch, hid)."""
    sb, in_features = x2d.shape
    hp = w_hh.shape[1]
    g4 = w_hh.shape[2]
    return pl.pallas_call(
        functools.partial(_bilstm_kernel, seq=seq, batch=batch, hidden=hp),
        out_shape=jax.ShapeDtypeStruct((2, seq, batch, hp), jnp.float32),
        grid=(2,),
        in_specs=[
            pl.BlockSpec((sb, in_features), lambda d: (0, 0)),
            pl.BlockSpec((None, in_features, g4), lambda d: (d, 0, 0)),
            pl.BlockSpec((None, hp, g4), lambda d: (d, 0, 0)),
            pl.BlockSpec((None, 1, g4), lambda d: (d, 0, 0)),
        ],
        out_specs=pl.BlockSpec((None, seq, batch, hp), lambda d: (d, 0, 0, 0)),
        scratch_shapes=[pltpu.VMEM((sb, g4), jnp.float32)],
        compiler_params=pltpu.CompilerParams(
            dimension_semantics=("parallel",)),
    )(x2d, w_ih, w_hh, b)


# ----------------------------------------------------------------------------
# Final fully-connected layer: (Bp, 2H) @ (2H, OUTp) + bias (OUTp = 128-padded)
# ----------------------------------------------------------------------------
def _fc_kernel(x_ref, w_ref, b_ref, o_ref):
    o_ref[...] = (jnp.dot(x_ref[...], w_ref[...],
                          preferred_element_type=jnp.float32) + b_ref[...])


def fc_padded(x, w, b):
    bp = x.shape[0]
    outp = w.shape[1]
    return pl.pallas_call(
        _fc_kernel,
        out_shape=jax.ShapeDtypeStruct((bp, outp), jnp.float32),
    )(x, w, b)


# ----------------------------------------------------------------------------
# Parameter construction (deterministic, synthetic — no checkpoint load)
# ----------------------------------------------------------------------------
def _scatter_gate_cols(w, h, hp):
    """(rows, 4h) -> (rows, 4hp); gate k real cols go to [k*hp, k*hp+h)."""
    out = jnp.zeros(w.shape[:-1] + (4 * hp,), w.dtype)
    for k in range(4):
        out = out.at[..., k * hp:k * hp + h].set(w[..., k * h:(k + 1) * h])
    return out


def init_params(key, *, vocab, bert_dim, hidden_dim, output_size, n_layers):
    hp = _round_up(hidden_dim, LANE)
    outp = _round_up(output_size, LANE)
    params = {"hidden": hidden_dim, "hidden_padded": hp,
              "output_size": output_size}

    k_emb, k_lstm, k_fc = jax.random.split(key, 3)
    params["embedding"] = (
        jax.random.normal(k_emb, (vocab, bert_dim), jnp.float32) * 0.02)

    scale = 1.0 / jnp.sqrt(hidden_dim)
    layers = []
    keys = jax.random.split(k_lstm, n_layers * 2)
    for layer in range(n_layers):
        in_size = bert_dim if layer == 0 else 2 * hidden_dim
        wih_d, whh_d, b_d = [], [], []
        for dd in range(2):  # 0 = forward, 1 = reverse
            kk = jax.random.split(keys[layer * 2 + dd], 4)
            w_ih = jax.random.uniform(kk[0], (in_size, 4 * hidden_dim),
                                      jnp.float32, -scale, scale)
            w_hh = jax.random.uniform(kk[1], (hidden_dim, 4 * hidden_dim),
                                      jnp.float32, -scale, scale)
            b_ih = jax.random.uniform(kk[2], (4 * hidden_dim,), jnp.float32,
                                      -scale, scale)
            b_hh = jax.random.uniform(kk[3], (4 * hidden_dim,), jnp.float32,
                                      -scale, scale)
            wih_p = _scatter_gate_cols(w_ih, hidden_dim, hp)
            whh_p = jnp.zeros((hp, 4 * hp), jnp.float32).at[:hidden_dim].set(
                _scatter_gate_cols(w_hh, hidden_dim, hp))
            b_p = _scatter_gate_cols((b_ih + b_hh).reshape(1, 4 * hidden_dim),
                                     hidden_dim, hp)
            wih_d.append(wih_p.astype(jnp.bfloat16))
            whh_d.append(whh_p.astype(jnp.bfloat16))
            b_d.append(b_p)
        layers.append({
            "w_ih": jnp.stack(wih_d),   # (2, in_size, 4hp) bf16
            "w_hh": jnp.stack(whh_d),   # (2, hp, 4hp)      bf16
            "b": jnp.stack(b_d),        # (2, 1, 4hp)       f32
        })
    params["lstm"] = layers

    k1, k2 = jax.random.split(k_fc)
    fc_scale = 1.0 / jnp.sqrt(2 * hidden_dim)
    fc_w = jax.random.uniform(k1, (2 * hidden_dim, output_size),
                              jnp.float32, -fc_scale, fc_scale)
    fc_b = jax.random.uniform(k2, (output_size,), jnp.float32,
                              -fc_scale, fc_scale)
    params["fc_w"] = jnp.zeros((2 * hidden_dim, outp),
                               jnp.float32).at[:, :output_size].set(fc_w)
    params["fc_b"] = jnp.zeros((1, outp),
                               jnp.float32).at[:, :output_size].set(fc_b)
    return params


# ----------------------------------------------------------------------------
# Full forward: token ids -> embedding stub -> bi-LSTM stack -> concat -> fc
# ----------------------------------------------------------------------------
def bert_lstm_forward(params, token_ids):
    b_real, seq = token_ids.shape
    h_real = params["hidden"]

    # TODO(synk): pretrained BERT encoder replaced by deterministic embedding lookup.
    x = jnp.take(params["embedding"], token_ids, axis=0)          # (B, S, 768)

    bp = _round_up(max(b_real, SUBLANE), SUBLANE)                  # pad batch -> 8
    x = jnp.pad(x, ((0, bp - b_real), (0, 0), (0, 0)))
    x = jnp.transpose(x, (1, 0, 2)).astype(jnp.float32)            # (S, Bp, 768)
    x2d = x.reshape(seq * bp, -1)                                  # time-major rows

    y = None
    for lp in params["lstm"]:
        y = bilstm_layer(x2d, lp["w_ih"], lp["w_hh"], lp["b"],
                         seq=seq, batch=bp)                        # (2, S, Bp, Hp)
        # Real fwd/rev hidden lanes -> next layer input (padded lanes are zero).
        x2d = jnp.concatenate(
            [y[0, ..., :h_real], y[1, ..., :h_real]],
            axis=-1).reshape(seq * bp, 2 * h_real)

    # hidden_last[-2] = last-layer fwd final state (time S-1);
    # hidden_last[-1] = last-layer rev final state (time 0, original position).
    h_fwd_last = y[0, seq - 1, :, :h_real]                         # (Bp, H)
    h_rev_last = y[1, 0, :, :h_real]                               # (Bp, H)
    hidden_last_out = jnp.concatenate([h_fwd_last, h_rev_last], axis=-1)

    # Dropout: inference mode -> identity.
    out_padded = fc_padded(hidden_last_out, params["fc_w"], params["fc_b"])
    return out_padded[:b_real, :params["output_size"]]


if __name__ == "__main__":
    B, S = 2, 8
    VOCAB = 128
    BERT_DIM = 768
    HIDDEN_DIM = 32
    OUTPUT_SIZE = 4
    N_LAYERS = 2

    key = jax.random.PRNGKey(0)
    k_ids, k_params = jax.random.split(key)
    token_ids = jax.random.randint(k_ids, (B, S), 0, VOCAB, dtype=jnp.int32)

    params = init_params(k_params, vocab=VOCAB, bert_dim=BERT_DIM,
                         hidden_dim=HIDDEN_DIM, output_size=OUTPUT_SIZE,
                         n_layers=N_LAYERS)

    out = bert_lstm_forward(params, token_ids)
    out = jax.block_until_ready(out)
    assert out.shape == (B, OUTPUT_SIZE)
    assert bool(jnp.all(jnp.isfinite(out)))
    print("KERNEL_OK")
</pallas_src>

<mosaic_0001>
module attributes {stable_mosaic.version = 11 : i64} {
  func.func @_bilstm_kernel(%arg0: i32, %arg1: memref<64x768xf32, #tpu.memory_space<vmem>>, %arg2: memref<1x768x512xbf16, #tpu.memory_space<vmem>>, %arg3: memref<1x128x512xbf16, #tpu.memory_space<vmem>>, %arg4: memref<1x1x512xf32, #tpu.memory_space<vmem>>, %arg5: memref<1x8x8x128xf32, #tpu.memory_space<vmem>>, %arg6: memref<64x512xf32, #tpu.memory_space<vmem>>) attributes {dimension_semantics = [#tpu.dimension_semantics<parallel>], iteration_bounds = array<i64: 2>, scalar_prefetch = 0 : i64, scratch_operands = 1 : i64, tpu.core_type = #tpu.core_type<tc>, window_params = [{pipeline_mode = #tpu.pipeline_mode<synchronous>, transform_indices = @transform_0, window_bounds = array<i64: 64, 768>}, {transform_indices = @transform_1, window_bounds = array<i64: 1, 768, 512>}, {transform_indices = @transform_2, window_bounds = array<i64: 1, 128, 512>}, {transform_indices = @transform_3, window_bounds = array<i64: 1, 1, 512>}, {transform_indices = @transform_4, window_bounds = array<i64: 1, 8, 8, 128>}]} {
    %c0 = arith.constant 0 : index
    %c0_0 = arith.constant 0 : index
    %0 = vector.load %arg1[%c0, %c0_0] : memref<64x768xf32, #tpu.memory_space<vmem>>, vector<64x768xf32>
    %1 = arith.truncf %0 : vector<64x768xf32> to vector<64x768xbf16>
    %c0_1 = arith.constant 0 : index
    %c0_2 = arith.constant 0 : index
    %c0_3 = arith.constant 0 : index
    %2 = vector.load %arg2[%c0_1, %c0_2, %c0_3] : memref<1x768x512xbf16, #tpu.memory_space<vmem>>, vector<1x768x512xbf16>
    %3 = vector.shape_cast %2 : vector<1x768x512xbf16> to vector<768x512xbf16>
    %cst = arith.constant dense<0.000000e+00> : vector<64x512xf32>
    %4 = tpu.matmul %1, %3, %cst {dimension_numbers = #tpu.dot_dimension_numbers<[1], [0], [0], [1], [0, 0, 1, 1], [], []>} : vector<64x768xbf16>, vector<768x512xbf16>, vector<64x512xf32> -> vector<64x512xf32>
    %c0_4 = arith.constant 0 : index
    %c0_5 = arith.constant 0 : index
    %c0_6 = arith.constant 0 : index
    %5 = vector.load %arg4[%c0_4, %c0_5, %c0_6] : memref<1x1x512xf32, #tpu.memory_space<vmem>>, vector<1x1x512xf32>
    %6 = vector.shape_cast %5 : vector<1x1x512xf32> to vector<1x512xf32>
    %7 = vector.broadcast %6 : vector<1x512xf32> to vector<64x512xf32>
    %8 = arith.addf %4, %7 : vector<64x512xf32>
    %c0_7 = arith.constant 0 : index
    %c0_8 = arith.constant 0 : index
    %9 = vector.load %arg6[%c0_7, %c0_8] : memref<64x512xf32, #tpu.memory_space<vmem>>, vector<64x512xf32>
    tpu.vector_store %arg6[%c0_7, %c0_8], %8 {strides = array<i32>} : memref<64x512xf32, #tpu.memory_space<vmem>>, vector<64x512xf32>,
    %c0_9 = arith.constant 0 : index
    %c0_10 = arith.constant 0 : index
    %c0_11 = arith.constant 0 : index
    %10 = vector.load %arg3[%c0_9, %c0_10, %c0_11] : memref<1x128x512xbf16, #tpu.memory_space<vmem>>, vector<1x128x512xbf16>
    %11 = vector.shape_cast %10 : vector<1x128x512xbf16> to vector<128x512xbf16>
    %c0_i32 = arith.constant 0 : i32
    %12 = arith.cmpi eq, %arg0, %c0_i32 : i32
    %13 = arith.extui %12 : i1 to i32
    %c0_i32_12 = arith.constant 0 : i32
    %14 = arith.cmpi ne, %13, %c0_i32_12 : i32
    scf.if %14 {
      %cst_14 = arith.constant 0.000000e+00 : f32
      %18 = vector.broadcast %cst_14 : f32 to vector<8x128xf32>
      %cst_15 = arith.constant 0.000000e+00 : f32
      %19 = vector.broadcast %cst_15 : f32 to vector<8x128xf32>
      %c0_16 = arith.constant 0 : index
      %c0_17 = arith.constant 0 : index
      %20 = vector.load %arg6[%c0_16, %c0_17] : memref<64x512xf32, #tpu.memory_space<vmem>>, vector<8x512xf32>
      %21 = arith.truncf %18 : vector<8x128xf32> to vector<8x128xbf16>
      %cst_18 = arith.constant dense<0.000000e+00> : vector<8x512xf32>
      %22 = tpu.matmul %21, %11, %cst_18 {dimension_numbers = #tpu.dot_dimension_numbers<[1], [0], [0], [1], [0, 0, 1, 1], [], []>} : vector<8x128xbf16>, vector<128x512xbf16>, vector<8x512xf32> -> vector<8x512xf32>
      %23 = arith.addf %20, %22 : vector<8x512xf32>
      %24 = vector.extract_strided_slice %23 {offsets = [0, 0], sizes = [8, 128], strides = [1, 1]} : vector<8x512xf32> to vector<8x128xf32>
      %25 = arith.negf %24 : vector<8x128xf32>
      %26 = math.exp %25 : vector<8x128xf32>
      %cst_19 = arith.constant 1.000000e+00 : f32
      %27 = vector.broadcast %cst_19 : f32 to vector<8x128xf32>
      %28 = arith.addf %27, %26 : vector<8x128xf32>
      %29 = arith.divf %27, %28 : vector<8x128xf32>
      %30 = vector.extract_strided_slice %23 {offsets = [0, 128], sizes = [8, 128], strides = [1, 1]} : vector<8x512xf32> to vector<8x128xf32>
      %31 = arith.negf %30 : vector<8x128xf32>
      %32 = math.exp %31 : vector<8x128xf32>
      %cst_20 = arith.constant 1.000000e+00 : f32
      %33 = vector.broadcast %cst_20 : f32 to vector<8x128xf32>
      %34 = arith.addf %33, %32 : vector<8x128xf32>
      %35 = arith.divf %33, %34 : vector<8x128xf32>
      %36 = vector.extract_strided_slice %23 {offsets = [0, 256], sizes = [8, 128], strides = [1, 1]} : vector<8x512xf32> to vector<8x128xf32>
      %37 = math.tanh %36 : vector<8x128xf32>
      %38 = vector.extract_strided_slice %23 {offsets = [0, 384], sizes = [8, 128], strides = [1, 1]} : vector<8x512xf32> to vector<8x128xf32>
      %39 = arith.negf %38 : vector<8x128xf32>
      %40 = math.exp %39 : vector<8x128xf32>
      %cst_21 = arith.constant 1.000000e+00 : f32
      %41 = vector.broadcast %cst_21 : f32 to vector<8x128xf32>
      %42 = arith.addf %41, %40 : vector<8x128xf32>
      %43 = arith.divf %41, %42 : vector<8x128xf32>
      %44 = arith.mulf %35, %19 : vector<8x128xf32>
      %45 = arith.mulf %29, %37 : vector<8x128xf32>
      %46 = arith.addf %44, %45 : vector<8x128xf32>
      %47 = math.tanh %46 : vector<8x128xf32>
      %48 = arith.mulf %43, %47 : vector<8x128xf32>
      %c0_22 = arith.constant 0 : index
      %c0_23 = arith.constant 0 : index
      %c0_24 = arith.constant 0 : index
      %c0_25 = arith.constant 0 : index
      %49 = vector.load %arg5[%c0_22, %c0_23, %c0_24, %c0_25] : memref<1x8x8x128xf32, #tpu.memory_space<vmem>>, vector<1x1x8x128xf32>
      %50 = vector.shape_cast %49 : vector<1x1x8x128xf32> to vector<8x128xf32>
      %51 = vector.shape_cast %48 : vector<8x128xf32> to vector<1x1x8x128xf32>
      tpu.vector_store %arg5[%c0_22, %c0_23, %c0_24, %c0_25], %51 {strides = array<i32>} : memref<1x8x8x128xf32, #tpu.memory_space<vmem>>, vector<1x1x8x128xf32>,
      %c8 = arith.constant 8 : index
      %c0_26 = arith.constant 0 : index
      %52 = vector.load %arg6[%c8, %c0_26] : memref<64x512xf32, #tpu.memory_space<vmem>>, vector<8x512xf32>
      %53 = arith.truncf %48 : vector<8x128xf32> to vector<8x128xbf16>
      %cst_27 = arith.constant dense<0.000000e+00> : vector<8x512xf32>
      %54 = tpu.matmul %53, %11, %cst_27 {dimension_numbers = #tpu.dot_dimension_numbers<[1], [0], [0], [1], [0, 0, 1, 1], [], []>} : vector<8x128xbf16>, vector<128x512xbf16>, vector<8x512xf32> -> vector<8x512xf32>
      %55 = arith.addf %52, %54 : vector<8x512xf32>
      %56 = vector.extract_strided_slice %55 {offsets = [0, 0], sizes = [8, 128], strides = [1, 1]} : vector<8x512xf32> to vector<8x128xf32>
      %57 = arith.negf %56 : vector<8x128xf32>
      %58 = math.exp %57 : vector<8x128xf32>
      %cst_28 = arith.constant 1.000000e+00 : f32
      %59 = vector.broadcast %cst_28 : f32 to vector<8x128xf32>
      %60 = arith.addf %59, %58 : vector<8x128xf32>
      %61 = arith.divf %59, %60 : vector<8x128xf32>
      %62 = vector.extract_strided_slice %55 {offsets = [0, 128], sizes = [8, 128], strides = [1, 1]} : vector<8x512xf32> to vector<8x128xf32>
      %63 = arith.negf %62 : vector<8x128xf32>
      %64 = math.exp %63 : vector<8x128xf32>
      %cst_29 = arith.constant 1.000000e+00 : f32
      %65 = vector.broadcast %cst_29 : f32 to vector<8x128xf32>
      %66 = arith.addf %65, %64 : vector<8x128xf32>
      %67 = arith.divf %65, %66 : vector<8x128xf32>
      %68 = vector.extract_strided_slice %55 {offsets = [0, 256], sizes = [8, 128], strides = [1, 1]} : vector<8x512xf32> to vector<8x128xf32>
      %69 = math.tanh %68 : vector<8x128xf32>
      %70 = vector.extract_strided_slice %55 {offsets = [0, 384], sizes = [8, 128], strides = [1, 1]} : vector<8x512xf32> to vector<8x128xf32>
      %71 = arith.negf %70 : vector<8x128xf32>
      %72 = math.exp %71 : vector<8x128xf32>
      %cst_30 = arith.constant 1.000000e+00 : f32
      %73 = vector.broadcast %cst_30 : f32 to vector<8x128xf32>
      %74 = arith.addf %73, %72 : vector<8x128xf32>
      %75 = arith.divf %73, %74 : vector<8x128xf32>
      %76 = arith.mulf %67, %46 : vector<8x128xf32>
      %77 = arith.mulf %61, %69 : vector<8x128xf32>
      %78 = arith.addf %76, %77 : vector<8x128xf32>
      %79 = math.tanh %78 : vector<8x128xf32>
      %80 = arith.mulf %75, %79 : vector<8x128xf32>
      %c0_31 = arith.constant 0 : index
      %c1 = arith.constant 1 : index
      %c0_32 = arith.constant 0 : index
      %c0_33 = arith.constant 0 : index
      %81 = vector.load %arg5[%c0_31, %c1, %c0_32, %c0_33] : memref<1x8x8x128xf32, #tpu.memory_space<vmem>>, vector<1x1x8x128xf32>
      %82 = vector.shape_cast %81 : vector<1x1x8x128xf32> to vector<8x128xf32>
      %83 = vector.shape_cast %80 : vector<8x128xf32> to vector<1x1x8x128xf32>
      tpu.vector_store %arg5[%c0_31, %c1, %c0_32, %c0_33], %83 {strides = array<i32>} : memref<1x8x8x128xf32, #tpu.memory_space<vmem>>, vector<1x1x8x128xf32>,
      %c16 = arith.constant 16 : index
      %c0_34 = arith.constant 0 : index
      %84 = vector.load %arg6[%c16, %c0_34] : memref<64x512xf32, #tpu.memory_space<vmem>>, vector<8x512xf32>
      %85 = arith.truncf %80 : vector<8x128xf32> to vector<8x128xbf16>
      %cst_35 = arith.constant dense<0.000000e+00> : vector<8x512xf32>
      %86 = tpu.matmul %85, %11, %cst_35 {dimension_numbers = #tpu.dot_dimension_numbers<[1], [0], [0], [1], [0, 0, 1, 1], [], []>} : vector<8x128xbf16>, vector<128x512xbf16>, vector<8x512xf32> -> vector<8x512xf32>
      %87 = arith.addf %84, %86 : vector<8x512xf32>
      %88 = vector.extract_strided_slice %87 {offsets = [0, 0], sizes = [8, 128], strides = [1, 1]} : vector<8x512xf32> to vector<8x128xf32>
      %89 = arith.negf %88 : vector<8x128xf32>
      %90 = math.exp %89 : vector<8x128xf32>
      %cst_36 = arith.constant 1.000000e+00 : f32
      %91 = vector.broadcast %cst_36 : f32 to vector<8x128xf32>
      %92 = arith.addf %91, %90 : vector<8x128xf32>
      %93 = arith.divf %91, %92 : vector<8x128xf32>
      %94 = vector.extract_strided_slice %87 {offsets = [0, 128], sizes = [8, 128], strides = [1, 1]} : vector<8x512xf32> to vector<8x128xf32>
      %95 = arith.negf %94 : vector<8x128xf32>
      %96 = math.exp %95 : vector<8x128xf32>
      %cst_37 = arith.constant 1.000000e+00 : f32
      %97 = vector.broadcast %cst_37 : f32 to vector<8x128xf32>
      %98 = arith.addf %97, %96 : vector<8x128xf32>
      %99 = arith.divf %97, %98 : vector<8x128xf32>
      %100 = vector.extract_strided_slice %87 {offsets = [0, 256], sizes = [8, 128], strides = [1, 1]} : vector<8x512xf32> to vector<8x128xf32>
      %101 = math.tanh %100 : vector<8x128xf32>
      %102 = vector.extract_strided_slice %87 {offsets = [0, 384], sizes = [8, 128], strides = [1, 1]} : vector<8x512xf32> to vector<8x128xf32>
      %103 = arith.negf %102 : vector<8x128xf32>
      %104 = math.exp %103 : vector<8x128xf32>
      %cst_38 = arith.constant 1.000000e+00 : f32
      %105 = vector.broadcast %cst_38 : f32 to vector<8x128xf32>
      %106 = arith.addf %105, %104 : vector<8x128xf32>
      %107 = arith.divf %105, %106 : vector<8x128xf32>
      %108 = arith.mulf %99, %78 : vector<8x128xf32>
      %109 = arith.mulf %93, %101 : vector<8x128xf32>
      %110 = arith.addf %108, %109 : vector<8x128xf32>
      %111 = math.tanh %110 : vector<8x128xf32>
      %112 = arith.mulf %107, %111 : vector<8x128xf32>
      %c0_39 = arith.constant 0 : index
      %c2 = arith.constant 2 : index
      %c0_40 = arith.constant 0 : index
      %c0_41 = arith.constant 0 : index
      %113 = vector.load %arg5[%c0_39, %c2, %c0_40, %c0_41] : memref<1x8x8x128xf32, #tpu.memory_space<vmem>>, vector<1x1x8x128xf32>
      %114 = vector.shape_cast %113 : vector<1x1x8x128xf32> to vector<8x128xf32>
      %115 = vector.shape_cast %112 : vector<8x128xf32> to vector<1x1x8x128xf32>
      tpu.vector_store %arg5[%c0_39, %c2, %c0_40, %c0_41], %115 {strides = array<i32>} : memref<1x8x8x128xf32, #tpu.memory_space<vmem>>, vector<1x1x8x128xf32>,
      %c24 = arith.constant 24 : index
      %c0_42 = arith.constant 0 : index
      %116 = vector.load %arg6[%c24, %c0_42] : memref<64x512xf32, #tpu.memory_space<vmem>>, vector<8x512xf32>
      %117 = arith.truncf %112 : vector<8x128xf32> to vector<8x128xbf16>
      %cst_43 = arith.constant dense<0.000000e+00> : vector<8x512xf32>
      %118 = tpu.matmul %117, %11, %cst_43 {dimension_numbers = #tpu.dot_dimension_numbers<[1], [0], [0], [1], [0, 0, 1, 1], [], []>} : vector<8x128xbf16>, vector<128x512xbf16>, vector<8x512xf32> -> vector<8x512xf32>
      %119 = arith.addf %116, %118 : vector<8x512xf32>
      %120 = vector.extract_strided_slice %119 {offsets = [0, 0], sizes = [8, 128], strides = [1, 1]} : vector<8x512xf32> to vector<8x128xf32>
      %121 = arith.negf %120 : vector<8x128xf32>
      %122 = math.exp %121 : vector<8x128xf32>
      %cst_44 = arith.constant 1.000000e+00 : f32
      %123 = vector.broadcast %cst_44 : f32 to vector<8x128xf32>
      %124 = arith.addf %123, %122 : vector<8x128xf32>
      %125 = arith.divf %123, %124 : vector<8x128xf32>
      %126 = vector.extract_strided_slice %119 {offsets = [0, 128], sizes = [8, 128], strides = [1, 1]} : vector<8x512xf32> to vector<8x128xf32>
      %127 = arith.negf %126 : vector<8x128xf32>
      %128 = math.exp %127 : vector<8x128xf32>
      %cst_45 = arith.constant 1.000000e+00 : f32
      %129 = vector.broadcast %cst_45 : f32 to vector<8x128xf32>
      %130 = arith.addf %129, %128 : vector<8x128xf32>
      %131 = arith.divf %129, %130 : vector<8x128xf32>
      %132 = vector.extract_strided_slice %119 {offsets = [0, 256], sizes = [8, 128], strides = [1, 1]} : vector<8x512xf32> to vector<8x128xf32>
      %133 = math.tanh %132 : vector<8x128xf32>
      %134 = vector.extract_strided_slice %119 {offsets = [0, 384], sizes = [8, 128], strides = [1, 1]} : vector<8x512xf32> to vector<8x128xf32>
      %135 = arith.negf %134 : vector<8x128xf32>
      %136 = math.exp %135 : vector<8x128xf32>
      %cst_46 = arith.constant 1.000000e+00 : f32
      %137 = vector.broadcast %cst_46 : f32 to vector<8x128xf32>
      %138 = arith.addf %137, %136 : vector<8x128xf32>
      %139 = arith.divf %137, %138 : vector<8x128xf32>
      %140 = arith.mulf %131, %110 : vector<8x128xf32>
      %141 = arith.mulf %125, %133 : vector<8x128xf32>
      %142 = arith.addf %140, %141 : vector<8x128xf32>
      %143 = math.tanh %142 : vector<8x128xf32>
      %144 = arith.mulf %139, %143 : vector<8x128xf32>
      %c0_47 = arith.constant 0 : index
      %c3 = arith.constant 3 : index
      %c0_48 = arith.constant 0 : index
      %c0_49 = arith.constant 0 : index
      %145 = vector.load %arg5[%c0_47, %c3, %c0_48, %c0_49] : memref<1x8x8x128xf32, #tpu.memory_space<vmem>>, vector<1x1x8x128xf32>
      %146 = vector.shape_cast %145 : vector<1x1x8x128xf32> to vector<8x128xf32>
      %147 = vector.shape_cast %144 : vector<8x128xf32> to vector<1x1x8x128xf32>
      tpu.vector_store %arg5[%c0_47, %c3, %c0_48, %c0_49], %147 {strides = array<i32>} : memref<1x8x8x128xf32, #tpu.memory_space<vmem>>, vector<1x1x8x128xf32>,
      %c32 = arith.constant 32 : index
      %c0_50 = arith.constant 0 : index
      %148 = vector.load %arg6[%c32, %c0_50] : memref<64x512xf32, #tpu.memory_space<vmem>>, vector<8x512xf32>
      %149 = arith.truncf %144 : vector<8x128xf32> to vector<8x128xbf16>
      %cst_51 = arith.constant dense<0.000000e+00> : vector<8x512xf32>
      %150 = tpu.matmul %149, %11, %cst_51 {dimension_numbers = #tpu.dot_dimension_numbers<[1], [0], [0], [1], [0, 0, 1, 1], [], []>} : vector<8x128xbf16>, vector<128x512xbf16>, vector<8x512xf32> -> vector<8x512xf32>
      %151 = arith.addf %148, %150 : vector<8x512xf32>
      %152 = vector.extract_strided_slice %151 {offsets = [0, 0], sizes = [8, 128], strides = [1, 1]} : vector<8x512xf32> to vector<8x128xf32>
      %153 = arith.negf %152 : vector<8x128xf32>
      %154 = math.exp %153 : vector<8x128xf32>
      %cst_52 = arith.constant 1.000000e+00 : f32
      %155 = vector.broadcast %cst_52 : f32 to vector<8x128xf32>
      %156 = arith.addf %155, %154 : vector<8x128xf32>
      %157 = arith.divf %155, %156 : vector<8x128xf32>
      %158 = vector.extract_strided_slice %151 {offsets = [0, 128], sizes = [8, 128], strides = [1, 1]} : vector<8x512xf32> to vector<8x128xf32>
      %159 = arith.negf %158 : vector<8x128xf32>
      %160 = math.exp %159 : vector<8x128xf32>
      %cst_53 = arith.constant 1.000000e+00 : f32
      %161 = vector.broadcast %cst_53 : f32 to vector<8x128xf32>
      %162 = arith.addf %161, %160 : vector<8x128xf32>
      %163 = arith.divf %161, %162 : vector<8x128xf32>
      %164 = vector.extract_strided_slice %151 {offsets = [0, 256], sizes = [8, 128], strides = [1, 1]} : vector<8x512xf32> to vector<8x128xf32>
      %165 = math.tanh %164 : vector<8x128xf32>
      %166 = vector.extract_strided_slice %151 {offsets = [0, 384], sizes = [8, 128], strides = [1, 1]} : vector<8x512xf32> to vector<8x128xf32>
      %167 = arith.negf %166 : vector<8x128xf32>
      %168 = math.exp %167 : vector<8x128xf32>
      %cst_54 = arith.constant 1.000000e+00 : f32
      %169 = vector.broadcast %cst_54 : f32 to vector<8x128xf32>
      %170 = arith.addf %169, %168 : vector<8x128xf32>
      %171 = arith.divf %169, %170 : vector<8x128xf32>
      %172 = arith.mulf %163, %142 : vector<8x128xf32>
      %173 = arith.mulf %157, %165 : vector<8x128xf32>
      %174 = arith.addf %172, %173 : vector<8x128xf32>
      %175 = math.tanh %174 : vector<8x128xf32>
      %176 = arith.mulf %171, %175 : vector<8x128xf32>
      %c0_55 = arith.constant 0 : index
      %c4 = arith.constant 4 : index
      %c0_56 = arith.constant 0 : index
      %c0_57 = arith.constant 0 : index
      %177 = vector.load %arg5[%c0_55, %c4, %c0_56, %c0_57] : memref<1x8x8x128xf32, #tpu.memory_space<vmem>>, vector<1x1x8x128xf32>
      %178 = vector.shape_cast %177 : vector<1x1x8x128xf32> to vector<8x128xf32>
      %179 = vector.shape_cast %176 : vector<8x128xf32> to vector<1x1x8x128xf32>
      tpu.vector_store %arg5[%c0_55, %c4, %c0_56, %c0_57], %179 {strides = array<i32>} : memref<1x8x8x128xf32, #tpu.memory_space<vmem>>, vector<1x1x8x128xf32>,
      %c40 = arith.constant 40 : index
      %c0_58 = arith.constant 0 : index
      %180 = vector.load %arg6[%c40, %c0_58] : memref<64x512xf32, #tpu.memory_space<vmem>>, vector<8x512xf32>
      %181 = arith.truncf %176 : vector<8x128xf32> to vector<8x128xbf16>
      %cst_59 = arith.constant dense<0.000000e+00> : vector<8x512xf32>
      %182 = tpu.matmul %181, %11, %cst_59 {dimension_numbers = #tpu.dot_dimension_numbers<[1], [0], [0], [1], [0, 0, 1, 1], [], []>} : vector<8x128xbf16>, vector<128x512xbf16>, vector<8x512xf32> -> vector<8x512xf32>
      %183 = arith.addf %180, %182 : vector<8x512xf32>
      %184 = vector.extract_strided_slice %183 {offsets = [0, 0], sizes = [8, 128], strides = [1, 1]} : vector<8x512xf32> to vector<8x128xf32>
      %185 = arith.negf %184 : vector<8x128xf32>
      %186 = math.exp %185 : vector<8x128xf32>
      %cst_60 = arith.constant 1.000000e+00 : f32
      %187 = vector.broadcast %cst_60 : f32 to vector<8x128xf32>
      %188 = arith.addf %187, %186 : vector<8x128xf32>
      %189 = arith.divf %187, %188 : vector<8x128xf32>
      %190 = vector.extract_strided_slice %183 {offsets = [0, 128], sizes = [8, 128], strides = [1, 1]} : vector<8x512xf32> to vector<8x128xf32>
      %191 = arith.negf %190 : vector<8x128xf32>
      %192 = math.exp %191 : vector<8x128xf32>
      %cst_61 = arith.constant 1.000000e+00 : f32
      %193 = vector.broadcast %cst_61 : f32 to vector<8x128xf32>
      %194 = arith.addf %193, %192 : vector<8x128xf32>
      %195 = arith.divf %193, %194 : vector<8x128xf32>
      %196 = vector.extract_strided_slice %183 {offsets = [0, 256], sizes = [8, 128], strides = [1, 1]} : vector<8x512xf32> to vector<8x128xf32>
      %197 = math.tanh %196 : vector<8x128xf32>
      %198 = vector.extract_strided_slice %183 {offsets = [0, 384], sizes = [8, 128], strides = [1, 1]} : vector<8x512xf32> to vector<8x128xf32>
      %199 = arith.negf %198 : vector<8x128xf32>
      %200 = math.exp %199 : vector<8x128xf32>
      %cst_62 = arith.constant 1.000000e+00 : f32
      %201 = vector.broadcast %cst_62 : f32 to vector<8x128xf32>
      %202 = arith.addf %201, %200 : vector<8x128xf32>
      %203 = arith.divf %201, %202 : vector<8x128xf32>
      %204 = arith.mulf %195, %174 : vector<8x128xf32>
      %205 = arith.mulf %189, %197 : vector<8x128xf32>
      %206 = arith.addf %204, %205 : vector<8x128xf32>
      %207 = math.tanh %206 : vector<8x128xf32>
      %208 = arith.mulf %203, %207 : vector<8x128xf32>
      %c0_63 = arith.constant 0 : index
      %c5 = arith.constant 5 : index
      %c0_64 = arith.constant 0 : index
      %c0_65 = arith.constant 0 : index
      %209 = vector.load %arg5[%c0_63, %c5, %c0_64, %c0_65] : memref<1x8x8x128xf32, #tpu.memory_space<vmem>>, vector<1x1x8x128xf32>
      %210 = vector.shape_cast %209 : vector<1x1x8x128xf32> to vector<8x128xf32>
      %211 = vector.shape_cast %208 : vector<8x128xf32> to vector<1x1x8x128xf32>
      tpu.vector_store %arg5[%c0_63, %c5, %c0_64, %c0_65], %211 {strides = array<i32>} : memref<1x8x8x128xf32, #tpu.memory_space<vmem>>, vector<1x1x8x128xf32>,
      %c48 = arith.constant 48 : index
      %c0_66 = arith.constant 0 : index
      %212 = vector.load %arg6[%c48, %c0_66] : memref<64x512xf32, #tpu.memory_space<vmem>>, vector<8x512xf32>
      %213 = arith.truncf %208 : vector<8x128xf32> to vector<8x128xbf16>
      %cst_67 = arith.constant dense<0.000000e+00> : vector<8x512xf32>
      %214 = tpu.matmul %213, %11, %cst_67 {dimension_numbers = #tpu.dot_dimension_numbers<[1], [0], [0], [1], [0, 0, 1, 1], [], []>} : vector<8x128xbf16>, vector<128x512xbf16>, vector<8x512xf32> -> vector<8x512xf32>
      %215 = arith.addf %212, %214 : vector<8x512xf32>
      %216 = vector.extract_strided_slice %215 {offsets = [0, 0], sizes = [8, 128], strides = [1, 1]} : vector<8x512xf32> to vector<8x128xf32>
      %217 = arith.negf %216 : vector<8x128xf32>
      %218 = math.exp %217 : vector<8x128xf32>
      %cst_68 = arith.constant 1.000000e+00 : f32
      %219 = vector.broadcast %cst_68 : f32 to vector<8x128xf32>
      %220 = arith.addf %219, %218 : vector<8x128xf32>
      %221 = arith.divf %219, %220 : vector<8x128xf32>
      %222 = vector.extract_strided_slice %215 {offsets = [0, 128], sizes = [8, 128], strides = [1, 1]} : vector<8x512xf32> to vector<8x128xf32>
      %223 = arith.negf %222 : vector<8x128xf32>
      %224 = math.exp %223 : vector<8x128xf32>
      %cst_69 = arith.constant 1.000000e+00 : f32
      %225 = vector.broadcast %cst_69 : f32 to vector<8x128xf32>
      %226 = arith.addf %225, %224 : vector<8x128xf32>
      %227 = arith.divf %225, %226 : vector<8x128xf32>
      %228 = vector.extract_strided_slice %215 {offsets = [0, 256], sizes = [8, 128], strides = [1, 1]} : vector<8x512xf32> to vector<8x128xf32>
      %229 = math.tanh %228 : vector<8x128xf32>
      %230 = vector.extract_strided_slice %215 {offsets = [0, 384], sizes = [8, 128], strides = [1, 1]} : vector<8x512xf32> to vector<8x128xf32>
      %231 = arith.negf %230 : vector<8x128xf32>
      %232 = math.exp %231 : vector<8x128xf32>
      %cst_70 = arith.constant 1.000000e+00 : f32
      %233 = vector.broadcast %cst_70 : f32 to vector<8x128xf32>
      %234 = arith.addf %233, %232 : vector<8x128xf32>
      %235 = arith.divf %233, %234 : vector<8x128xf32>
      %236 = arith.mulf %227, %206 : vector<8x128xf32>
      %237 = arith.mulf %221, %229 : vector<8x128xf32>
      %238 = arith.addf %236, %237 : vector<8x128xf32>
      %239 = math.tanh %238 : vector<8x128xf32>
      %240 = arith.mulf %235, %239 : vector<8x128xf32>
      %c0_71 = arith.constant 0 : index
      %c6 = arith.constant 6 : index
      %c0_72 = arith.constant 0 : index
      %c0_73 = arith.constant 0 : index
      %241 = vector.load %arg5[%c0_71, %c6, %c0_72, %c0_73] : memref<1x8x8x128xf32, #tpu.memory_space<vmem>>, vector<1x1x8x128xf32>
      %242 = vector.shape_cast %241 : vector<1x1x8x128xf32> to vector<8x128xf32>
      %243 = vector.shape_cast %240 : vector<8x128xf32> to vector<1x1x8x128xf32>
      tpu.vector_store %arg5[%c0_71, %c6, %c0_72, %c0_73], %243 {strides = array<i32>} : memref<1x8x8x128xf32, #tpu.memory_space<vmem>>, vector<1x1x8x128xf32>,
      %c56 = arith.constant 56 : index
      %c0_74 = arith.constant 0 : index
      %244 = vector.load %arg6[%c56, %c0_74] : memref<64x512xf32, #tpu.memory_space<vmem>>, vector<8x512xf32>
      %245 = arith.truncf %240 : vector<8x128xf32> to vector<8x128xbf16>
      %cst_75 = arith.constant dense<0.000000e+00> : vector<8x512xf32>
      %246 = tpu.matmul %245, %11, %cst_75 {dimension_numbers = #tpu.dot_dimension_numbers<[1], [0], [0], [1], [0, 0, 1, 1], [], []>} : vector<8x128xbf16>, vector<128x512xbf16>, vector<8x512xf32> -> vector<8x512xf32>
      %247 = arith.addf %244, %246 : vector<8x512xf32>
      %248 = vector.extract_strided_slice %247 {offsets = [0, 0], sizes = [8, 128], strides = [1, 1]} : vector<8x512xf32> to vector<8x128xf32>
      %249 = arith.negf %248 : vector<8x128xf32>
      %250 = math.exp %249 : vector<8x128xf32>
      %cst_76 = arith.constant 1.000000e+00 : f32
      %251 = vector.broadcast %cst_76 : f32 to vector<8x128xf32>
      %252 = arith.addf %251, %250 : vector<8x128xf32>
      %253 = arith.divf %251, %252 : vector<8x128xf32>
      %254 = vector.extract_strided_slice %247 {offsets = [0, 128], sizes = [8, 128], strides = [1, 1]} : vector<8x512xf32> to vector<8x128xf32>
      %255 = arith.negf %254 : vector<8x128xf32>
      %256 = math.exp %255 : vector<8x128xf32>
      %cst_77 = arith.constant 1.000000e+00 : f32
      %257 = vector.broadcast %cst_77 : f32 to vector<8x128xf32>
      %258 = arith.addf %257, %256 : vector<8x128xf32>
      %259 = arith.divf %257, %258 : vector<8x128xf32>
      %260 = vector.extract_strided_slice %247 {offsets = [0, 256], sizes = [8, 128], strides = [1, 1]} : vector<8x512xf32> to vector<8x128xf32>
      %261 = math.tanh %260 : vector<8x128xf32>
      %262 = vector.extract_strided_slice %247 {offsets = [0, 384], sizes = [8, 128], strides = [1, 1]} : vector<8x512xf32> to vector<8x128xf32>
      %263 = arith.negf %262 : vector<8x128xf32>
      %264 = math.exp %263 : vector<8x128xf32>
      %cst_78 = arith.constant 1.000000e+00 : f32
      %265 = vector.broadcast %cst_78 : f32 to vector<8x128xf32>
      %266 = arith.addf %265, %264 : vector<8x128xf32>
      %267 = arith.divf %265, %266 : vector<8x128xf32>
      %268 = arith.mulf %259, %238 : vector<8x128xf32>
      %269 = arith.mulf %253, %261 : vector<8x128xf32>
      %270 = arith.addf %268, %269 : vector<8x128xf32>
      %271 = math.tanh %270 : vector<8x128xf32>
      %272 = arith.mulf %267, %271 : vector<8x128xf32>
      %c0_79 = arith.constant 0 : index
      %c7 = arith.constant 7 : index
      %c0_80 = arith.constant 0 : index
      %c0_81 = arith.constant 0 : index
      %273 = vector.load %arg5[%c0_79, %c7, %c0_80, %c0_81] : memref<1x8x8x128xf32, #tpu.memory_space<vmem>>, vector<1x1x8x128xf32>
      %274 = vector.shape_cast %273 : vector<1x1x8x128xf32> to vector<8x128xf32>
      %275 = vector.shape_cast %272 : vector<8x128xf32> to vector<1x1x8x128xf32>
      tpu.vector_store %arg5[%c0_79, %c7, %c0_80, %c0_81], %275 {strides = array<i32>} : memref<1x8x8x128xf32, #tpu.memory_space<vmem>>, vector<1x1x8x128xf32>,
    } else {
    }
    %c1_i32 = arith.constant 1 : i32
    %15 = arith.cmpi eq, %arg0, %c1_i32 : i32
    %16 = arith.extui %15 : i1 to i32
    %c0_i32_13 = arith.constant 0 : i32
    %17 = arith.cmpi ne, %16, %c0_i32_13 : i32
    scf.if %17 {
      %cst_14 = arith.constant 0.000000e+00 : f32
      %18 = vector.broadcast %cst_14 : f32 to vector<8x128xf32>
      %cst_15 = arith.constant 0.000000e+00 : f32
      %19 = vector.broadcast %cst_15 : f32 to vector<8x128xf32>
      %c56 = arith.constant 56 : index
      %c0_16 = arith.constant 0 : index
      %20 = vector.load %arg6[%c56, %c0_16] : memref<64x512xf32, #tpu.memory_space<vmem>>, vector<8x512xf32>
      %21 = arith.truncf %18 : vector<8x128xf32> to vector<8x128xbf16>
      %cst_17 = arith.constant dense<0.000000e+00> : vector<8x512xf32>
      %22 = tpu.matmul %21, %11, %cst_17 {dimension_numbers = #tpu.dot_dimension_numbers<[1], [0], [0], [1], [0, 0, 1, 1], [], []>} : vector<8x128xbf16>, vector<128x512xbf16>, vector<8x512xf32> -> vector<8x512xf32>
      %23 = arith.addf %20, %22 : vector<8x512xf32>
      %24 = vector.extract_strided_slice %23 {offsets = [0, 0], sizes = [8, 128], strides = [1, 1]} : vector<8x512xf32> to vector<8x128xf32>
      %25 = arith.negf %24 : vector<8x128xf32>
      %26 = math.exp %25 : vector<8x128xf32>
      %cst_18 = arith.constant 1.000000e+00 : f32
      %27 = vector.broadcast %cst_18 : f32 to vector<8x128xf32>
      %28 = arith.addf %27, %26 : vector<8x128xf32>
      %29 = arith.divf %27, %28 : vector<8x128xf32>
      %30 = vector.extract_strided_slice %23 {offsets = [0, 128], sizes = [8, 128], strides = [1, 1]} : vector<8x512xf32> to vector<8x128xf32>
      %31 = arith.negf %30 : vector<8x128xf32>
      %32 = math.exp %31 : vector<8x128xf32>
      %cst_19 = arith.constant 1.000000e+00 : f32
      %33 = vector.broadcast %cst_19 : f32 to vector<8x128xf32>
      %34 = arith.addf %33, %32 : vector<8x128xf32>
      %35 = arith.divf %33, %34 : vector<8x128xf32>
      %36 = vector.extract_strided_slice %23 {offsets = [0, 256], sizes = [8, 128], strides = [1, 1]} : vector<8x512xf32> to vector<8x128xf32>
      %37 = math.tanh %36 : vector<8x128xf32>
      %38 = vector.extract_strided_slice %23 {offsets = [0, 384], sizes = [8, 128], strides = [1, 1]} : vector<8x512xf32> to vector<8x128xf32>
      %39 = arith.negf %38 : vector<8x128xf32>
      %40 = math.exp %39 : vector<8x128xf32>
      %cst_20 = arith.constant 1.000000e+00 : f32
      %41 = vector.broadcast %cst_20 : f32 to vector<8x128xf32>
      %42 = arith.addf %41, %40 : vector<8x128xf32>
      %43 = arith.divf %41, %42 : vector<8x128xf32>
      %44 = arith.mulf %35, %19 : vector<8x128xf32>
      %45 = arith.mulf %29, %37 : vector<8x128xf32>
      %46 = arith.addf %44, %45 : vector<8x128xf32>
      %47 = math.tanh %46 : vector<8x128xf32>
      %48 = arith.mulf %43, %47 : vector<8x128xf32>
      %c0_21 = arith.constant 0 : index
      %c7 = arith.constant 7 : index
      %c0_22 = arith.constant 0 : index
      %c0_23 = arith.constant 0 : index
      %49 = vector.load %arg5[%c0_21, %c7, %c0_22, %c0_23] : memref<1x8x8x128xf32, #tpu.memory_space<vmem>>, vector<1x1x8x128xf32>
      %50 = vector.shape_cast %49 : vector<1x1x8x128xf32> to vector<8x128xf32>
      %51 = vector.shape_cast %48 : vector<8x128xf32> to vector<1x1x8x128xf32>
      tpu.vector_store %arg5[%c0_21, %c7, %c0_22, %c0_23], %51 {strides = array<i32>} : memref<1x8x8x128xf32, #tpu.memory_space<vmem>>, vector<1x1x8x128xf32>,
      %c48 = arith.constant 48 : index
      %c0_24 = arith.constant 0 : index
      %52 = vector.load %arg6[%c48, %c0_24] : memref<64x512xf32, #tpu.memory_space<vmem>>, vector<8x512xf32>
      %53 = arith.truncf %48 : vector<8x128xf32> to vector<8x128xbf16>
      %cst_25 = arith.constant dense<0.000000e+00> : vector<8x512xf32>
      %54 = tpu.matmul %53, %11, %cst_25 {dimension_numbers = #tpu.dot_dimension_numbers<[1], [0], [0], [1], [0, 0, 1, 1], [], []>} : vector<8x128xbf16>, vector<128x512xbf16>, vector<8x512xf32> -> vector<8x512xf32>
      %55 = arith.addf %52, %54 : vector<8x512xf32>
      %56 = vector.extract_strided_slice %55 {offsets = [0, 0], sizes = [8, 128], strides = [1, 1]} : vector<8x512xf32> to vector<8x128xf32>
      %57 = arith.negf %56 : vector<8x128xf32>
      %58 = math.exp %57 : vector<8x128xf32>
      %cst_26 = arith.constant 1.000000e+00 : f32
      %59 = vector.broadcast %cst_26 : f32 to vector<8x128xf32>
      %60 = arith.addf %59, %58 : vector<8x128xf32>
      %61 = arith.divf %59, %60 : vector<8x128xf32>
      %62 = vector.extract_strided_slice %55 {offsets = [0, 128], sizes = [8, 128], strides = [1, 1]} : vector<8x512xf32> to vector<8x128xf32>
      %63 = arith.negf %62 : vector<8x128xf32>
      %64 = math.exp %63 : vector<8x128xf32>
      %cst_27 = arith.constant 1.000000e+00 : f32
      %65 = vector.broadcast %cst_27 : f32 to vector<8x128xf32>
      %66 = arith.addf %65, %64 : vector<8x128xf32>
      %67 = arith.divf %65, %66 : vector<8x128xf32>
      %68 = vector.extract_strided_slice %55 {offsets = [0, 256], sizes = [8, 128], strides = [1, 1]} : vector<8x512xf32> to vector<8x128xf32>
      %69 = math.tanh %68 : vector<8x128xf32>
      %70 = vector.extract_strided_slice %55 {offsets = [0, 384], sizes = [8, 128], strides = [1, 1]} : vector<8x512xf32> to vector<8x128xf32>
      %71 = arith.negf %70 : vector<8x128xf32>
      %72 = math.exp %71 : vector<8x128xf32>
      %cst_28 = arith.constant 1.000000e+00 : f32
      %73 = vector.broadcast %cst_28 : f32 to vector<8x128xf32>
      %74 = arith.addf %73, %72 : vector<8x128xf32>
      %75 = arith.divf %73, %74 : vector<8x128xf32>
      %76 = arith.mulf %67, %46 : vector<8x128xf32>
      %77 = arith.mulf %61, %69 : vector<8x128xf32>
      %78 = arith.addf %76, %77 : vector<8x128xf32>
      %79 = math.tanh %78 : vector<8x128xf32>
      %80 = arith.mulf %75, %79 : vector<8x128xf32>
      %c0_29 = arith.constant 0 : index
      %c6 = arith.constant 6 : index
      %c0_30 = arith.constant 0 : index
      %c0_31 = arith.constant 0 : index
      %81 = vector.load %arg5[%c0_29, %c6, %c0_30, %c0_31] : memref<1x8x8x128xf32, #tpu.memory_space<vmem>>, vector<1x1x8x128xf32>
      %82 = vector.shape_cast %81 : vector<1x1x8x128xf32> to vector<8x128xf32>
      %83 = vector.shape_cast %80 : vector<8x128xf32> to vector<1x1x8x128xf32>
      tpu.vector_store %arg5[%c0_29, %c6, %c0_30, %c0_31], %83 {strides = array<i32>} : memref<1x8x8x128xf32, #tpu.memory_space<vmem>>, vector<1x1x8x128xf32>,
      %c40 = arith.constant 40 : index
      %c0_32 = arith.constant 0 : index
      %84 = vector.load %arg6[%c40, %c0_32] : memref<64x512xf32, #tpu.memory_space<vmem>>, vector<8x512xf32>
      %85 = arith.truncf %80 : vector<8x128xf32> to vector<8x128xbf16>
      %cst_33 = arith.constant dense<0.000000e+00> : vector<8x512xf32>
      %86 = tpu.matmul %85, %11, %cst_33 {dimension_numbers = #tpu.dot_dimension_numbers<[1], [0], [0], [1], [0, 0, 1, 1], [], []>} : vector<8x128xbf16>, vector<128x512xbf16>, vector<8x512xf32> -> vector<8x512xf32>
      %87 = arith.addf %84, %86 : vector<8x512xf32>
      %88 = vector.extract_strided_slice %87 {offsets = [0, 0], sizes = [8, 128], strides = [1, 1]} : vector<8x512xf32> to vector<8x128xf32>
      %89 = arith.negf %88 : vector<8x128xf32>
      %90 = math.exp %89 : vector<8x128xf32>
      %cst_34 = arith.constant 1.000000e+00 : f32
      %91 = vector.broadcast %cst_34 : f32 to vector<8x128xf32>
      %92 = arith.addf %91, %90 : vector<8x128xf32>
      %93 = arith.divf %91, %92 : vector<8x128xf32>
      %94 = vector.extract_strided_slice %87 {offsets = [0, 128], sizes = [8, 128], strides = [1, 1]} : vector<8x512xf32> to vector<8x128xf32>
      %95 = arith.negf %94 : vector<8x128xf32>
      %96 = math.exp %95 : vector<8x128xf32>
      %cst_35 = arith.constant 1.000000e+00 : f32
      %97 = vector.broadcast %cst_35 : f32 to vector<8x128xf32>
      %98 = arith.addf %97, %96 : vector<8x128xf32>
      %99 = arith.divf %97, %98 : vector<8x128xf32>
      %100 = vector.extract_strided_slice %87 {offsets = [0, 256], sizes = [8, 128], strides = [1, 1]} : vector<8x512xf32> to vector<8x128xf32>
      %101 = math.tanh %100 : vector<8x128xf32>
      %102 = vector.extract_strided_slice %87 {offsets = [0, 384], sizes = [8, 128], strides = [1, 1]} : vector<8x512xf32> to vector<8x128xf32>
      %103 = arith.negf %102 : vector<8x128xf32>
      %104 = math.exp %103 : vector<8x128xf32>
      %cst_36 = arith.constant 1.000000e+00 : f32
      %105 = vector.broadcast %cst_36 : f32 to vector<8x128xf32>
      %106 = arith.addf %105, %104 : vector<8x128xf32>
      %107 = arith.divf %105, %106 : vector<8x128xf32>
      %108 = arith.mulf %99, %78 : vector<8x128xf32>
      %109 = arith.mulf %93, %101 : vector<8x128xf32>
      %110 = arith.addf %108, %109 : vector<8x128xf32>
      %111 = math.tanh %110 : vector<8x128xf32>
      %112 = arith.mulf %107, %111 : vector<8x128xf32>
      %c0_37 = arith.constant 0 : index
      %c5 = arith.constant 5 : index
      %c0_38 = arith.constant 0 : index
      %c0_39 = arith.constant 0 : index
      %113 = vector.load %arg5[%c0_37, %c5, %c0_38, %c0_39] : memref<1x8x8x128xf32, #tpu.memory_space<vmem>>, vector<1x1x8x128xf32>
      %114 = vector.shape_cast %113 : vector<1x1x8x128xf32> to vector<8x128xf32>
      %115 = vector.shape_cast %112 : vector<8x128xf32> to vector<1x1x8x128xf32>
      tpu.vector_store %arg5[%c0_37, %c5, %c0_38, %c0_39], %115 {strides = array<i32>} : memref<1x8x8x128xf32, #tpu.memory_space<vmem>>, vector<1x1x8x128xf32>,
      %c32 = arith.constant 32 : index
      %c0_40 = arith.constant 0 : index
      %116 = vector.load %arg6[%c32, %c0_40] : memref<64x512xf32, #tpu.memory_space<vmem>>, vector<8x512xf32>
      %117 = arith.truncf %112 : vector<8x128xf32> to vector<8x128xbf16>
      %cst_41 = arith.constant dense<0.000000e+00> : vector<8x512xf32>
      %118 = tpu.matmul %117, %11, %cst_41 {dimension_numbers = #tpu.dot_dimension_numbers<[1], [0], [0], [1], [0, 0, 1, 1], [], []>} : vector<8x128xbf16>, vector<128x512xbf16>, vector<8x512xf32> -> vector<8x512xf32>
      %119 = arith.addf %116, %118 : vector<8x512xf32>
      %120 = vector.extract_strided_slice %119 {offsets = [0, 0], sizes = [8, 128], strides = [1, 1]} : vector<8x512xf32> to vector<8x128xf32>
      %121 = arith.negf %120 : vector<8x128xf32>
      %122 = math.exp %121 : vector<8x128xf32>
      %cst_42 = arith.constant 1.000000e+00 : f32
      %123 = vector.broadcast %cst_42 : f32 to vector<8x128xf32>
      %124 = arith.addf %123, %122 : vector<8x128xf32>
      %125 = arith.divf %123, %124 : vector<8x128xf32>
      %126 = vector.extract_strided_slice %119 {offsets = [0, 128], sizes = [8, 128], strides = [1, 1]} : vector<8x512xf32> to vector<8x128xf32>
      %127 = arith.negf %126 : vector<8x128xf32>
      %128 = math.exp %127 : vector<8x128xf32>
      %cst_43 = arith.constant 1.000000e+00 : f32
      %129 = vector.broadcast %cst_43 : f32 to vector<8x128xf32>
      %130 = arith.addf %129, %128 : vector<8x128xf32>
      %131 = arith.divf %129, %130 : vector<8x128xf32>
      %132 = vector.extract_strided_slice %119 {offsets = [0, 256], sizes = [8, 128], strides = [1, 1]} : vector<8x512xf32> to vector<8x128xf32>
      %133 = math.tanh %132 : vector<8x128xf32>
      %134 = vector.extract_strided_slice %119 {offsets = [0, 384], sizes = [8, 128], strides = [1, 1]} : vector<8x512xf32> to vector<8x128xf32>
      %135 = arith.negf %134 : vector<8x128xf32>
      %136 = math.exp %135 : vector<8x128xf32>
      %cst_44 = arith.constant 1.000000e+00 : f32
      %137 = vector.broadcast %cst_44 : f32 to vector<8x128xf32>
      %138 = arith.addf %137, %136 : vector<8x128xf32>
      %139 = arith.divf %137, %138 : vector<8x128xf32>
      %140 = arith.mulf %131, %110 : vector<8x128xf32>
      %141 = arith.mulf %125, %133 : vector<8x128xf32>
      %142 = arith.addf %140, %141 : vector<8x128xf32>
      %143 = math.tanh %142 : vector<8x128xf32>
      %144 = arith.mulf %139, %143 : vector<8x128xf32>
      %c0_45 = arith.constant 0 : index
      %c4 = arith.constant 4 : index
      %c0_46 = arith.constant 0 : index
      %c0_47 = arith.constant 0 : index
      %145 = vector.load %arg5[%c0_45, %c4, %c0_46, %c0_47] : memref<1x8x8x128xf32, #tpu.memory_space<vmem>>, vector<1x1x8x128xf32>
      %146 = vector.shape_cast %145 : vector<1x1x8x128xf32> to vector<8x128xf32>
      %147 = vector.shape_cast %144 : vector<8x128xf32> to vector<1x1x8x128xf32>
      tpu.vector_store %arg5[%c0_45, %c4, %c0_46, %c0_47], %147 {strides = array<i32>} : memref<1x8x8x128xf32, #tpu.memory_space<vmem>>, vector<1x1x8x128xf32>,
      %c24 = arith.constant 24 : index
      %c0_48 = arith.constant 0 : index
      %148 = vector.load %arg6[%c24, %c0_48] : memref<64x512xf32, #tpu.memory_space<vmem>>, vector<8x512xf32>
      %149 = arith.truncf %144 : vector<8x128xf32> to vector<8x128xbf16>
      %cst_49 = arith.constant dense<0.000000e+00> : vector<8x512xf32>
      %150 = tpu.matmul %149, %11, %cst_49 {dimension_numbers = #tpu.dot_dimension_numbers<[1], [0], [0], [1], [0, 0, 1, 1], [], []>} : vector<8x128xbf16>, vector<128x512xbf16>, vector<8x512xf32> -> vector<8x512xf32>
      %151 = arith.addf %148, %150 : vector<8x512xf32>
      %152 = vector.extract_strided_slice %151 {offsets = [0, 0], sizes = [8, 128], strides = [1, 1]} : vector<8x512xf32> to vector<8x128xf32>
      %153 = arith.negf %152 : vector<8x128xf32>
      %154 = math.exp %153 : vector<8x128xf32>
      %cst_50 = arith.constant 1.000000e+00 : f32
      %155 = vector.broadcast %cst_50 : f32 to vector<8x128xf32>
      %156 = arith.addf %155, %154 : vector<8x128xf32>
      %157 = arith.divf %155, %156 : vector<8x128xf32>
      %158 = vector.extract_strided_slice %151 {offsets = [0, 128], sizes = [8, 128], strides = [1, 1]} : vector<8x512xf32> to vector<8x128xf32>
      %159 = arith.negf %158 : vector<8x128xf32>
      %160 = math.exp %159 : vector<8x128xf32>
      %cst_51 = arith.constant 1.000000e+00 : f32
      %161 = vector.broadcast %cst_51 : f32 to vector<8x128xf32>
      %162 = arith.addf %161, %160 : vector<8x128xf32>
      %163 = arith.divf %161, %162 : vector<8x128xf32>
      %164 = vector.extract_strided_slice %151 {offsets = [0, 256], sizes = [8, 128], strides = [1, 1]} : vector<8x512xf32> to vector<8x128xf32>
      %165 = math.tanh %164 : vector<8x128xf32>
      %166 = vector.extract_strided_slice %151 {offsets = [0, 384], sizes = [8, 128], strides = [1, 1]} : vector<8x512xf32> to vector<8x128xf32>
      %167 = arith.negf %166 : vector<8x128xf32>
      %168 = math.exp %167 : vector<8x128xf32>
      %cst_52 = arith.constant 1.000000e+00 : f32
      %169 = vector.broadcast %cst_52 : f32 to vector<8x128xf32>
      %170 = arith.addf %169, %168 : vector<8x128xf32>
      %171 = arith.divf %169, %170 : vector<8x128xf32>
      %172 = arith.mulf %163, %142 : vector<8x128xf32>
      %173 = arith.mulf %157, %165 : vector<8x128xf32>
      %174 = arith.addf %172, %173 : vector<8x128xf32>
      %175 = math.tanh %174 : vector<8x128xf32>
      %176 = arith.mulf %171, %175 : vector<8x128xf32>
      %c0_53 = arith.constant 0 : index
      %c3 = arith.constant 3 : index
      %c0_54 = arith.constant 0 : index
      %c0_55 = arith.constant 0 : index
      %177 = vector.load %arg5[%c0_53, %c3, %c0_54, %c0_55] : memref<1x8x8x128xf32, #tpu.memory_space<vmem>>, vector<1x1x8x128xf32>
      %178 = vector.shape_cast %177 : vector<1x1x8x128xf32> to vector<8x128xf32>
      %179 = vector.shape_cast %176 : vector<8x128xf32> to vector<1x1x8x128xf32>
      tpu.vector_store %arg5[%c0_53, %c3, %c0_54, %c0_55], %179 {strides = array<i32>} : memref<1x8x8x128xf32, #tpu.memory_space<vmem>>, vector<1x1x8x128xf32>,
      %c16 = arith.constant 16 : index
      %c0_56 = arith.constant 0 : index
      %180 = vector.load %arg6[%c16, %c0_56] : memref<64x512xf32, #tpu.memory_space<vmem>>, vector<8x512xf32>
      %181 = arith.truncf %176 : vector<8x128xf32> to vector<8x128xbf16>
      %cst_57 = arith.constant dense<0.000000e+00> : vector<8x512xf32>
      %182 = tpu.matmul %181, %11, %cst_57 {dimension_numbers = #tpu.dot_dimension_numbers<[1], [0], [0], [1], [0, 0, 1, 1], [], []>} : vector<8x128xbf16>, vector<128x512xbf16>, vector<8x512xf32> -> vector<8x512xf32>
      %183 = arith.addf %180, %182 : vector<8x512xf32>
      %184 = vector.extract_strided_slice %183 {offsets = [0, 0], sizes = [8, 128], strides = [1, 1]} : vector<8x512xf32> to vector<8x128xf32>
      %185 = arith.negf %184 : vector<8x128xf32>
      %186 = math.exp %185 : vector<8x128xf32>
      %cst_58 = arith.constant 1.000000e+00 : f32
      %187 = vector.broadcast %cst_58 : f32 to vector<8x128xf32>
      %188 = arith.addf %187, %186 : vector<8x128xf32>
      %189 = arith.divf %187, %188 : vector<8x128xf32>
      %190 = vector.extract_strided_slice %183 {offsets = [0, 128], sizes = [8, 128], strides = [1, 1]} : vector<8x512xf32> to vector<8x128xf32>
      %191 = arith.negf %190 : vector<8x128xf32>
      %192 = math.exp %191 : vector<8x128xf32>
      %cst_59 = arith.constant 1.000000e+00 : f32
      %193 = vector.broadcast %cst_59 : f32 to vector<8x128xf32>
      %194 = arith.addf %193, %192 : vector<8x128xf32>
      %195 = arith.divf %193, %194 : vector<8x128xf32>
      %196 = vector.extract_strided_slice %183 {offsets = [0, 256], sizes = [8, 128], strides = [1, 1]} : vector<8x512xf32> to vector<8x128xf32>
      %197 = math.tanh %196 : vector<8x128xf32>
      %198 = vector.extract_strided_slice %183 {offsets = [0, 384], sizes = [8, 128], strides = [1, 1]} : vector<8x512xf32> to vector<8x128xf32>
      %199 = arith.negf %198 : vector<8x128xf32>
      %200 = math.exp %199 : vector<8x128xf32>
      %cst_60 = arith.constant 1.000000e+00 : f32
      %201 = vector.broadcast %cst_60 : f32 to vector<8x128xf32>
      %202 = arith.addf %201, %200 : vector<8x128xf32>
      %203 = arith.divf %201, %202 : vector<8x128xf32>
      %204 = arith.mulf %195, %174 : vector<8x128xf32>
      %205 = arith.mulf %189, %197 : vector<8x128xf32>
      %206 = arith.addf %204, %205 : vector<8x128xf32>
      %207 = math.tanh %206 : vector<8x128xf32>
      %208 = arith.mulf %203, %207 : vector<8x128xf32>
      %c0_61 = arith.constant 0 : index
      %c2 = arith.constant 2 : index
      %c0_62 = arith.constant 0 : index
      %c0_63 = arith.constant 0 : index
      %209 = vector.load %arg5[%c0_61, %c2, %c0_62, %c0_63] : memref<1x8x8x128xf32, #tpu.memory_space<vmem>>, vector<1x1x8x128xf32>
      %210 = vector.shape_cast %209 : vector<1x1x8x128xf32> to vector<8x128xf32>
      %211 = vector.shape_cast %208 : vector<8x128xf32> to vector<1x1x8x128xf32>
      tpu.vector_store %arg5[%c0_61, %c2, %c0_62, %c0_63], %211 {strides = array<i32>} : memref<1x8x8x128xf32, #tpu.memory_space<vmem>>, vector<1x1x8x128xf32>,
      %c8 = arith.constant 8 : index
      %c0_64 = arith.constant 0 : index
      %212 = vector.load %arg6[%c8, %c0_64] : memref<64x512xf32, #tpu.memory_space<vmem>>, vector<8x512xf32>
      %213 = arith.truncf %208 : vector<8x128xf32> to vector<8x128xbf16>
      %cst_65 = arith.constant dense<0.000000e+00> : vector<8x512xf32>
      %214 = tpu.matmul %213, %11, %cst_65 {dimension_numbers = #tpu.dot_dimension_numbers<[1], [0], [0], [1], [0, 0, 1, 1], [], []>} : vector<8x128xbf16>, vector<128x512xbf16>, vector<8x512xf32> -> vector<8x512xf32>
      %215 = arith.addf %212, %214 : vector<8x512xf32>
      %216 = vector.extract_strided_slice %215 {offsets = [0, 0], sizes = [8, 128], strides = [1, 1]} : vector<8x512xf32> to vector<8x128xf32>
      %217 = arith.negf %216 : vector<8x128xf32>
      %218 = math.exp %217 : vector<8x128xf32>
      %cst_66 = arith.constant 1.000000e+00 : f32
      %219 = vector.broadcast %cst_66 : f32 to vector<8x128xf32>
      %220 = arith.addf %219, %218 : vector<8x128xf32>
      %221 = arith.divf %219, %220 : vector<8x128xf32>
      %222 = vector.extract_strided_slice %215 {offsets = [0, 128], sizes = [8, 128], strides = [1, 1]} : vector<8x512xf32> to vector<8x128xf32>
      %223 = arith.negf %222 : vector<8x128xf32>
      %224 = math.exp %223 : vector<8x128xf32>
      %cst_67 = arith.constant 1.000000e+00 : f32
      %225 = vector.broadcast %cst_67 : f32 to vector<8x128xf32>
      %226 = arith.addf %225, %224 : vector<8x128xf32>
      %227 = arith.divf %225, %226 : vector<8x128xf32>
      %228 = vector.extract_strided_slice %215 {offsets = [0, 256], sizes = [8, 128], strides = [1, 1]} : vector<8x512xf32> to vector<8x128xf32>
      %229 = math.tanh %228 : vector<8x128xf32>
      %230 = vector.extract_strided_slice %215 {offsets = [0, 384], sizes = [8, 128], strides = [1, 1]} : vector<8x512xf32> to vector<8x128xf32>
      %231 = arith.negf %230 : vector<8x128xf32>
      %232 = math.exp %231 : vector<8x128xf32>
      %cst_68 = arith.constant 1.000000e+00 : f32
      %233 = vector.broadcast %cst_68 : f32 to vector<8x128xf32>
      %234 = arith.addf %233, %232 : vector<8x128xf32>
      %235 = arith.divf %233, %234 : vector<8x128xf32>
      %236 = arith.mulf %227, %206 : vector<8x128xf32>
      %237 = arith.mulf %221, %229 : vector<8x128xf32>
      %238 = arith.addf %236, %237 : vector<8x128xf32>
      %239 = math.tanh %238 : vector<8x128xf32>
      %240 = arith.mulf %235, %239 : vector<8x128xf32>
      %c0_69 = arith.constant 0 : index
      %c1 = arith.constant 1 : index
      %c0_70 = arith.constant 0 : index
      %c0_71 = arith.constant 0 : index
      %241 = vector.load %arg5[%c0_69, %c1, %c0_70, %c0_71] : memref<1x8x8x128xf32, #tpu.memory_space<vmem>>, vector<1x1x8x128xf32>
      %242 = vector.shape_cast %241 : vector<1x1x8x128xf32> to vector<8x128xf32>
      %243 = vector.shape_cast %240 : vector<8x128xf32> to vector<1x1x8x128xf32>
      tpu.vector_store %arg5[%c0_69, %c1, %c0_70, %c0_71], %243 {strides = array<i32>} : memref<1x8x8x128xf32, #tpu.memory_space<vmem>>, vector<1x1x8x128xf32>,
      %c0_72 = arith.constant 0 : index
      %c0_73 = arith.constant 0 : index
      %244 = vector.load %arg6[%c0_72, %c0_73] : memref<64x512xf32, #tpu.memory_space<vmem>>, vector<8x512xf32>
      %245 = arith.truncf %240 : vector<8x128xf32> to vector<8x128xbf16>
      %cst_74 = arith.constant dense<0.000000e+00> : vector<8x512xf32>
      %246 = tpu.matmul %245, %11, %cst_74 {dimension_numbers = #tpu.dot_dimension_numbers<[1], [0], [0], [1], [0, 0, 1, 1], [], []>} : vector<8x128xbf16>, vector<128x512xbf16>, vector<8x512xf32> -> vector<8x512xf32>
      %247 = arith.addf %244, %246 : vector<8x512xf32>
      %248 = vector.extract_strided_slice %247 {offsets = [0, 0], sizes = [8, 128], strides = [1, 1]} : vector<8x512xf32> to vector<8x128xf32>
      %249 = arith.negf %248 : vector<8x128xf32>
      %250 = math.exp %249 : vector<8x128xf32>
      %cst_75 = arith.constant 1.000000e+00 : f32
      %251 = vector.broadcast %cst_75 : f32 to vector<8x128xf32>
      %252 = arith.addf %251, %250 : vector<8x128xf32>
      %253 = arith.divf %251, %252 : vector<8x128xf32>
      %254 = vector.extract_strided_slice %247 {offsets = [0, 128], sizes = [8, 128], strides = [1, 1]} : vector<8x512xf32> to vector<8x128xf32>
      %255 = arith.negf %254 : vector<8x128xf32>
      %256 = math.exp %255 : vector<8x128xf32>
      %cst_76 = arith.constant 1.000000e+00 : f32
      %257 = vector.broadcast %cst_76 : f32 to vector<8x128xf32>
      %258 = arith.addf %257, %256 : vector<8x128xf32>
      %259 = arith.divf %257, %258 : vector<8x128xf32>
      %260 = vector.extract_strided_slice %247 {offsets = [0, 256], sizes = [8, 128], strides = [1, 1]} : vector<8x512xf32> to vector<8x128xf32>
      %261 = math.tanh %260 : vector<8x128xf32>
      %262 = vector.extract_strided_slice %247 {offsets = [0, 384], sizes = [8, 128], strides = [1, 1]} : vector<8x512xf32> to vector<8x128xf32>
      %263 = arith.negf %262 : vector<8x128xf32>
      %264 = math.exp %263 : vector<8x128xf32>
      %cst_77 = arith.constant 1.000000e+00 : f32
      %265 = vector.broadcast %cst_77 : f32 to vector<8x128xf32>
      %266 = arith.addf %265, %264 : vector<8x128xf32>
      %267 = arith.divf %265, %266 : vector<8x128xf32>
      %268 = arith.mulf %259, %238 : vector<8x128xf32>
      %269 = arith.mulf %253, %261 : vector<8x128xf32>
      %270 = arith.addf %268, %269 : vector<8x128xf32>
      %271 = math.tanh %270 : vector<8x128xf32>
      %272 = arith.mulf %267, %271 : vector<8x128xf32>
      %c0_78 = arith.constant 0 : index
      %c0_79 = arith.constant 0 : index
      %c0_80 = arith.constant 0 : index
      %c0_81 = arith.constant 0 : index
      %273 = vector.load %arg5[%c0_78, %c0_79, %c0_80, %c0_81] : memref<1x8x8x128xf32, #tpu.memory_space<vmem>>, vector<1x1x8x128xf32>
      %274 = vector.shape_cast %273 : vector<1x1x8x128xf32> to vector<8x128xf32>
      %275 = vector.shape_cast %272 : vector<8x128xf32> to vector<1x1x8x128xf32>
      tpu.vector_store %arg5[%c0_78, %c0_79, %c0_80, %c0_81], %275 {strides = array<i32>} : memref<1x8x8x128xf32, #tpu.memory_space<vmem>>, vector<1x1x8x128xf32>,
    } else {
    }
    return
  }
  func.func @transform_0(%arg0: i32) -> (i32, i32) {
    %c0_i32 = arith.constant 0 : i32
    %c0_i32_0 = arith.constant 0 : i32
    %c0_i32_1 = arith.constant 0 : i32
    return %c0_i32, %c0_i32_0 : i32, i32
  }
  func.func @transform_1(%arg0: i32) -> (i32, i32, i32) {
    %c0_i32 = arith.constant 0 : i32
    %c0_i32_0 = arith.constant 0 : i32
    %c0_i32_1 = arith.constant 0 : i32
    return %arg0, %c0_i32, %c0_i32_0 : i32, i32, i32
  }
  func.func @transform_2(%arg0: i32) -> (i32, i32, i32) {
    %c0_i32 = arith.constant 0 : i32
    %c0_i32_0 = arith.constant 0 : i32
    %c0_i32_1 = arith.constant 0 : i32
    return %arg0, %c0_i32, %c0_i32_0 : i32, i32, i32
  }
  func.func @transform_3(%arg0: i32) -> (i32, i32, i32) {
    %c0_i32 = arith.constant 0 : i32
    %c0_i32_0 = arith.constant 0 : i32
    %c0_i32_1 = arith.constant 0 : i32
    return %arg0, %c0_i32, %c0_i32_0 : i32, i32, i32
  }
  func.func @transform_4(%arg0: i32) -> (i32, i32, i32, i32) {
    %c0_i32 = arith.constant 0 : i32
    %c0_i32_0 = arith.constant 0 : i32
    %c0_i32_1 = arith.constant 0 : i32
    %c0_i32_2 = arith.constant 0 : i32
    return %arg0, %c0_i32, %c0_i32_0, %c0_i32_1 : i32, i32, i32, i32
  }
}

</mosaic_0001>

<llo_original>
// kernel: tpu_custom_call.1
$region0: #{tpu_custom_call.1}
  #allocation0 [shape = 'u32[]', space=smem, size = 0x4, offset = 0x4, fixed_abs, tag = 'smem constant byte address 0x4 - core index']
  #allocation1 [shape = 'u32[144,128]{1,0:T(1,128)}', space=vmem, size = 0x12000, scoped, tag = 'internal scratch']
  #allocation2 [shape = 'f32[64,512]{1,0:T(8,128)}', space=vmem, size = 0x20000, scoped, tag = 'scratch operand']
  %s0 = inlined_call_operand.hbm [shape: f32[64,768], index: 0, kind: input, shape index: {}]
  %s1 = inlined_call_operand.hbm [shape: bf16[2,768,512], index: 1, kind: input, shape index: {}]
  %s2 = inlined_call_operand.hbm [shape: bf16[2,128,512], index: 2, kind: input, shape index: {}]
  %s3 = inlined_call_operand.hbm [shape: f32[2,1,512], index: 3, kind: input, shape index: {}]
  %s4 = inlined_call_operand.hbm [shape: f32[2,8,8,128], index: 4, kind: output, shape index: {}]
  %s5 = sld [smem:[#allocation0]]
  $region73: #{tpu_custom_call.1} parent=0
    _
  %s7 = ssub.s32 1, %s5
  %s8 = scalar_select 0, %s7, %s5
  $region1: #{tpu_custom_call.1} parent=0
    #allocation3 [shape = 'u8[196608]{0}', space=vmem, size = 0x30000, scoped, tag = 'input window, operand 0, single buffered']
    #allocation4 [shape = 's32[2]{0}', space=sflag, size = 0x8, scoped, tag = 'scoped memory for tpu_custom_call.1']
    #allocation5 [shape = 's32[2]{0}', space=sflag, size = 0x8, scoped, tag = 'scoped memory for tpu_custom_call.1']
    #allocation6 [shape = 'u8[1572864]{0}', space=vmem, size = 0x180000, scoped, tag = 'input window, operand 1']
    #allocation7 [shape = 's32[2]{0}', space=sflag, size = 0x8, scoped, tag = 'scoped memory for tpu_custom_call.1']
    #allocation8 [shape = 'u8[262144]{0}', space=vmem, size = 0x40000, scoped, tag = 'input window, operand 2']
    #allocation9 [shape = 'u8[4096]{0}', space=vmem, size = 0x1000, scoped, tag = 'input window, operand 3']
    #allocation10 [shape = 's32[2]{0}', space=sflag, size = 0x8, scoped, tag = 'scoped memory for tpu_custom_call.1']
    #allocation11 [shape = 'u8[65536]{0}', space=vmem, size = 0x10000, scoped, tag = 'output window, operand 0']
    %9 = vsyncpa [#allocation4], 0
    %10 = vsyncpa [#allocation7], 0
    %s11 = scalar_lea.sflag [#allocation7], 1
    %12 = vsyncpa %s11, 0
    %13 = vsyncpa [#allocation10], 0
    %s14 = scalar_lea.sflag [#allocation10], 1
    %15 = vsyncpa %s14, 0
    %16 = vsyncpa [#allocation5], 0
    %s17 = scalar_lea.sflag [#allocation5], 1
    %18 = vsyncpa %s17, 0
    loop: start=0, step=1, limit=4
    $region2: #{tpu_custom_call.1} parent=1 // loop_pre_header
      _
    $region3: #{tpu_custom_call.1} parent=1 // loop_header
      %s20 = sphi 0, %s24
      %p21 = scmp.ge.s32.totalorder %s20, 4
      %s28 = sphi 0, %s28
      %s30 = sphi 0, %s28
      %s31 = sphi 0, %s30
      %s45 = sphi 0, %s31
      %s51 = sphi 0, %s53
      %s54 = sphi 0, %s51
      %s55 = sphi 0, %s54
      %s71 = sphi 0, %s55
      %s77 = sphi 0, %s79
      %s80 = sphi 0, %s77
      %s81 = sphi 0, %s80
      %s97 = sphi 0, %s81
      %s103 = sphi 0, %s105
      %s106 = sphi 0, %s103
      %s107 = sphi 0, %s106
      %s123 = sphi 0, %s107
      %s129 = sphi 0, %s131
      %s132 = sphi 0, %s129
      %s133 = sphi 0, %s132
      %s149 = sphi 0, %s133
    $region4: #{tpu_custom_call.1} parent=1 // loop_header_branch
      %23 = sbr.rel (%p21) target = $region8
    $region5: #{tpu_custom_call.1} parent=1 // loop_body
      %s25 = ssub.s32 %s20, 1
      %s26 = ssub.s32 %s20, 2
      %s27 = sadd.s32 %s20, 1
      %s29 = sadd.s32 %s28, 1
      %p32 = scmp.eq.s32.totalorder %s20, 1
      %p33 = scmp.ne.s32.totalorder %s28, %s30
      %p34 = scmp.eq.s32.totalorder %s20, 0
      %p35 = por %p33, %p34
      %p36 = scmp.ne.s32.totalorder %s28, %s30
      %p37 = scmp.eq.s32.totalorder %s25, 1
      %p38 = por %p36, %p37
      %p39 = scmp.ne.s32.totalorder %s30, %s31
      %p40 = scmp.eq.s32.totalorder %s25, 0
      %p41 = por %p39, %p40
      %p42 = scmp.ne.s32.totalorder %s30, %s31
      %p43 = scmp.eq.s32.totalorder %s26, 1
      %p44 = por %p42, %p43
      %p46 = scmp.ne.s32.totalorder %s31, %s45
      %p47 = scmp.eq.s32.totalorder %s26, 0
      %p48 = por %p46, %p47
      %s49 = ssub.s32 %s20, %s27
      %p50 = scmp.eq.s32.totalorder %s49, 0
      %s52 = sadd.s32 %s51, 1
      %s53 = scalar_select %p50, %s51, %s52
      %p56 = pneg %p50
      %p57 = scmp.eq.s32.totalorder %s20, 1
      %p58 = por %p56, %p57
      %p59 = scmp.ne.s32.totalorder %s51, %s54
      %p60 = scmp.eq.s32.totalorder %s20, 0
      %p61 = por %p59, %p60
      %p62 = scmp.ne.s32.totalorder %s51, %s54
      %p63 = scmp.eq.s32.totalorder %s25, 1
      %p64 = por %p62, %p63
      %p65 = scmp.ne.s32.totalorder %s54, %s55
      %p66 = scmp.eq.s32.totalorder %s25, 0
      %p67 = por %p65, %p66
      %p68 = scmp.ne.s32.totalorder %s54, %s55
      %p69 = scmp.eq.s32.totalorder %s26, 1
      %p70 = por %p68, %p69
      %p72 = scmp.ne.s32.totalorder %s55, %s71
      %p73 = scmp.eq.s32.totalorder %s26, 0
      %p74 = por %p72, %p73
      %s75 = ssub.s32 %s20, %s27
      %p76 = scmp.eq.s32.totalorder %s75, 0
      %s78 = sadd.s32 %s77, 1
      %s79 = scalar_select %p76, %s77, %s78
      %p82 = pneg %p76
      %p83 = scmp.eq.s32.totalorder %s20, 1
      %p84 = por %p82, %p83
      %p85 = scmp.ne.s32.totalorder %s77, %s80
      %p86 = scmp.eq.s32.totalorder %s20, 0
      %p87 = por %p85, %p86
      %p88 = scmp.ne.s32.totalorder %s77, %s80
      %p89 = scmp.eq.s32.totalorder %s25, 1
      %p90 = por %p88, %p89
      %p91 = scmp.ne.s32.totalorder %s80, %s81
      %p92 = scmp.eq.s32.totalorder %s25, 0
      %p93 = por %p91, %p92
      %p94 = scmp.ne.s32.totalorder %s80, %s81
      %p95 = scmp.eq.s32.totalorder %s26, 1
      %p96 = por %p94, %p95
      %p98 = scmp.ne.s32.totalorder %s81, %s97
      %p99 = scmp.eq.s32.totalorder %s26, 0
      %p100 = por %p98, %p99
      %s101 = ssub.s32 %s20, %s27
      %p102 = scmp.eq.s32.totalorder %s101, 0
      %s104 = sadd.s32 %s103, 1
      %s105 = scalar_select %p102, %s103, %s104
      %p108 = pneg %p102
      %p109 = scmp.eq.s32.totalorder %s20, 1
      %p110 = por %p108, %p109
      %p111 = scmp.ne.s32.totalorder %s103, %s106
      %p112 = scmp.eq.s32.totalorder %s20, 0
      %p113 = por %p111, %p112
      %p114 = scmp.ne.s32.totalorder %s103, %s106
      %p115 = scmp.eq.s32.totalorder %s25, 1
      %p116 = por %p114, %p115
      %p117 = scmp.ne.s32.totalorder %s106, %s107
      %p118 = scmp.eq.s32.totalorder %s25, 0
      %p119 = por %p117, %p118
      %p120 = scmp.ne.s32.totalorder %s106, %s107
      %p121 = scmp.eq.s32.totalorder %s26, 1
      %p122 = por %p120, %p121
      %p124 = scmp.ne.s32.totalorder %s107, %s123
      %p125 = scmp.eq.s32.totalorder %s26, 0
      %p126 = por %p124, %p125
      %s127 = ssub.s32 %s20, %s27
      %p128 = scmp.eq.s32.totalorder %s127, 0
      %s130 = sadd.s32 %s129, 1
      %s131 = scalar_select %p128, %s129, %s130
      %p134 = pneg %p128
      %p135 = scmp.eq.s32.totalorder %s20, 1
      %p136 = por %p134, %p135
      %p137 = scmp.ne.s32.totalorder %s129, %s132
      %p138 = scmp.eq.s32.totalorder %s20, 0
      %p139 = por %p137, %p138
      %p140 = scmp.ne.s32.totalorder %s129, %s132
      %p141 = scmp.eq.s32.totalorder %s25, 1
      %p142 = por %p140, %p141
      %p143 = scmp.ne.s32.totalorder %s132, %s133
      %p144 = scmp.eq.s32.totalorder %s25, 0
      %p145 = por %p143, %p144
      %p146 = scmp.ne.s32.totalorder %s132, %s133
      %p147 = scmp.eq.s32.totalorder %s26, 1
      %p148 = por %p146, %p147
      %p150 = scmp.ne.s32.totalorder %s133, %s149
      %p151 = scmp.eq.s32.totalorder %s26, 0
      %p152 = por %p150, %p151
      %p153 = scmp.le.s32.totalorder 1, %s20
      %p154 = scmp.lt.s32.totalorder %s20, 3
      %p155 = pnand %p153, %p154
      %p156 = pneg %p155
      // Predicated region
      $region9: #{tpu_custom_call.1} parent=5 // pred_check
        _
      $region10: #{tpu_custom_call.1} parent=5 // pred_check_branch
        %158 = sbr.rel (%p155) target = $region12
      $region11: #{tpu_custom_call.1} parent=5 // pred_region
        %s159 = ssub.s32 %s20, 1
        // Predicated region
        $region13: #{tpu_custom_call.1} parent=11 // pred_check
          %p160 = pneg %p41
        $region14: #{tpu_custom_call.1} parent=11 // pred_check_branch
          %162 = sbr.rel (%p160) target = $region16
        $region15: #{tpu_custom_call.1} parent=11 // pred_region
          %s164 = ssub.s32 6144, 6144
          %165 = vsyncadd [#allocation4], %s164
          %s166 = sshll.u32 [#allocation3], 4
          %s167 = int_to_ptr.vmem [resolvable:$true] %s166
          %172 = dma.hbm_to_vmem [thread:$0]  %s0, 6144, %s167, [#allocation4], 768, 768, 48
        $region16: #{tpu_custom_call.1} parent=11 // pred_fallthru
          _
      $region12: #{tpu_custom_call.1} parent=5 // pred_fallthru
        _
      %p173 = scmp.lt.s32.totalorder %s20, 2
      // Predicated region
      $region17: #{tpu_custom_call.1} parent=5 // pred_check
        %p174 = pneg %p173
      $region18: #{tpu_custom_call.1} parent=5 // pred_check_branch
        %176 = sbr.rel (%p174) target = $region20
      $region19: #{tpu_custom_call.1} parent=5 // pred_region
        // Predicated region
        $region21: #{tpu_custom_call.1} parent=19 // pred_check
          %p177 = pneg %p61
        $region22: #{tpu_custom_call.1} parent=19 // pred_check_branch
          %179 = sbr.rel (%p177) target = $region24
        $region23: #{tpu_custom_call.1} parent=19 // pred_region
          %s180 = sand.u32 %s20, 1
          %s181 = scalar_lea.sflag [#allocation7], %s180
          %s182 = sand.u32 %s51, 1
          %s183 = smul.addr %s182, 1536
          %s184 = scalar_lea.vmem [#allocation6], %s183
          %s186 = ssub.s32 24576, 24576
          %187 = vsyncadd %s181, %s186
          %s188 = smul.addr %s20, 384
          %s189 = smul.addr %s188, 64
          %s190 = scalar_lea.hbm %s1, %s189
          %s191 = sshll.u32 %s184, 4
          %s192 = int_to_ptr.vmem [resolvable:$true] %s191
          %197 = dma.hbm_to_vmem [thread:$0]  %s190, 24576, %s192, %s181, 256, 256, 16
        $region24: #{tpu_custom_call.1} parent=19 // pred_fallthru
          _
        // Predicated region
        $region25: #{tpu_custom_call.1} parent=19 // pred_check
          %p198 = pneg %p87
        $region26: #{tpu_custom_call.1} parent=19 // pred_check_branch
          %200 = sbr.rel (%p198) target = $region28
        $region27: #{tpu_custom_call.1} parent=19 // pred_region
          %s201 = sand.u32 %s20, 1
          %s202 = scalar_lea.sflag [#allocation7], %s201
          %s203 = sand.u32 %s77, 1
          %s204 = smul.addr %s203, 256
          %s205 = scalar_lea.vmem [#allocation8], %s204
          %s207 = ssub.s32 4096, 4096
          %208 = vsyncadd %s202, %s207
          %s209 = smul.addr %s20, 64
          %s210 = smul.addr %s209, 64
          %s211 = scalar_lea.hbm %s2, %s210
          %s212 = sshll.u32 %s205, 4
          %s213 = int_to_ptr.vmem [resolvable:$true] %s212
          %218 = dma.hbm_to_vmem [thread:$0]  %s211, 4096, %s213, %s202, 256, 256, 16
        $region28: #{tpu_custom_call.1} parent=19 // pred_fallthru
          _
        // Predicated region
        $region29: #{tpu_custom_call.1} parent=19 // pred_check
          %p219 = pneg %p113
        $region30: #{tpu_custom_call.1} parent=19 // pred_check_branch
          %221 = sbr.rel (%p219) target = $region32
        $region31: #{tpu_custom_call.1} parent=19 // pred_region
          %s222 = sand.u32 %s103, 1
          %s223 = scalar_lea.sflag [#allocation10], %s222
          %s224 = sand.u32 %s103, 1
          %s225 = smul.addr %s224, 4
          %s226 = scalar_lea.vmem [#allocation9], %s225
          %s228 = ssub.s32 64, 64
          %229 = vsyncadd %s223, %s228
          %s230 = smul.addr %s20, 4
          %s231 = smul.addr %s230, 16
          %s232 = scalar_lea.hbm %s3, %s231
          %s234 = sshll.u32 %s226, 4
          %s235 = int_to_ptr.vmem [resolvable:$true] %s234
          %237 = dma.hbm_to_vmem [thread:$0]  %s232, 64, %s235, %s223
        $region32: #{tpu_custom_call.1} parent=19 // pred_fallthru
          _
      $region20: #{tpu_custom_call.1} parent=5 // pred_fallthru
        _
      %p238 = scmp.le.s32.totalorder 1, %s20
      %p239 = scmp.lt.s32.totalorder %s20, 3
      %p240 = pnand %p238, %p239
      %p241 = pneg %p240
      // Predicated region
      $region33: #{tpu_custom_call.1} parent=5 // pred_check
        _
      $region34: #{tpu_custom_call.1} parent=5 // pred_check_branch
        %243 = sbr.rel (%p240) target = $region36
      $region35: #{tpu_custom_call.1} parent=5 // pred_region
        %s244 = ssub.s32 %s20, 1
        // Predicated region
        $region37: #{tpu_custom_call.1} parent=35 // pred_check
          %p245 = pneg %p41
        $region38: #{tpu_custom_call.1} parent=35 // pred_check_branch
          %247 = sbr.rel (%p245) target = $region40
        $region39: #{tpu_custom_call.1} parent=35 // pred_region
          %248 = dma.done [#allocation4], 6144
        $region40: #{tpu_custom_call.1} parent=35 // pred_fallthru
          _
        %s249 = sand.u32 %s25, 1
        %s250 = scalar_lea.sflag [#allocation7], %s249
        %s251 = sand.u32 %s54, 1
        %s252 = smul.addr %s251, 1536
        %s253 = scalar_lea.vmem [#allocation6], %s252
        // Predicated region
        $region41: #{tpu_custom_call.1} parent=35 // pred_check
          %p254 = pneg %p67
        $region42: #{tpu_custom_call.1} parent=35 // pred_check_branch
          %256 = sbr.rel (%p254) target = $region44
        $region43: #{tpu_custom_call.1} parent=35 // pred_region
          %257 = dma.done %s250, 24576
        $region44: #{tpu_custom_call.1} parent=35 // pred_fallthru
          _
        %s258 = sand.u32 %s25, 1
        %s259 = scalar_lea.sflag [#allocation7], %s258
        %s260 = sand.u32 %s80, 1
        %s261 = smul.addr %s260, 256
        %s262 = scalar_lea.vmem [#allocation8], %s261
        // Predicated region
        $region45: #{tpu_custom_call.1} parent=35 // pred_check
          %p263 = pneg %p93
        $region46: #{tpu_custom_call.1} parent=35 // pred_check_branch
          %265 = sbr.rel (%p263) target = $region48
        $region47: #{tpu_custom_call.1} parent=35 // pred_region
          %266 = dma.done %s259, 4096
        $region48: #{tpu_custom_call.1} parent=35 // pred_fallthru
          _
        %s267 = sand.u32 %s106, 1
        %s268 = scalar_lea.sflag [#allocation10], %s267
        %s269 = sand.u32 %s106, 1
        %s270 = smul.addr %s269, 4
        %s271 = scalar_lea.vmem [#allocation9], %s270
        // Predicated region
        $region49: #{tpu_custom_call.1} parent=35 // pred_check
          %p272 = pneg %p119
        $region50: #{tpu_custom_call.1} parent=35 // pred_check_branch
          %274 = sbr.rel (%p272) target = $region52
        $region51: #{tpu_custom_call.1} parent=35 // pred_region
          %275 = dma.done %s268, 64
        $region52: #{tpu_custom_call.1} parent=35 // pred_fallthru
          _
        %p276 = pneg %p41
        %p277 = pneg %p38
        %s278 = sand.u32 %s25, 1
        %s279 = scalar_lea.sflag [#allocation7], %s278
        %s280 = sand.u32 %s54, 1
        %s281 = smul.addr %s280, 1536
        %s282 = scalar_lea.vmem [#allocation6], %s281
        %p283 = pneg %p67
        %p284 = pneg %p64
        %s285 = sand.u32 %s25, 1
        %s286 = scalar_lea.sflag [#allocation7], %s285
        %s287 = sand.u32 %s80, 1
        %s288 = smul.addr %s287, 256
        %s289 = scalar_lea.vmem [#allocation8], %s288
        %p290 = pneg %p93
        %p291 = pneg %p90
        %s292 = sand.u32 %s106, 1
        %s293 = scalar_lea.sflag [#allocation10], %s292
        %s294 = sand.u32 %s106, 1
        %s295 = smul.addr %s294, 4
        %s296 = scalar_lea.vmem [#allocation9], %s295
        %p297 = pneg %p119
        %p298 = pneg %p116
        %p299 = pneg %p145
        %p300 = pneg %p142
        %s301 = sand.u32 %s132, 1
        %s302 = scalar_lea.sflag [#allocation5], %s301
        %s303 = sand.u32 %s132, 1
        %s304 = smul.addr %s303, 64
        %s305 = scalar_lea.vmem [#allocation11], %s304
        %v307 = vld [vmem:[#allocation3] sm:$0xff]
        %v308 = vld [vmem:[#allocation3 + $0x8] sm:$0xff]
        %v309 = vld [vmem:[#allocation3 + $0x10] sm:$0xff]
        %v310 = vld [vmem:[#allocation3 + $0x18] sm:$0xff]
        %v311 = vld [vmem:[#allocation3 + $0x20] sm:$0xff]
        %v312 = vld [vmem:[#allocation3 + $0x28] sm:$0xff]
        %v313 = vld [vmem:[#allocation3 + $0x30] sm:$0xff]
        %v314 = vld [vmem:[#allocation3 + $0x38] sm:$0xff]
        %v315 = vld [vmem:[#allocation3 + $0x40] sm:$0xff]
        %v316 = vld [vmem:[#allocation3 + $0x48] sm:$0xff]
        %v317 = vld [vmem:[#allocation3 + $0x50] sm:$0xff]
        %v318 = vld [vmem:[#allocation3 + $0x58] sm:$0xff]
        %v319 = vld [vmem:[#allocation3 + $0x60] sm:$0xff]
        %v320 = vld [vmem:[#allocation3 + $0x68] sm:$0xff]
        %v321 = vld [vmem:[#allocation3 + $0x70] sm:$0xff]
        %v322 = vld [vmem:[#allocation3 + $0x78] sm:$0xff]
        %v323 = vld [vmem:[#allocation3 + $0x80] sm:$0xff]
        %v324 = vld [vmem:[#allocation3 + $0x88] sm:$0xff]
        %v325 = vld [vmem:[#allocation3 + $0x90] sm:$0xff]
        %v326 = vld [vmem:[#allocation3 + $0x98] sm:$0xff]
        %v327 = vld [vmem:[#allocation3 + $0xa0] sm:$0xff]
        %v328 = vld [vmem:[#allocation3 + $0xa8] sm:$0xff]
        %v329 = vld [vmem:[#allocation3 + $0xb0] sm:$0xff]
        %v330 = vld [vmem:[#allocation3 + $0xb8] sm:$0xff]
        %v331 = vld [vmem:[#allocation3 + $0xc0] sm:$0xff]
        %v332 = vld [vmem:[#allocation3 + $0xc8] sm:$0xff]
        %v333 = vld [vmem:[#allocation3 + $0xd0] sm:$0xff]
        %v334 = vld [vmem:[#allocation3 + $0xd8] sm:$0xff]
        %v335 = vld [vmem:[#allocation3 + $0xe0] sm:$0xff]
        %v336 = vld [vmem:[#allocation3 + $0xe8] sm:$0xff]
        %v337 = vld [vmem:[#allocation3 + $0xf0] sm:$0xff]
        %v338 = vld [vmem:[#allocation3 + $0xf8] sm:$0xff]
        %v339 = vld [vmem:[#allocation3 + $0x100] sm:$0xff]
        %v340 = vld [vmem:[#allocation3 + $0x108] sm:$0xff]
        %v341 = vld [vmem:[#allocation3 + $0x110] sm:$0xff]
        %v342 = vld [vmem:[#allocation3 + $0x118] sm:$0xff]
        %v343 = vld [vmem:[#allocation3 + $0x120] sm:$0xff]
        %v344 = vld [vmem:[#allocation3 + $0x128] sm:$0xff]
        %v345 = vld [vmem:[#allocation3 + $0x130] sm:$0xff]
        %v346 = vld [vmem:[#allocation3 + $0x138] sm:$0xff]
        %v347 = vld [vmem:[#allocation3 + $0x140] sm:$0xff]
        %v348 = vld [vmem:[#allocation3 + $0x148] sm:$0xff]
        %v349 = vld [vmem:[#allocation3 + $0x150] sm:$0xff]
        %v350 = vld [vmem:[#allocation3 + $0x158] sm:$0xff]
        %v351 = vld [vmem:[#allocation3 + $0x160] sm:$0xff]
        %v352 = vld [vmem:[#allocation3 + $0x168] sm:$0xff]
        %v353 = vld [vmem:[#allocation3 + $0x170] sm:$0xff]
        %v354 = vld [vmem:[#allocation3 + $0x178] sm:$0xff]
        %v355 = vpack.c.bf16 %v313, %v307
        %v356 = vpack.c.bf16 %v314, %v308
        %v357 = vpack.c.bf16 %v315, %v309
        %v358 = vpack.c.bf16 %v316, %v310
        %v359 = vpack.c.bf16 %v317, %v311
        %v360 = vpack.c.bf16 %v318, %v312
        %v361 = vpack.c.bf16 %v325, %v319
        %v362 = vpack.c.bf16 %v326, %v320
        %v363 = vpack.c.bf16 %v327, %v321
        %v364 = vpack.c.bf16 %v328, %v322
        %v365 = vpack.c.bf16 %v329, %v323
        %v366 = vpack.c.bf16 %v330, %v324
        %v367 = vpack.c.bf16 %v337, %v331
        %v368 = vpack.c.bf16 %v338, %v332
        %v369 = vpack.c.bf16 %v339, %v333
        %v370 = vpack.c.bf16 %v340, %v334
        %v371 = vpack.c.bf16 %v341, %v335
        %v372 = vpack.c.bf16 %v342, %v336
        %v373 = vpack.c.bf16 %v349, %v343
        %v374 = vpack.c.bf16 %v350, %v344
        %v375 = vpack.c.bf16 %v351, %v345
        %v376 = vpack.c.bf16 %v352, %v346
        %v377 = vpack.c.bf16 %v353, %v347
        %v378 = vpack.c.bf16 %v354, %v348
        %v379 = vld [vmem:[%s253] sm:$0xff]
        %v380 = vld [vmem:[%s253 + $0x8] sm:$0xff]
        %v381 = vld [vmem:[%s253 + $0x10] sm:$0xff]
        %v382 = vld [vmem:[%s253 + $0x18] sm:$0xff]
        %v383 = vld [vmem:[%s253 + $0x20] sm:$0xff]
        %v384 = vld [vmem:[%s253 + $0x28] sm:$0xff]
        %v385 = vld [vmem:[%s253 + $0x30] sm:$0xff]
        %v386 = vld [vmem:[%s253 + $0x38] sm:$0xff]
        %v387 = vld [vmem:[%s253 + $0x40] sm:$0xff]
        %v388 = vld [vmem:[%s253 + $0x48] sm:$0xff]
        %v389 = vld [vmem:[%s253 + $0x50] sm:$0xff]
        %v390 = vld [vmem:[%s253 + $0x58] sm:$0xff]
        %v391 = vld [vmem:[%s253 + $0x60] sm:$0xff]
        %v392 = vld [vmem:[%s253 + $0x68] sm:$0xff]
        %v393 = vld [vmem:[%s253 + $0x70] sm:$0xff]
        %v394 = vld [vmem:[%s253 + $0x78] sm:$0xff]
        %v395 = vld [vmem:[%s253 + $0x80] sm:$0xff]
        %v396 = vld [vmem:[%s253 + $0x88] sm:$0xff]
        %v397 = vld [vmem:[%s253 + $0x90] sm:$0xff]
        %v398 = vld [vmem:[%s253 + $0x98] sm:$0xff]
        %v399 = vld [vmem:[%s253 + $0xa0] sm:$0xff]
        %v400 = vld [vmem:[%s253 + $0xa8] sm:$0xff]
        %v401 = vld [vmem:[%s253 + $0xb0] sm:$0xff]
        %v402 = vld [vmem:[%s253 + $0xb8] sm:$0xff]
        %v403 = vld [vmem:[%s253 + $0xc0] sm:$0xff]
        %v404 = vld [vmem:[%s253 + $0xc8] sm:$0xff]
        %v405 = vld [vmem:[%s253 + $0xd0] sm:$0xff]
        %v406 = vld [vmem:[%s253 + $0xd8] sm:$0xff]
        %v407 = vld [vmem:[%s253 + $0xe0] sm:$0xff]
        %v408 = vld [vmem:[%s253 + $0xe8] sm:$0xff]
        %v409 = vld [vmem:[%s253 + $0xf0] sm:$0xff]
        %v410 = vld [vmem:[%s253 + $0xf8] sm:$0xff]
        %v411 = vld [vmem:[%s253 + $0x100] sm:$0xff]
        %v412 = vld [vmem:[%s253 + $0x108] sm:$0xff]
        %v413 = vld [vmem:[%s253 + $0x110] sm:$0xff]
        %v414 = vld [vmem:[%s253 + $0x118] sm:$0xff]
        %v415 = vld [vmem:[%s253 + $0x120] sm:$0xff]
        %v416 = vld [vmem:[%s253 + $0x128] sm:$0xff]
        %v417 = vld [vmem:[%s253 + $0x130] sm:$0xff]
        %v418 = vld [vmem:[%s253 + $0x138] sm:$0xff]
        %v419 = vld [vmem:[%s253 + $0x140] sm:$0xff]
        %v420 = vld [vmem:[%s253 + $0x148] sm:$0xff]
        %v421 = vld [vmem:[%s253 + $0x150] sm:$0xff]
        %v422 = vld [vmem:[%s253 + $0x158] sm:$0xff]
        %v423 = vld [vmem:[%s253 + $0x160] sm:$0xff]
        %v424 = vld [vmem:[%s253 + $0x168] sm:$0xff]
        %v425 = vld [vmem:[%s253 + $0x170] sm:$0xff]
        %v426 = vld [vmem:[%s253 + $0x178] sm:$0xff]
        %v427 = vld [vmem:[%s253 + $0x180] sm:$0xff]
        %v428 = vld [vmem:[%s253 + $0x188] sm:$0xff]
        %v429 = vld [vmem:[%s253 + $0x190] sm:$0xff]
        %v430 = vld [vmem:[%s253 + $0x198] sm:$0xff]
        %v431 = vld [vmem:[%s253 + $0x1a0] sm:$0xff]
        %v432 = vld [vmem:[%s253 + $0x1a8] sm:$0xff]
        %v433 = vld [vmem:[%s253 + $0x1b0] sm:$0xff]
        %v434 = vld [vmem:[%s253 + $0x1b8] sm:$0xff]
        %v435 = vld [vmem:[%s253 + $0x1c0] sm:$0xff]
        %v436 = vld [vmem:[%s253 + $0x1c8] sm:$0xff]
        %v437 = vld [vmem:[%s253 + $0x1d0] sm:$0xff]
        %v438 = vld [vmem:[%s253 + $0x1d8] sm:$0xff]
        %v439 = vld [vmem:[%s253 + $0x1e0] sm:$0xff]
        %v440 = vld [vmem:[%s253 + $0x1e8] sm:$0xff]
        %v441 = vld [vmem:[%s253 + $0x1f0] sm:$0xff]
        %v442 = vld [vmem:[%s253 + $0x1f8] sm:$0xff]
        %v443 = vld [vmem:[%s253 + $0x200] sm:$0xff]
        %v444 = vld [vmem:[%s253 + $0x208] sm:$0xff]
        %v445 = vld [vmem:[%s253 + $0x210] sm:$0xff]
        %v446 = vld [vmem:[%s253 + $0x218] sm:$0xff]
        %v447 = vld [vmem:[%s253 + $0x220] sm:$0xff]
        %v448 = vld [vmem:[%s253 + $0x228] sm:$0xff]
        %v449 = vld [vmem:[%s253 + $0x230] sm:$0xff]
        %v450 = vld [vmem:[%s253 + $0x238] sm:$0xff]
        %v451 = vld [vmem:[%s253 + $0x240] sm:$0xff]
        %v452 = vld [vmem:[%s253 + $0x248] sm:$0xff]
        %v453 = vld [vmem:[%s253 + $0x250] sm:$0xff]
        %v454 = vld [vmem:[%s253 + $0x258] sm:$0xff]
        %v455 = vld [vmem:[%s253 + $0x260] sm:$0xff]
        %v456 = vld [vmem:[%s253 + $0x268] sm:$0xff]
        %v457 = vld [vmem:[%s253 + $0x270] sm:$0xff]
        %v458 = vld [vmem:[%s253 + $0x278] sm:$0xff]
        %v459 = vld [vmem:[%s253 + $0x280] sm:$0xff]
        %v460 = vld [vmem:[%s253 + $0x288] sm:$0xff]
        %v461 = vld [vmem:[%s253 + $0x290] sm:$0xff]
        %v462 = vld [vmem:[%s253 + $0x298] sm:$0xff]
        %v463 = vld [vmem:[%s253 + $0x2a0] sm:$0xff]
        %v464 = vld [vmem:[%s253 + $0x2a8] sm:$0xff]
        %v465 = vld [vmem:[%s253 + $0x2b0] sm:$0xff]
        %v466 = vld [vmem:[%s253 + $0x2b8] sm:$0xff]
        %v467 = vld [vmem:[%s253 + $0x2c0] sm:$0xff]
        %v468 = vld [vmem:[%s253 + $0x2c8] sm:$0xff]
        %v469 = vld [vmem:[%s253 + $0x2d0] sm:$0xff]
        %v470 = vld [vmem:[%s253 + $0x2d8] sm:$0xff]
        %v471 = vld [vmem:[%s253 + $0x2e0] sm:$0xff]
        %v472 = vld [vmem:[%s253 + $0x2e8] sm:$0xff]
        %v473 = vld [vmem:[%s253 + $0x2f0] sm:$0xff]
        %v474 = vld [vmem:[%s253 + $0x2f8] sm:$0xff]
        %v475 = vld [vmem:[%s253 + $0x300] sm:$0xff]
        %v476 = vld [vmem:[%s253 + $0x308] sm:$0xff]
        %v477 = vld [vmem:[%s253 + $0x310] sm:$0xff]
        %v478 = vld [vmem:[%s253 + $0x318] sm:$0xff]
        %v479 = vld [vmem:[%s253 + $0x320] sm:$0xff]
        %v480 = vld [vmem:[%s253 + $0x328] sm:$0xff]
        %v481 = vld [vmem:[%s253 + $0x330] sm:$0xff]
        %v482 = vld [vmem:[%s253 + $0x338] sm:$0xff]
        %v483 = vld [vmem:[%s253 + $0x340] sm:$0xff]
        %v484 = vld [vmem:[%s253 + $0x348] sm:$0xff]
        %v485 = vld [vmem:[%s253 + $0x350] sm:$0xff]
        %v486 = vld [vmem:[%s253 + $0x358] sm:$0xff]
        %v487 = vld [vmem:[%s253 + $0x360] sm:$0xff]
        %v488 = vld [vmem:[%s253 + $0x368] sm:$0xff]
        %v489 = vld [vmem:[%s253 + $0x370] sm:$0xff]
        %v490 = vld [vmem:[%s253 + $0x378] sm:$0xff]
        %v491 = vld [vmem:[%s253 + $0x380] sm:$0xff]
        %v492 = vld [vmem:[%s253 + $0x388] sm:$0xff]
        %v493 = vld [vmem:[%s253 + $0x390] sm:$0xff]
        %v494 = vld [vmem:[%s253 + $0x398] sm:$0xff]
        %v495 = vld [vmem:[%s253 + $0x3a0] sm:$0xff]
        %v496 = vld [vmem:[%s253 + $0x3a8] sm:$0xff]
        %v497 = vld [vmem:[%s253 + $0x3b0] sm:$0xff]
        %v498 = vld [vmem:[%s253 + $0x3b8] sm:$0xff]
        %v499 = vld [vmem:[%s253 + $0x3c0] sm:$0xff]
        %v500 = vld [vmem:[%s253 + $0x3c8] sm:$0xff]
        %v501 = vld [vmem:[%s253 + $0x3d0] sm:$0xff]
        %v502 = vld [vmem:[%s253 + $0x3d8] sm:$0xff]
        %v503 = vld [vmem:[%s253 + $0x3e0] sm:$0xff]
        %v504 = vld [vmem:[%s253 + $0x3e8] sm:$0xff]
        %v505 = vld [vmem:[%s253 + $0x3f0] sm:$0xff]
        %v506 = vld [vmem:[%s253 + $0x3f8] sm:$0xff]
        %v507 = vld [vmem:[%s253 + $0x400] sm:$0xff]
        %v508 = vld [vmem:[%s253 + $0x408] sm:$0xff]
        %v509 = vld [vmem:[%s253 + $0x410] sm:$0xff]
        %v510 = vld [vmem:[%s253 + $0x418] sm:$0xff]
        %v511 = vld [vmem:[%s253 + $0x420] sm:$0xff]
        %v512 = vld [vmem:[%s253 + $0x428] sm:$0xff]
        %v513 = vld [vmem:[%s253 + $0x430] sm:$0xff]
        %v514 = vld [vmem:[%s253 + $0x438] sm:$0xff]
        %v515 = vld [vmem:[%s253 + $0x440] sm:$0xff]
        %v516 = vld [vmem:[%s253 + $0x448] sm:$0xff]
        %v517 = vld [vmem:[%s253 + $0x450] sm:$0xff]
        %v518 = vld [vmem:[%s253 + $0x458] sm:$0xff]
        %v519 = vld [vmem:[%s253 + $0x460] sm:$0xff]
        %v520 = vld [vmem:[%s253 + $0x468] sm:$0xff]
        %v521 = vld [vmem:[%s253 + $0x470] sm:$0xff]
        %v522 = vld [vmem:[%s253 + $0x478] sm:$0xff]
        %v523 = vld [vmem:[%s253 + $0x480] sm:$0xff]
        %v524 = vld [vmem:[%s253 + $0x488] sm:$0xff]
        %v525 = vld [vmem:[%s253 + $0x490] sm:$0xff]
        %v526 = vld [vmem:[%s253 + $0x498] sm:$0xff]
        %v527 = vld [vmem:[%s253 + $0x4a0] sm:$0xff]
        %v528 = vld [vmem:[%s253 + $0x4a8] sm:$0xff]
        %v529 = vld [vmem:[%s253 + $0x4b0] sm:$0xff]
        %v530 = vld [vmem:[%s253 + $0x4b8] sm:$0xff]
        %v531 = vld [vmem:[%s253 + $0x4c0] sm:$0xff]
        %v532 = vld [vmem:[%s253 + $0x4c8] sm:$0xff]
        %v533 = vld [vmem:[%s253 + $0x4d0] sm:$0xff]
        %v534 = vld [vmem:[%s253 + $0x4d8] sm:$0xff]
        %v535 = vld [vmem:[%s253 + $0x4e0] sm:$0xff]
        %v536 = vld [vmem:[%s253 + $0x4e8] sm:$0xff]
        %v537 = vld [vmem:[%s253 + $0x4f0] sm:$0xff]
        %v538 = vld [vmem:[%s253 + $0x4f8] sm:$0xff]
        %v539 = vld [vmem:[%s253 + $0x500] sm:$0xff]
        %v540 = vld [vmem:[%s253 + $0x508] sm:$0xff]
        %v541 = vld [vmem:[%s253 + $0x510] sm:$0xff]
        %v542 = vld [vmem:[%s253 + $0x518] sm:$0xff]
        %v543 = vld [vmem:[%s253 + $0x520] sm:$0xff]
        %v544 = vld [vmem:[%s253 + $0x528] sm:$0xff]
        %v545 = vld [vmem:[%s253 + $0x530] sm:$0xff]
        %v546 = vld [vmem:[%s253 + $0x538] sm:$0xff]
        %v547 = vld [vmem:[%s253 + $0x540] sm:$0xff]
        %v548 = vld [vmem:[%s253 + $0x548] sm:$0xff]
        %v549 = vld [vmem:[%s253 + $0x550] sm:$0xff]
        %v550 = vld [vmem:[%s253 + $0x558] sm:$0xff]
        %v551 = vld [vmem:[%s253 + $0x560] sm:$0xff]
        %v552 = vld [vmem:[%s253 + $0x568] sm:$0xff]
        %v553 = vld [vmem:[%s253 + $0x570] sm:$0xff]
        %v554 = vld [vmem:[%s253 + $0x578] sm:$0xff]
        %v555 = vld [vmem:[%s253 + $0x580] sm:$0xff]
        %v556 = vld [vmem:[%s253 + $0x588] sm:$0xff]
        %v557 = vld [vmem:[%s253 + $0x590] sm:$0xff]
        %v558 = vld [vmem:[%s253 + $0x598] sm:$0xff]
        %v559 = vld [vmem:[%s253 + $0x5a0] sm:$0xff]
        %v560 = vld [vmem:[%s253 + $0x5a8] sm:$0xff]
        %v561 = vld [vmem:[%s253 + $0x5b0] sm:$0xff]
        %v562 = vld [vmem:[%s253 + $0x5b8] sm:$0xff]
        %v563 = vld [vmem:[%s253 + $0x5c0] sm:$0xff]
        %v564 = vld [vmem:[%s253 + $0x5c8] sm:$0xff]
        %v565 = vld [vmem:[%s253 + $0x5d0] sm:$0xff]
        %v566 = vld [vmem:[%s253 + $0x5d8] sm:$0xff]
        %v567 = vld [vmem:[%s253 + $0x5e0] sm:$0xff]
        %v568 = vld [vmem:[%s253 + $0x5e8] sm:$0xff]
        %v569 = vld [vmem:[%s253 + $0x5f0] sm:$0xff]
        %v570 = vld [vmem:[%s253 + $0x5f8] sm:$0xff]
        %v571 = vld [vmem:[%s271] sm:$0xf]
        %v573 = vlaneseq
        %v574 = vshrl.u32 %v573, 7
        %v575 = vsub.s32 0, %v574
        %v576 = vrot.slane %v571, %v575
        %v577 = vlaneseq
        %v578 = vshrl.u32 %v577, 7
        %v579 = vsub.s32 1, %v578
        %v580 = vrot.slane %v571, %v579
        %v581 = vlaneseq
        %v582 = vshrl.u32 %v581, 7
        %v583 = vsub.s32 2, %v582
        %v584 = vrot.slane %v571, %v583
        %v585 = vlaneseq
        %v586 = vshrl.u32 %v585, 7
        %v587 = vsub.s32 3, %v586
        %v588 = vrot.slane %v571, %v587
        %v785 = vunpack.c.l.b16 %v379
        %v786 = vunpack.c.h.b16 %v379
        %v787 = vunpack.c.l.b16 %v380
        %v788 = vunpack.c.h.b16 %v380
        %v789 = vunpack.c.l.b16 %v381
        %v790 = vunpack.c.h.b16 %v381
        %v791 = vunpack.c.l.b16 %v382
        %v792 = vunpack.c.h.b16 %v382
        %v793 = vunpack.c.l.b16 %v383
        %v794 = vunpack.c.h.b16 %v383
        %v795 = vunpack.c.l.b16 %v384
        %v796 = vunpack.c.h.b16 %v384
        %v797 = vunpack.c.l.b16 %v385
        %v798 = vunpack.c.h.b16 %v385
        %v799 = vunpack.c.l.b16 %v386
        %v800 = vunpack.c.h.b16 %v386
        %v801 = vunpack.c.l.b16 %v387
        %v802 = vunpack.c.h.b16 %v387
        %v803 = vunpack.c.l.b16 %v388
        %v804 = vunpack.c.h.b16 %v388
        %v805 = vunpack.c.l.b16 %v389
        %v806 = vunpack.c.h.b16 %v389
        %v807 = vunpack.c.l.b16 %v390
        %v808 = vunpack.c.h.b16 %v390
        %v809 = vunpack.c.l.b16 %v391
        %v810 = vunpack.c.h.b16 %v391
        %v811 = vunpack.c.l.b16 %v392
        %v812 = vunpack.c.h.b16 %v392
        %v813 = vunpack.c.l.b16 %v393
        %v814 = vunpack.c.h.b16 %v393
        %v815 = vunpack.c.l.b16 %v394
        %v816 = vunpack.c.h.b16 %v394
        %v817 = vunpack.c.l.b16 %v395
        %v818 = vunpack.c.h.b16 %v395
        %v819 = vunpack.c.l.b16 %v396
        %v820 = vunpack.c.h.b16 %v396
        %v821 = vunpack.c.l.b16 %v397
        %v822 = vunpack.c.h.b16 %v397
        %v823 = vunpack.c.l.b16 %v398
        %v824 = vunpack.c.h.b16 %v398
        %v825 = vunpack.c.l.b16 %v399
        %v826 = vunpack.c.h.b16 %v399
        %v827 = vunpack.c.l.b16 %v400
        %v828 = vunpack.c.h.b16 %v400
        %v829 = vunpack.c.l.b16 %v401
        %v830 = vunpack.c.h.b16 %v401
        %v831 = vunpack.c.l.b16 %v402
        %v832 = vunpack.c.h.b16 %v402
        %v833 = vunpack.c.l.b16 %v403
        %v834 = vunpack.c.h.b16 %v403
        %v835 = vunpack.c.l.b16 %v404
        %v836 = vunpack.c.h.b16 %v404
        %v837 = vunpack.c.l.b16 %v405
        %v838 = vunpack.c.h.b16 %v405
        %v839 = vunpack.c.l.b16 %v406
        %v840 = vunpack.c.h.b16 %v406
        %v841 = vunpack.c.l.b16 %v407
        %v842 = vunpack.c.h.b16 %v407
        %v843 = vunpack.c.l.b16 %v408
        %v844 = vunpack.c.h.b16 %v408
        %v845 = vunpack.c.l.b16 %v409
        %v846 = vunpack.c.h.b16 %v409
        %v847 = vunpack.c.l.b16 %v410
        %v848 = vunpack.c.h.b16 %v410
        %v849 = vunpack.c.l.b16 %v411
        %v850 = vunpack.c.h.b16 %v411
        %v851 = vunpack.c.l.b16 %v412
        %v852 = vunpack.c.h.b16 %v412
        %v853 = vunpack.c.l.b16 %v413
        %v854 = vunpack.c.h.b16 %v413
        %v855 = vunpack.c.l.b16 %v414
        %v856 = vunpack.c.h.b16 %v414
        %v857 = vunpack.c.l.b16 %v415
        %v858 = vunpack.c.h.b16 %v415
        %v859 = vunpack.c.l.b16 %v416
        %v860 = vunpack.c.h.b16 %v416
        %v861 = vunpack.c.l.b16 %v417
        %v862 = vunpack.c.h.b16 %v417
        %v863 = vunpack.c.l.b16 %v418
        %v864 = vunpack.c.h.b16 %v418
        %v865 = vunpack.c.l.b16 %v419
        %v866 = vunpack.c.h.b16 %v419
        %v867 = vunpack.c.l.b16 %v420
        %v868 = vunpack.c.h.b16 %v420
        %v869 = vunpack.c.l.b16 %v421
        %v870 = vunpack.c.h.b16 %v421
        %v871 = vunpack.c.l.b16 %v422
        %v872 = vunpack.c.h.b16 %v422
        %v873 = vunpack.c.l.b16 %v423
        %v874 = vunpack.c.h.b16 %v423
        %v875 = vunpack.c.l.b16 %v424
        %v876 = vunpack.c.h.b16 %v424
        %v877 = vunpack.c.l.b16 %v425
        %v878 = vunpack.c.h.b16 %v425
        %v879 = vunpack.c.l.b16 %v426
        %v880 = vunpack.c.h.b16 %v426
        %v881 = vunpack.c.l.b16 %v427
        %v882 = vunpack.c.h.b16 %v427
        %v883 = vunpack.c.l.b16 %v428
        %v884 = vunpack.c.h.b16 %v428
        %v885 = vunpack.c.l.b16 %v429
        %v886 = vunpack.c.h.b16 %v429
        %v887 = vunpack.c.l.b16 %v430
        %v888 = vunpack.c.h.b16 %v430
        %v889 = vunpack.c.l.b16 %v431
        %v890 = vunpack.c.h.b16 %v431
        %v891 = vunpack.c.l.b16 %v432
        %v892 = vunpack.c.h.b16 %v432
        %v893 = vunpack.c.l.b16 %v433
        %v894 = vunpack.c.h.b16 %v433
        %v895 = vunpack.c.l.b16 %v434
        %v896 = vunpack.c.h.b16 %v434
        %v897 = vunpack.c.l.b16 %v435
        %v898 = vunpack.c.h.b16 %v435
        %v899 = vunpack.c.l.b16 %v436
        %v900 = vunpack.c.h.b16 %v436
        %v901 = vunpack.c.l.b16 %v437
        %v902 = vunpack.c.h.b16 %v437
        %v903 = vunpack.c.l.b16 %v438
        %v904 = vunpack.c.h.b16 %v438
        %v905 = vunpack.c.l.b16 %v439
        %v906 = vunpack.c.h.b16 %v439
        %v907 = vunpack.c.l.b16 %v440
        %v908 = vunpack.c.h.b16 %v440
        %v909 = vunpack.c.l.b16 %v441
        %v910 = vunpack.c.h.b16 %v441
        %v911 = vunpack.c.l.b16 %v442
        %v912 = vunpack.c.h.b16 %v442
        %v913 = vunpack.c.l.b16 %v443
        %v914 = vunpack.c.h.b16 %v443
        %v915 = vunpack.c.l.b16 %v444
        %v916 = vunpack.c.h.b16 %v444
        %v917 = vunpack.c.l.b16 %v445
        %v918 = vunpack.c.h.b16 %v445
        %v919 = vunpack.c.l.b16 %v446
        %v920 = vunpack.c.h.b16 %v446
        %v921 = vunpack.c.l.b16 %v447
        %v922 = vunpack.c.h.b16 %v447
        %v923 = vunpack.c.l.b16 %v448
        %v924 = vunpack.c.h.b16 %v448
        %v925 = vunpack.c.l.b16 %v449
        %v926 = vunpack.c.h.b16 %v449
        %v927 = vunpack.c.l.b16 %v450
        %v928 = vunpack.c.h.b16 %v450
        %v929 = vunpack.c.l.b16 %v451
        %v930 = vunpack.c.h.b16 %v451
        %v931 = vunpack.c.l.b16 %v452
        %v932 = vunpack.c.h.b16 %v452
        %v933 = vunpack.c.l.b16 %v453
        %v934 = vunpack.c.h.b16 %v453
        %v935 = vunpack.c.l.b16 %v454
        %v936 = vunpack.c.h.b16 %v454
        %v937 = vunpack.c.l.b16 %v455
        %v938 = vunpack.c.h.b16 %v455
        %v939 = vunpack.c.l.b16 %v456
        %v940 = vunpack.c.h.b16 %v456
        %v941 = vunpack.c.l.b16 %v457
        %v942 = vunpack.c.h.b16 %v457
        %v943 = vunpack.c.l.b16 %v458
        %v944 = vunpack.c.h.b16 %v458
        %v945 = vunpack.c.l.b16 %v459
        %v946 = vunpack.c.h.b16 %v459
        %v947 = vunpack.c.l.b16 %v460
        %v948 = vunpack.c.h.b16 %v460
        %v949 = vunpack.c.l.b16 %v461
        %v950 = vunpack.c.h.b16 %v461
        %v951 = vunpack.c.l.b16 %v462
        %v952 = vunpack.c.h.b16 %v462
        %v953 = vunpack.c.l.b16 %v463
        %v954 = vunpack.c.h.b16 %v463
        %v955 = vunpack.c.l.b16 %v464
        %v956 = vunpack.c.h.b16 %v464
        %v957 = vunpack.c.l.b16 %v465
        %v958 = vunpack.c.h.b16 %v465
        %v959 = vunpack.c.l.b16 %v466
        %v960 = vunpack.c.h.b16 %v466
        %v961 = vunpack.c.l.b16 %v467
        %v962 = vunpack.c.h.b16 %v467
        %v963 = vunpack.c.l.b16 %v468
        %v964 = vunpack.c.h.b16 %v468
        %v965 = vunpack.c.l.b16 %v469
        %v966 = vunpack.c.h.b16 %v469
        %v967 = vunpack.c.l.b16 %v470
        %v968 = vunpack.c.h.b16 %v470
        %v969 = vunpack.c.l.b16 %v471
        %v970 = vunpack.c.h.b16 %v471
        %v971 = vunpack.c.l.b16 %v472
        %v972 = vunpack.c.h.b16 %v472
        %v973 = vunpack.c.l.b16 %v473
        %v974 = vunpack.c.h.b16 %v473
        %v975 = vunpack.c.l.b16 %v474
        %v976 = vunpack.c.h.b16 %v474
        %v977 = vunpack.c.l.b16 %v475
        %v978 = vunpack.c.h.b16 %v475
        %v979 = vunpack.c.l.b16 %v476
        %v980 = vunpack.c.h.b16 %v476
        %v981 = vunpack.c.l.b16 %v477
        %v982 = vunpack.c.h.b16 %v477
        %v983 = vunpack.c.l.b16 %v478
        %v984 = vunpack.c.h.b16 %v478
        %v985 = vunpack.c.l.b16 %v479
        %v986 = vunpack.c.h.b16 %v479
        %v987 = vunpack.c.l.b16 %v480
        %v988 = vunpack.c.h.b16 %v480
        %v989 = vunpack.c.l.b16 %v481
        %v990 = vunpack.c.h.b16 %v481
        %v991 = vunpack.c.l.b16 %v482
        %v992 = vunpack.c.h.b16 %v482
        %v993 = vunpack.c.l.b16 %v483
        %v994 = vunpack.c.h.b16 %v483
        %v995 = vunpack.c.l.b16 %v484
        %v996 = vunpack.c.h.b16 %v484
        %v997 = vunpack.c.l.b16 %v485
        %v998 = vunpack.c.h.b16 %v485
        %v999 = vunpack.c.l.b16 %v486
        %v1000 = vunpack.c.h.b16 %v486
        %v1001 = vunpack.c.l.b16 %v487
        %v1002 = vunpack.c.h.b16 %v487
        %v1003 = vunpack.c.l.b16 %v488
        %v1004 = vunpack.c.h.b16 %v488
        %v1005 = vunpack.c.l.b16 %v489
        %v1006 = vunpack.c.h.b16 %v489
        %v1007 = vunpack.c.l.b16 %v490
        %v1008 = vunpack.c.h.b16 %v490
        %v1009 = vunpack.c.l.b16 %v491
        %v1010 = vunpack.c.h.b16 %v491
        %v1011 = vunpack.c.l.b16 %v492
        %v1012 = vunpack.c.h.b16 %v492
        %v1013 = vunpack.c.l.b16 %v493
        %v1014 = vunpack.c.h.b16 %v493
        %v1015 = vunpack.c.l.b16 %v494
        %v1016 = vunpack.c.h.b16 %v494
        %v1017 = vunpack.c.l.b16 %v495
        %v1018 = vunpack.c.h.b16 %v495
        %v1019 = vunpack.c.l.b16 %v496
        %v1020 = vunpack.c.h.b16 %v496
        %v1021 = vunpack.c.l.b16 %v497
        %v1022 = vunpack.c.h.b16 %v497
        %v1023 = vunpack.c.l.b16 %v498
        %v1024 = vunpack.c.h.b16 %v498
        %v1025 = vunpack.c.l.b16 %v499
        %v1026 = vunpack.c.h.b16 %v499
        %v1027 = vunpack.c.l.b16 %v500
        %v1028 = vunpack.c.h.b16 %v500
        %v1029 = vunpack.c.l.b16 %v501
        %v1030 = vunpack.c.h.b16 %v501
        %v1031 = vunpack.c.l.b16 %v502
        %v1032 = vunpack.c.h.b16 %v502
        %v1033 = vunpack.c.l.b16 %v503
        %v1034 = vunpack.c.h.b16 %v503
        %v1035 = vunpack.c.l.b16 %v504
        %v1036 = vunpack.c.h.b16 %v504
        %v1037 = vunpack.c.l.b16 %v505
        %v1038 = vunpack.c.h.b16 %v505
        %v1039 = vunpack.c.l.b16 %v506
        %v1040 = vunpack.c.h.b16 %v506
        %v1041 = vunpack.c.l.b16 %v507
        %v1042 = vunpack.c.h.b16 %v507
        %v1043 = vunpack.c.l.b16 %v508
        %v1044 = vunpack.c.h.b16 %v508
        %v1045 = vunpack.c.l.b16 %v509
        %v1046 = vunpack.c.h.b16 %v509
        %v1047 = vunpack.c.l.b16 %v510
        %v1048 = vunpack.c.h.b16 %v510
        %v1049 = vunpack.c.l.b16 %v511
        %v1050 = vunpack.c.h.b16 %v511
        %v1051 = vunpack.c.l.b16 %v512
        %v1052 = vunpack.c.h.b16 %v512
        %v1053 = vunpack.c.l.b16 %v513
        %v1054 = vunpack.c.h.b16 %v513
        %v1055 = vunpack.c.l.b16 %v514
        %v1056 = vunpack.c.h.b16 %v514
        %v1057 = vunpack.c.l.b16 %v515
        %v1058 = vunpack.c.h.b16 %v515
        %v1059 = vunpack.c.l.b16 %v516
        %v1060 = vunpack.c.h.b16 %v516
        %v1061 = vunpack.c.l.b16 %v517
        %v1062 = vunpack.c.h.b16 %v517
        %v1063 = vunpack.c.l.b16 %v518
        %v1064 = vunpack.c.h.b16 %v518
        %v1065 = vunpack.c.l.b16 %v519
        %v1066 = vunpack.c.h.b16 %v519
        %v1067 = vunpack.c.l.b16 %v520
        %v1068 = vunpack.c.h.b16 %v520
        %v1069 = vunpack.c.l.b16 %v521
        %v1070 = vunpack.c.h.b16 %v521
        %v1071 = vunpack.c.l.b16 %v522
        %v1072 = vunpack.c.h.b16 %v522
        %v1073 = vunpack.c.l.b16 %v523
        %v1074 = vunpack.c.h.b16 %v523
        %v1075 = vunpack.c.l.b16 %v524
        %v1076 = vunpack.c.h.b16 %v524
        %v1077 = vunpack.c.l.b16 %v525
        %v1078 = vunpack.c.h.b16 %v525
        %v1079 = vunpack.c.l.b16 %v526
        %v1080 = vunpack.c.h.b16 %v526
        %v1081 = vunpack.c.l.b16 %v527
        %v1082 = vunpack.c.h.b16 %v527
        %v1083 = vunpack.c.l.b16 %v528
        %v1084 = vunpack.c.h.b16 %v528
        %v1085 = vunpack.c.l.b16 %v529
        %v1086 = vunpack.c.h.b16 %v529
        %v1087 = vunpack.c.l.b16 %v530
        %v1088 = vunpack.c.h.b16 %v530
        %v1089 = vunpack.c.l.b16 %v531
        %v1090 = vunpack.c.h.b16 %v531
        %v1091 = vunpack.c.l.b16 %v532
        %v1092 = vunpack.c.h.b16 %v532
        %v1093 = vunpack.c.l.b16 %v533
        %v1094 = vunpack.c.h.b16 %v533
        %v1095 = vunpack.c.l.b16 %v534
        %v1096 = vunpack.c.h.b16 %v534
        %v1097 = vunpack.c.l.b16 %v535
        %v1098 = vunpack.c.h.b16 %v535
        %v1099 = vunpack.c.l.b16 %v536
        %v1100 = vunpack.c.h.b16 %v536
        %v1101 = vunpack.c.l.b16 %v537
        %v1102 = vunpack.c.h.b16 %v537
        %v1103 = vunpack.c.l.b16 %v538
        %v1104 = vunpack.c.h.b16 %v538
        %v1105 = vunpack.c.l.b16 %v539
        %v1106 = vunpack.c.h.b16 %v539
        %v1107 = vunpack.c.l.b16 %v540
        %v1108 = vunpack.c.h.b16 %v540
        %v1109 = vunpack.c.l.b16 %v541
        %v1110 = vunpack.c.h.b16 %v541
        %v1111 = vunpack.c.l.b16 %v542
        %v1112 = vunpack.c.h.b16 %v542
        %v1113 = vunpack.c.l.b16 %v543
        %v1114 = vunpack.c.h.b16 %v543
        %v1115 = vunpack.c.l.b16 %v544
        %v1116 = vunpack.c.h.b16 %v544
        %v1117 = vunpack.c.l.b16 %v545
        %v1118 = vunpack.c.h.b16 %v545
        %v1119 = vunpack.c.l.b16 %v546
        %v1120 = vunpack.c.h.b16 %v546
        %v1121 = vunpack.c.l.b16 %v547
        %v1122 = vunpack.c.h.b16 %v547
        %v1123 = vunpack.c.l.b16 %v548
        %v1124 = vunpack.c.h.b16 %v548
        %v1125 = vunpack.c.l.b16 %v549
        %v1126 = vunpack.c.h.b16 %v549
        %v1127 = vunpack.c.l.b16 %v550
        %v1128 = vunpack.c.h.b16 %v550
        %v1129 = vunpack.c.l.b16 %v551
        %v1130 = vunpack.c.h.b16 %v551
        %v1131 = vunpack.c.l.b16 %v552
        %v1132 = vunpack.c.h.b16 %v552
        %v1133 = vunpack.c.l.b16 %v553
        %v1134 = vunpack.c.h.b16 %v553
        %v1135 = vunpack.c.l.b16 %v554
        %v1136 = vunpack.c.h.b16 %v554
        %v1137 = vunpack.c.l.b16 %v555
        %v1138 = vunpack.c.h.b16 %v555
        %v1139 = vunpack.c.l.b16 %v556
        %v1140 = vunpack.c.h.b16 %v556
        %v1141 = vunpack.c.l.b16 %v557
        %v1142 = vunpack.c.h.b16 %v557
        %v1143 = vunpack.c.l.b16 %v558
        %v1144 = vunpack.c.h.b16 %v558
        %v1145 = vunpack.c.l.b16 %v559
        %v1146 = vunpack.c.h.b16 %v559
        %v1147 = vunpack.c.l.b16 %v560
        %v1148 = vunpack.c.h.b16 %v560
        %v1149 = vunpack.c.l.b16 %v561
        %v1150 = vunpack.c.h.b16 %v561
        %v1151 = vunpack.c.l.b16 %v562
        %v1152 = vunpack.c.h.b16 %v562
        %v1153 = vunpack.c.l.b16 %v563
        %v1154 = vunpack.c.h.b16 %v563
        %v1155 = vunpack.c.l.b16 %v564
        %v1156 = vunpack.c.h.b16 %v564
        %v1157 = vunpack.c.l.b16 %v565
        %v1158 = vunpack.c.h.b16 %v565
        %v1159 = vunpack.c.l.b16 %v566
        %v1160 = vunpack.c.h.b16 %v566
        %v1161 = vunpack.c.l.b16 %v567
        %v1162 = vunpack.c.h.b16 %v567
        %v1163 = vunpack.c.l.b16 %v568
        %v1164 = vunpack.c.h.b16 %v568
        %v1165 = vunpack.c.l.b16 %v569
        %v1166 = vunpack.c.h.b16 %v569
        %v1167 = vunpack.c.l.b16 %v570
        %v1168 = vunpack.c.h.b16 %v570
        %v1169 = vpack.c.b16 %v789, %v785
        %v1170 = vpack.c.b16 %v790, %v786
        %v1171 = vpack.c.b16 %v791, %v787
        %v1172 = vpack.c.b16 %v792, %v788
        %v1173 = vpack.c.b16 %v797, %v793
        %v1174 = vpack.c.b16 %v798, %v794
        %v1175 = vpack.c.b16 %v799, %v795
        %v1176 = vpack.c.b16 %v800, %v796
        %v1177 = vpack.c.b16 %v805, %v801
        %v1178 = vpack.c.b16 %v806, %v802
        %v1179 = vpack.c.b16 %v807, %v803
        %v1180 = vpack.c.b16 %v808, %v804
        %v1181 = vpack.c.b16 %v813, %v809
        %v1182 = vpack.c.b16 %v814, %v810
        %v1183 = vpack.c.b16 %v815, %v811
        %v1184 = vpack.c.b16 %v816, %v812
        %v1185 = vpack.c.b16 %v821, %v817
        %v1186 = vpack.c.b16 %v822, %v818
        %v1187 = vpack.c.b16 %v823, %v819
        %v1188 = vpack.c.b16 %v824, %v820
        %v1189 = vpack.c.b16 %v829, %v825
        %v1190 = vpack.c.b16 %v830, %v826
        %v1191 = vpack.c.b16 %v831, %v827
        %v1192 = vpack.c.b16 %v832, %v828
        %v1193 = vpack.c.b16 %v837, %v833
        %v1194 = vpack.c.b16 %v838, %v834
        %v1195 = vpack.c.b16 %v839, %v835
        %v1196 = vpack.c.b16 %v840, %v836
        %v1197 = vpack.c.b16 %v845, %v841
        %v1198 = vpack.c.b16 %v846, %v842
        %v1199 = vpack.c.b16 %v847, %v843
        %v1200 = vpack.c.b16 %v848, %v844
        %v1201 = vpack.c.b16 %v853, %v849
        %v1202 = vpack.c.b16 %v854, %v850
        %v1203 = vpack.c.b16 %v855, %v851
        %v1204 = vpack.c.b16 %v856, %v852
        %v1205 = vpack.c.b16 %v861, %v857
        %v1206 = vpack.c.b16 %v862, %v858
        %v1207 = vpack.c.b16 %v863, %v859
        %v1208 = vpack.c.b16 %v864, %v860
        %v1209 = vpack.c.b16 %v869, %v865
        %v1210 = vpack.c.b16 %v870, %v866
        %v1211 = vpack.c.b16 %v871, %v867
        %v1212 = vpack.c.b16 %v872, %v868
        %v1213 = vpack.c.b16 %v877, %v873
        %v1214 = vpack.c.b16 %v878, %v874
        %v1215 = vpack.c.b16 %v879, %v875
        %v1216 = vpack.c.b16 %v880, %v876
        %v1217 = vpack.c.b16 %v885, %v881
        %v1218 = vpack.c.b16 %v886, %v882
        %v1219 = vpack.c.b16 %v887, %v883
        %v1220 = vpack.c.b16 %v888, %v884
        %v1221 = vpack.c.b16 %v893, %v889
        %v1222 = vpack.c.b16 %v894, %v890
        %v1223 = vpack.c.b16 %v895, %v891
        %v1224 = vpack.c.b16 %v896, %v892
        %v1225 = vpack.c.b16 %v901, %v897
        %v1226 = vpack.c.b16 %v902, %v898
        %v1227 = vpack.c.b16 %v903, %v899
        %v1228 = vpack.c.b16 %v904, %v900
        %v1229 = vpack.c.b16 %v909, %v905
        %v1230 = vpack.c.b16 %v910, %v906
        %v1231 = vpack.c.b16 %v911, %v907
        %v1232 = vpack.c.b16 %v912, %v908
        %v1233 = vpack.c.b16 %v917, %v913
        %v1234 = vpack.c.b16 %v918, %v914
        %v1235 = vpack.c.b16 %v919, %v915
        %v1236 = vpack.c.b16 %v920, %v916
        %v1237 = vpack.c.b16 %v925, %v921
        %v1238 = vpack.c.b16 %v926, %v922
        %v1239 = vpack.c.b16 %v927, %v923
        %v1240 = vpack.c.b16 %v928, %v924
        %v1241 = vpack.c.b16 %v933, %v929
        %v1242 = vpack.c.b16 %v934, %v930
        %v1243 = vpack.c.b16 %v935, %v931
        %v1244 = vpack.c.b16 %v936, %v932
        %v1245 = vpack.c.b16 %v941, %v937
        %v1246 = vpack.c.b16 %v942, %v938
        %v1247 = vpack.c.b16 %v943, %v939
        %v1248 = vpack.c.b16 %v944, %v940
        %v1249 = vpack.c.b16 %v949, %v945
        %v1250 = vpack.c.b16 %v950, %v946
        %v1251 = vpack.c.b16 %v951, %v947
        %v1252 = vpack.c.b16 %v952, %v948
        %v1253 = vpack.c.b16 %v957, %v953
        %v1254 = vpack.c.b16 %v958, %v954
        %v1255 = vpack.c.b16 %v959, %v955
        %v1256 = vpack.c.b16 %v960, %v956
        %v1257 = vpack.c.b16 %v965, %v961
        %v1258 = vpack.c.b16 %v966, %v962
        %v1259 = vpack.c.b16 %v967, %v963
        %v1260 = vpack.c.b16 %v968, %v964
        %v1261 = vpack.c.b16 %v973, %v969
        %v1262 = vpack.c.b16 %v974, %v970
        %v1263 = vpack.c.b16 %v975, %v971
        %v1264 = vpack.c.b16 %v976, %v972
        %v1265 = vpack.c.b16 %v981, %v977
        %v1266 = vpack.c.b16 %v982, %v978
        %v1267 = vpack.c.b16 %v983, %v979
        %v1268 = vpack.c.b16 %v984, %v980
        %v1269 = vpack.c.b16 %v989, %v985
        %v1270 = vpack.c.b16 %v990, %v986
        %v1271 = vpack.c.b16 %v991, %v987
        %v1272 = vpack.c.b16 %v992, %v988
        %v1273 = vpack.c.b16 %v997, %v993
        %v1274 = vpack.c.b16 %v998, %v994
        %v1275 = vpack.c.b16 %v999, %v995
        %v1276 = vpack.c.b16 %v1000, %v996
        %v1277 = vpack.c.b16 %v1005, %v1001
        %v1278 = vpack.c.b16 %v1006, %v1002
        %v1279 = vpack.c.b16 %v1007, %v1003
        %v1280 = vpack.c.b16 %v1008, %v1004
        %v1281 = vpack.c.b16 %v1013, %v1009
        %v1282 = vpack.c.b16 %v1014, %v1010
        %v1283 = vpack.c.b16 %v1015, %v1011
        %v1284 = vpack.c.b16 %v1016, %v1012
        %v1285 = vpack.c.b16 %v1021, %v1017
        %v1286 = vpack.c.b16 %v1022, %v1018
        %v1287 = vpack.c.b16 %v1023, %v1019
        %v1288 = vpack.c.b16 %v1024, %v1020
        %v1289 = vpack.c.b16 %v1029, %v1025
        %v1290 = vpack.c.b16 %v1030, %v1026
        %v1291 = vpack.c.b16 %v1031, %v1027
        %v1292 = vpack.c.b16 %v1032, %v1028
        %v1293 = vpack.c.b16 %v1037, %v1033
        %v1294 = vpack.c.b16 %v1038, %v1034
        %v1295 = vpack.c.b16 %v1039, %v1035
        %v1296 = vpack.c.b16 %v1040, %v1036
        %v1297 = vpack.c.b16 %v1045, %v1041
        %v1298 = vpack.c.b16 %v1046, %v1042
        %v1299 = vpack.c.b16 %v1047, %v1043
        %v1300 = vpack.c.b16 %v1048, %v1044
        %v1301 = vpack.c.b16 %v1053, %v1049
        %v1302 = vpack.c.b16 %v1054, %v1050
        %v1303 = vpack.c.b16 %v1055, %v1051
        %v1304 = vpack.c.b16 %v1056, %v1052
        %v1305 = vpack.c.b16 %v1061, %v1057
        %v1306 = vpack.c.b16 %v1062, %v1058
        %v1307 = vpack.c.b16 %v1063, %v1059
        %v1308 = vpack.c.b16 %v1064, %v1060
        %v1309 = vpack.c.b16 %v1069, %v1065
        %v1310 = vpack.c.b16 %v1070, %v1066
        %v1311 = vpack.c.b16 %v1071, %v1067
        %v1312 = vpack.c.b16 %v1072, %v1068
        %v1313 = vpack.c.b16 %v1077, %v1073
        %v1314 = vpack.c.b16 %v1078, %v1074
        %v1315 = vpack.c.b16 %v1079, %v1075
        %v1316 = vpack.c.b16 %v1080, %v1076
        %v1317 = vpack.c.b16 %v1085, %v1081
        %v1318 = vpack.c.b16 %v1086, %v1082
        %v1319 = vpack.c.b16 %v1087, %v1083
        %v1320 = vpack.c.b16 %v1088, %v1084
        %v1321 = vpack.c.b16 %v1093, %v1089
        %v1322 = vpack.c.b16 %v1094, %v1090
        %v1323 = vpack.c.b16 %v1095, %v1091
        %v1324 = vpack.c.b16 %v1096, %v1092
        %v1325 = vpack.c.b16 %v1101, %v1097
        %v1326 = vpack.c.b16 %v1102, %v1098
        %v1327 = vpack.c.b16 %v1103, %v1099
        %v1328 = vpack.c.b16 %v1104, %v1100
        %v1329 = vpack.c.b16 %v1109, %v1105
        %v1330 = vpack.c.b16 %v1110, %v1106
        %v1331 = vpack.c.b16 %v1111, %v1107
        %v1332 = vpack.c.b16 %v1112, %v1108
        %v1333 = vpack.c.b16 %v1117, %v1113
        %v1334 = vpack.c.b16 %v1118, %v1114
        %v1335 = vpack.c.b16 %v1119, %v1115
        %v1336 = vpack.c.b16 %v1120, %v1116
        %v1337 = vpack.c.b16 %v1125, %v1121
        %v1338 = vpack.c.b16 %v1126, %v1122
        %v1339 = vpack.c.b16 %v1127, %v1123
        %v1340 = vpack.c.b16 %v1128, %v1124
        %v1341 = vpack.c.b16 %v1133, %v1129
        %v1342 = vpack.c.b16 %v1134, %v1130
        %v1343 = vpack.c.b16 %v1135, %v1131
        %v1344 = vpack.c.b16 %v1136, %v1132
        %v1345 = vpack.c.b16 %v1141, %v1137
        %v1346 = vpack.c.b16 %v1142, %v1138
        %v1347 = vpack.c.b16 %v1143, %v1139
        %v1348 = vpack.c.b16 %v1144, %v1140
        %v1349 = vpack.c.b16 %v1149, %v1145
        %v1350 = vpack.c.b16 %v1150, %v1146
        %v1351 = vpack.c.b16 %v1151, %v1147
        %v1352 = vpack.c.b16 %v1152, %v1148
        %v1353 = vpack.c.b16 %v1157, %v1153
        %v1354 = vpack.c.b16 %v1158, %v1154
        %v1355 = vpack.c.b16 %v1159, %v1155
        %v1356 = vpack.c.b16 %v1160, %v1156
        %v1357 = vpack.c.b16 %v1165, %v1161
        %v1358 = vpack.c.b16 %v1166, %v1162
        %v1359 = vpack.c.b16 %v1167, %v1163
        %v1360 = vpack.c.b16 %v1168, %v1164
        %1553 = vmatprep.subr.bf16.mxu0 %v1198
        %1554 = vmatpush1.bf16.msra.mxu0 %v1197
        %1555 = vmatprep.subr.bf16.mxu0 %v1194
        %1556 = vmatpush1.bf16.msra.mxu0 %v1193
        %1557 = vmatprep.subr.bf16.mxu0 %v1190
        %1558 = vmatpush1.bf16.msra.mxu0 %v1189
        %1559 = vmatprep.subr.bf16.mxu0 %v1186
        %1560 = vmatpush1.bf16.msra.mxu0 %v1185
        %1561 = vmatprep.subr.bf16.mxu0 %v1182
        %1562 = vmatpush1.bf16.msra.mxu0 %v1181
        %1563 = vmatprep.subr.bf16.mxu0 %v1178
        %1564 = vmatpush1.bf16.msra.mxu0 %v1177
        %1565 = vmatprep.subr.bf16.mxu0 %v1174
        %1566 = vmatpush1.bf16.msra.mxu0 %v1173
        %1567 = vmatprep.subr.bf16.mxu0 %v1170
        %1568 = vmatpush1.bf16.msra.mxu0 %v1169
        %1569 = vmatprep.subr.bf16.mxu0 %v1230
        %1570 = vmatpush2.bf16.msra.mxu0 %v1229
        %1571 = vmatprep.subr.bf16.mxu0 %v1226
        %1572 = vmatpush2.bf16.msra.mxu0 %v1225
        %1573 = vmatprep.subr.bf16.mxu0 %v1222
        %1574 = vmatpush2.bf16.msra.mxu0 %v1221
        %1575 = vmatprep.subr.bf16.mxu0 %v1218
        %1576 = vmatpush2.bf16.msra.mxu0 %v1217
        %1577 = vmatprep.subr.bf16.mxu0 %v1214
        %1578 = vmatpush2.bf16.msra.mxu0 %v1213
        %1579 = vmatprep.subr.bf16.mxu0 %v1210
        %1580 = vmatpush2.bf16.msra.mxu0 %v1209
        %1581 = vmatprep.subr.bf16.mxu0 %v1206
        %1582 = vmatpush2.bf16.msra.mxu0 %v1205
        %1583 = vmatprep.subr.bf16.mxu0 %v1202
        %1584 = vmatpush2.bf16.msra.mxu0 %v1201
        %1585 = vmatprep.mubr.bf16.mxu0 %v356
        %1586 = vmatmul.mubr.bf16.gmra.mxu0 %v355
        %v1587 = vpop.f32.mrf.mxu0
        %v1588 = vadd.f32 %v576, %v1587
        %v1589 = vpop.f32.mrf.mxu0
        %v1590 = vadd.f32 %v580, %v1589
        %v1591 = vpop.f32.mrf.mxu0
        %v1592 = vadd.f32 %v576, %v1591
        %v1593 = vpop.f32.mrf.mxu0
        %v1594 = vadd.f32 %v580, %v1593
        %1595 = vmatprep.mubr.bf16.mxu0 %v362
        %1596 = vmatmul.mubr.bf16.gmra.mxu0 %v361
        %v1597 = vpop.f32.mrf.mxu0
        %v1598 = vadd.f32 %v576, %v1597
        %v1599 = vpop.f32.mrf.mxu0
        %v1600 = vadd.f32 %v580, %v1599
        %v1601 = vpop.f32.mrf.mxu0
        %v1602 = vadd.f32 %v576, %v1601
        %v1603 = vpop.f32.mrf.mxu0
        %v1604 = vadd.f32 %v580, %v1603
        %1605 = vmatprep.mubr.bf16.mxu0 %v368
        %1606 = vmatmul.mubr.bf16.gmra.mxu0 %v367
        %v1607 = vpop.f32.mrf.mxu0
        %v1608 = vadd.f32 %v576, %v1607
        %v1609 = vpop.f32.mrf.mxu0
        %v1610 = vadd.f32 %v580, %v1609
        %v1611 = vpop.f32.mrf.mxu0
        %v1612 = vadd.f32 %v576, %v1611
        %v1613 = vpop.f32.mrf.mxu0
        %v1614 = vadd.f32 %v580, %v1613
        %1615 = vmatprep.mubr.bf16.mxu0 %v374
        %1616 = vmatmul.mubr.bf16.gmra.mxu0 %v373
        %v1617 = vpop.f32.mrf.mxu0
        %v1618 = vadd.f32 %v576, %v1617
        %v1619 = vpop.f32.mrf.mxu0
        %v1620 = vadd.f32 %v580, %v1619
        %v1621 = vpop.f32.mrf.mxu0
        %v1622 = vadd.f32 %v576, %v1621
        %v1623 = vpop.f32.mrf.mxu0
        %v1624 = vadd.f32 %v580, %v1623
        %1625 = vdwg.mxu0
        %1626 = vmatprep.subr.bf16.mxu0 %v1262
        %1627 = vmatpush1.bf16.msra.mxu0 %v1261
        %1628 = vmatprep.subr.bf16.mxu0 %v1258
        %1629 = vmatpush1.bf16.msra.mxu0 %v1257
        %1630 = vmatprep.subr.bf16.mxu0 %v1254
        %1631 = vmatpush1.bf16.msra.mxu0 %v1253
        %1632 = vmatprep.subr.bf16.mxu0 %v1250
        %1633 = vmatpush1.bf16.msra.mxu0 %v1249
        %1634 = vmatprep.subr.bf16.mxu0 %v1246
        %1635 = vmatpush1.bf16.msra.mxu0 %v1245
        %1636 = vmatprep.subr.bf16.mxu0 %v1242
        %1637 = vmatpush1.bf16.msra.mxu0 %v1241
        %1638 = vmatprep.subr.bf16.mxu0 %v1238
        %1639 = vmatpush1.bf16.msra.mxu0 %v1237
        %1640 = vmatprep.subr.bf16.mxu0 %v1234
        %1641 = vmatpush1.bf16.msra.mxu0 %v1233
        %1642 = vmatprep.subr.bf16.mxu0 %v1294
        %1643 = vmatpush2.bf16.msra.mxu0 %v1293
        %1644 = vmatprep.subr.bf16.mxu0 %v1290
        %1645 = vmatpush2.bf16.msra.mxu0 %v1289
        %1646 = vmatprep.subr.bf16.mxu0 %v1286
        %1647 = vmatpush2.bf16.msra.mxu0 %v1285
        %1648 = vmatprep.subr.bf16.mxu0 %v1282
        %1649 = vmatpush2.bf16.msra.mxu0 %v1281
        %1650 = vmatprep.subr.bf16.mxu0 %v1278
        %1651 = vmatpush2.bf16.msra.mxu0 %v1277
        %1652 = vmatprep.subr.bf16.mxu0 %v1274
        %1653 = vmatpush2.bf16.msra.mxu0 %v1273
        %1654 = vmatprep.subr.bf16.mxu0 %v1270
        %1655 = vmatpush2.bf16.msra.mxu0 %v1269
        %1656 = vmatprep.subr.bf16.mxu0 %v1266
        %1657 = vmatpush2.bf16.msra.mxu0 %v1265
        %1658 = vmatprep.mubr.bf16.mxu0 %v358
        %1659 = vmatmul.mubr.bf16.gmra.mxu0 %v357
        %v1660 = vpop.f32.mrf.mxu0
        %v1661 = vadd.f32 %v1588, %v1660
        %v1662 = vpop.f32.mrf.mxu0
        %v1663 = vadd.f32 %v1590, %v1662
        %v1664 = vpop.f32.mrf.mxu0
        %v1665 = vadd.f32 %v1592, %v1664
        %v1666 = vpop.f32.mrf.mxu0
        %v1667 = vadd.f32 %v1594, %v1666
        %1668 = vmatprep.mubr.bf16.mxu0 %v364
        %1669 = vmatmul.mubr.bf16.gmra.mxu0 %v363
        %v1670 = vpop.f32.mrf.mxu0
        %v1671 = vadd.f32 %v1598, %v1670
        %v1672 = vpop.f32.mrf.mxu0
        %v1673 = vadd.f32 %v1600, %v1672
        %v1674 = vpop.f32.mrf.mxu0
        %v1675 = vadd.f32 %v1602, %v1674
        %v1676 = vpop.f32.mrf.mxu0
        %v1677 = vadd.f32 %v1604, %v1676
        %1678 = vmatprep.mubr.bf16.mxu0 %v370
        %1679 = vmatmul.mubr.bf16.gmra.mxu0 %v369
        %v1680 = vpop.f32.mrf.mxu0
        %v1681 = vadd.f32 %v1608, %v1680
        %v1682 = vpop.f32.mrf.mxu0
        %v1683 = vadd.f32 %v1610, %v1682
        %v1684 = vpop.f32.mrf.mxu0
        %v1685 = vadd.f32 %v1612, %v1684
        %v1686 = vpop.f32.mrf.mxu0
        %v1687 = vadd.f32 %v1614, %v1686
        %1688 = vmatprep.mubr.bf16.mxu0 %v376
        %1689 = vmatmul.mubr.bf16.gmra.mxu0 %v375
        %v1690 = vpop.f32.mrf.mxu0
        %v1691 = vadd.f32 %v1618, %v1690
        %v1692 = vpop.f32.mrf.mxu0
        %v1693 = vadd.f32 %v1620, %v1692
        %v1694 = vpop.f32.mrf.mxu0
        %v1695 = vadd.f32 %v1622, %v1694
        %v1696 = vpop.f32.mrf.mxu0
        %v1697 = vadd.f32 %v1624, %v1696
        %1698 = vdwg.mxu0
        %1699 = vmatprep.subr.bf16.mxu0 %v1326
        %1700 = vmatpush1.bf16.msra.mxu0 %v1325
        %1701 = vmatprep.subr.bf16.mxu0 %v1322
        %1702 = vmatpush1.bf16.msra.mxu0 %v1321
        %1703 = vmatprep.subr.bf16.mxu0 %v1318
        %1704 = vmatpush1.bf16.msra.mxu0 %v1317
        %1705 = vmatprep.subr.bf16.mxu0 %v1314
        %1706 = vmatpush1.bf16.msra.mxu0 %v1313
        %1707 = vmatprep.subr.bf16.mxu0 %v1310
        %1708 = vmatpush1.bf16.msra.mxu0 %v1309
        %1709 = vmatprep.subr.bf16.mxu0 %v1306
        %1710 = vmatpush1.bf16.msra.mxu0 %v1305
        %1711 = vmatprep.subr.bf16.mxu0 %v1302
        %1712 = vmatpush1.bf16.msra.mxu0 %v1301
        %1713 = vmatprep.subr.bf16.mxu0 %v1298
        %1714 = vmatpush1.bf16.msra.mxu0 %v1297
        %1715 = vmatprep.subr.bf16.mxu0 %v1358
        %1716 = vmatpush2.bf16.msra.mxu0 %v1357
        %1717 = vmatprep.subr.bf16.mxu0 %v1354
        %1718 = vmatpush2.bf16.msra.mxu0 %v1353
        %1719 = vmatprep.subr.bf16.mxu0 %v1350
        %1720 = vmatpush2.bf16.msra.mxu0 %v1349
        %1721 = vmatprep.subr.bf16.mxu0 %v1346
        %1722 = vmatpush2.bf16.msra.mxu0 %v1345
        %1723 = vmatprep.subr.bf16.mxu0 %v1342
        %1724 = vmatpush2.bf16.msra.mxu0 %v1341
        %1725 = vmatprep.subr.bf16.mxu0 %v1338
        %1726 = vmatpush2.bf16.msra.mxu0 %v1337
        %1727 = vmatprep.subr.bf16.mxu0 %v1334
        %1728 = vmatpush2.bf16.msra.mxu0 %v1333
        %1729 = vmatprep.subr.bf16.mxu0 %v1330
        %1730 = vmatpush2.bf16.msra.mxu0 %v1329
        %1731 = vmatprep.mubr.bf16.mxu0 %v360
        %1732 = vmatmul.mubr.bf16.gmra.mxu0 %v359
        %v1733 = vpop.f32.mrf.mxu0
        %v1734 = vadd.f32 %v1661, %v1733
        %v1735 = vpop.f32.mrf.mxu0
        %v1736 = vadd.f32 %v1663, %v1735
        %v1737 = vpop.f32.mrf.mxu0
        %v1738 = vadd.f32 %v1665, %v1737
        %v1739 = vpop.f32.mrf.mxu0
        %v1740 = vadd.f32 %v1667, %v1739
        %1741 = vmatprep.mubr.bf16.mxu0 %v366
        %1742 = vmatmul.mubr.bf16.gmra.mxu0 %v365
        %v1743 = vpop.f32.mrf.mxu0
        %v1744 = vadd.f32 %v1671, %v1743
        %v1745 = vpop.f32.mrf.mxu0
        %v1746 = vadd.f32 %v1673, %v1745
        %v1747 = vpop.f32.mrf.mxu0
        %v1748 = vadd.f32 %v1675, %v1747
        %v1749 = vpop.f32.mrf.mxu0
        %v1750 = vadd.f32 %v1677, %v1749
        %1751 = vmatprep.mubr.bf16.mxu0 %v372
        %1752 = vmatmul.mubr.bf16.gmra.mxu0 %v371
        %v1753 = vpop.f32.mrf.mxu0
        %v1754 = vadd.f32 %v1681, %v1753
        %v1755 = vpop.f32.mrf.mxu0
        %v1756 = vadd.f32 %v1683, %v1755
        %v1757 = vpop.f32.mrf.mxu0
        %v1758 = vadd.f32 %v1685, %v1757
        %v1759 = vpop.f32.mrf.mxu0
        %v1760 = vadd.f32 %v1687, %v1759
        %1761 = vmatprep.mubr.bf16.mxu0 %v378
        %1762 = vmatmul.mubr.bf16.gmra.mxu0 %v377
        %v1763 = vpop.f32.mrf.mxu0
        %v1764 = vadd.f32 %v1691, %v1763
        %v1765 = vpop.f32.mrf.mxu0
        %v1766 = vadd.f32 %v1693, %v1765
        %v1767 = vpop.f32.mrf.mxu0
        %v1768 = vadd.f32 %v1695, %v1767
        %v1769 = vpop.f32.mrf.mxu0
        %v1770 = vadd.f32 %v1697, %v1769
        %1771 = vdwg.mxu0
        %1772 = vmatprep.subr.bf16.mxu0 %v1200
        %1773 = vmatpush1.bf16.msra.mxu0 %v1199
        %1774 = vmatprep.subr.bf16.mxu0 %v1196
        %1775 = vmatpush1.bf16.msra.mxu0 %v1195
        %1776 = vmatprep.subr.bf16.mxu0 %v1192
        %1777 = vmatpush1.bf16.msra.mxu0 %v1191
        %1778 = vmatprep.subr.bf16.mxu0 %v1188
        %1779 = vmatpush1.bf16.msra.mxu0 %v1187
        %1780 = vmatprep.subr.bf16.mxu0 %v1184
        %1781 = vmatpush1.bf16.msra.mxu0 %v1183
        %1782 = vmatprep.subr.bf16.mxu0 %v1180
        %1783 = vmatpush1.bf16.msra.mxu0 %v1179
        %1784 = vmatprep.subr.bf16.mxu0 %v1176
        %1785 = vmatpush1.bf16.msra.mxu0 %v1175
        %1786 = vmatprep.subr.bf16.mxu0 %v1172
        %1787 = vmatpush1.bf16.msra.mxu0 %v1171
        %1788 = vmatprep.subr.bf16.mxu0 %v1232
        %1789 = vmatpush2.bf16.msra.mxu0 %v1231
        %1790 = vmatprep.subr.bf16.mxu0 %v1228
        %1791 = vmatpush2.bf16.msra.mxu0 %v1227
        %1792 = vmatprep.subr.bf16.mxu0 %v1224
        %1793 = vmatpush2.bf16.msra.mxu0 %v1223
        %1794 = vmatprep.subr.bf16.mxu0 %v1220
        %1795 = vmatpush2.bf16.msra.mxu0 %v1219
        %1796 = vmatprep.subr.bf16.mxu0 %v1216
        %1797 = vmatpush2.bf16.msra.mxu0 %v1215
        %1798 = vmatprep.subr.bf16.mxu0 %v1212
        %1799 = vmatpush2.bf16.msra.mxu0 %v1211
        %1800 = vmatprep.subr.bf16.mxu0 %v1208
        %1801 = vmatpush2.bf16.msra.mxu0 %v1207
        %1802 = vmatprep.subr.bf16.mxu0 %v1204
        %1803 = vmatpush2.bf16.msra.mxu0 %v1203
        %1804 = vmatprep.mubr.bf16.mxu0 %v356
        %1805 = vmatmul.mubr.bf16.gmra.mxu0 %v355
        %v1806 = vpop.f32.mrf.mxu0
        %v1807 = vadd.f32 %v584, %v1806
        %v1808 = vpop.f32.mrf.mxu0
        %v1809 = vadd.f32 %v588, %v1808
        %v1810 = vpop.f32.mrf.mxu0
        %v1811 = vadd.f32 %v584, %v1810
        %v1812 = vpop.f32.mrf.mxu0
        %v1813 = vadd.f32 %v588, %v1812
        %1814 = vmatprep.mubr.bf16.mxu0 %v362
        %1815 = vmatmul.mubr.bf16.gmra.mxu0 %v361
        %v1816 = vpop.f32.mrf.mxu0
        %v1817 = vadd.f32 %v584, %v1816
        %v1818 = vpop.f32.mrf.mxu0
        %v1819 = vadd.f32 %v588, %v1818
        %v1820 = vpop.f32.mrf.mxu0
        %v1821 = vadd.f32 %v584, %v1820
        %v1822 = vpop.f32.mrf.mxu0
        %v1823 = vadd.f32 %v588, %v1822
        %1824 = vmatprep.mubr.bf16.mxu0 %v368
        %1825 = vmatmul.mubr.bf16.gmra.mxu0 %v367
        %v1826 = vpop.f32.mrf.mxu0
        %v1827 = vadd.f32 %v584, %v1826
        %v1828 = vpop.f32.mrf.mxu0
        %v1829 = vadd.f32 %v588, %v1828
        %v1830 = vpop.f32.mrf.mxu0
        %v1831 = vadd.f32 %v584, %v1830
        %v1832 = vpop.f32.mrf.mxu0
        %v1833 = vadd.f32 %v588, %v1832
        %1834 = vmatprep.mubr.bf16.mxu0 %v374
        %1835 = vmatmul.mubr.bf16.gmra.mxu0 %v373
        %v1836 = vpop.f32.mrf.mxu0
        %v1837 = vadd.f32 %v584, %v1836
        %v1838 = vpop.f32.mrf.mxu0
        %v1839 = vadd.f32 %v588, %v1838
        %v1840 = vpop.f32.mrf.mxu0
        %v1841 = vadd.f32 %v584, %v1840
        %v1842 = vpop.f32.mrf.mxu0
        %v1843 = vadd.f32 %v588, %v1842
        %1844 = vdwg.mxu0
        %1845 = vmatprep.subr.bf16.mxu0 %v1264
        %1846 = vmatpush1.bf16.msra.mxu0 %v1263
        %1847 = vmatprep.subr.bf16.mxu0 %v1260
        %1848 = vmatpush1.bf16.msra.mxu0 %v1259
        %1849 = vmatprep.subr.bf16.mxu0 %v1256
        %1850 = vmatpush1.bf16.msra.mxu0 %v1255
        %1851 = vmatprep.subr.bf16.mxu0 %v1252
        %1852 = vmatpush1.bf16.msra.mxu0 %v1251
        %1853 = vmatprep.subr.bf16.mxu0 %v1248
        %1854 = vmatpush1.bf16.msra.mxu0 %v1247
        %1855 = vmatprep.subr.bf16.mxu0 %v1244
        %1856 = vmatpush1.bf16.msra.mxu0 %v1243
        %1857 = vmatprep.subr.bf16.mxu0 %v1240
        %1858 = vmatpush1.bf16.msra.mxu0 %v1239
        %1859 = vmatprep.subr.bf16.mxu0 %v1236
        %1860 = vmatpush1.bf16.msra.mxu0 %v1235
        %1861 = vmatprep.subr.bf16.mxu0 %v1296
        %1862 = vmatpush2.bf16.msra.mxu0 %v1295
        %1863 = vmatprep.subr.bf16.mxu0 %v1292
        %1864 = vmatpush2.bf16.msra.mxu0 %v1291
        %1865 = vmatprep.subr.bf16.mxu0 %v1288
        %1866 = vmatpush2.bf16.msra.mxu0 %v1287
        %1867 = vmatprep.subr.bf16.mxu0 %v1284
        %1868 = vmatpush2.bf16.msra.mxu0 %v1283
        %1869 = vmatprep.subr.bf16.mxu0 %v1280
        %1870 = vmatpush2.bf16.msra.mxu0 %v1279
        %1871 = vmatprep.subr.bf16.mxu0 %v1276
        %1872 = vmatpush2.bf16.msra.mxu0 %v1275
        %1873 = vmatprep.subr.bf16.mxu0 %v1272
        %1874 = vmatpush2.bf16.msra.mxu0 %v1271
        %1875 = vmatprep.subr.bf16.mxu0 %v1268
        %1876 = vmatpush2.bf16.msra.mxu0 %v1267
        %1877 = vmatprep.mubr.bf16.mxu0 %v358
        %1878 = vmatmul.mubr.bf16.gmra.mxu0 %v357
        %v1879 = vpop.f32.mrf.mxu0
        %v1880 = vadd.f32 %v1807, %v1879
        %v1881 = vpop.f32.mrf.mxu0
        %v1882 = vadd.f32 %v1809, %v1881
        %v1883 = vpop.f32.mrf.mxu0
        %v1884 = vadd.f32 %v1811, %v1883
        %v1885 = vpop.f32.mrf.mxu0
        %v1886 = vadd.f32 %v1813, %v1885
        %1887 = vmatprep.mubr.bf16.mxu0 %v364
        %1888 = vmatmul.mubr.bf16.gmra.mxu0 %v363
        %v1889 = vpop.f32.mrf.mxu0
        %v1890 = vadd.f32 %v1817, %v1889
        %v1891 = vpop.f32.mrf.mxu0
        %v1892 = vadd.f32 %v1819, %v1891
        %v1893 = vpop.f32.mrf.mxu0
        %v1894 = vadd.f32 %v1821, %v1893
        %v1895 = vpop.f32.mrf.mxu0
        %v1896 = vadd.f32 %v1823, %v1895
        %1897 = vmatprep.mubr.bf16.mxu0 %v370
        %1898 = vmatmul.mubr.bf16.gmra.mxu0 %v369
        %v1899 = vpop.f32.mrf.mxu0
        %v1900 = vadd.f32 %v1827, %v1899
        %v1901 = vpop.f32.mrf.mxu0
        %v1902 = vadd.f32 %v1829, %v1901
        %v1903 = vpop.f32.mrf.mxu0
        %v1904 = vadd.f32 %v1831, %v1903
        %v1905 = vpop.f32.mrf.mxu0
        %v1906 = vadd.f32 %v1833, %v1905
        %1907 = vmatprep.mubr.bf16.mxu0 %v376
        %1908 = vmatmul.mubr.bf16.gmra.mxu0 %v375
        %v1909 = vpop.f32.mrf.mxu0
        %v1910 = vadd.f32 %v1837, %v1909
        %v1911 = vpop.f32.mrf.mxu0
        %v1912 = vadd.f32 %v1839, %v1911
        %v1913 = vpop.f32.mrf.mxu0
        %v1914 = vadd.f32 %v1841, %v1913
        %v1915 = vpop.f32.mrf.mxu0
        %v1916 = vadd.f32 %v1843, %v1915
        %1917 = vdwg.mxu0
        %1918 = vmatprep.subr.bf16.mxu0 %v1328
        %1919 = vmatpush1.bf16.msra.mxu0 %v1327
        %1920 = vmatprep.subr.bf16.mxu0 %v1324
        %1921 = vmatpush1.bf16.msra.mxu0 %v1323
        %1922 = vmatprep.subr.bf16.mxu0 %v1320
        %1923 = vmatpush1.bf16.msra.mxu0 %v1319
        %1924 = vmatprep.subr.bf16.mxu0 %v1316
        %1925 = vmatpush1.bf16.msra.mxu0 %v1315
        %1926 = vmatprep.subr.bf16.mxu0 %v1312
        %1927 = vmatpush1.bf16.msra.mxu0 %v1311
        %1928 = vmatprep.subr.bf16.mxu0 %v1308
        %1929 = vmatpush1.bf16.msra.mxu0 %v1307
        %1930 = vmatprep.subr.bf16.mxu0 %v1304
        %1931 = vmatpush1.bf16.msra.mxu0 %v1303
        %1932 = vmatprep.subr.bf16.mxu0 %v1300
        %1933 = vmatpush1.bf16.msra.mxu0 %v1299
        %1934 = vmatprep.subr.bf16.mxu0 %v1360
        %1935 = vmatpush2.bf16.msra.mxu0 %v1359
        %1936 = vmatprep.subr.bf16.mxu0 %v1356
        %1937 = vmatpush2.bf16.msra.mxu0 %v1355
        %1938 = vmatprep.subr.bf16.mxu0 %v1352
        %1939 = vmatpush2.bf16.msra.mxu0 %v1351
        %1940 = vmatprep.subr.bf16.mxu0 %v1348
        %1941 = vmatpush2.bf16.msra.mxu0 %v1347
        %1942 = vmatprep.subr.bf16.mxu0 %v1344
        %1943 = vmatpush2.bf16.msra.mxu0 %v1343
        %1944 = vmatprep.subr.bf16.mxu0 %v1340
        %1945 = vmatpush2.bf16.msra.mxu0 %v1339
        %1946 = vmatprep.subr.bf16.mxu0 %v1336
        %1947 = vmatpush2.bf16.msra.mxu0 %v1335
        %1948 = vmatprep.subr.bf16.mxu0 %v1332
        %1949 = vmatpush2.bf16.msra.mxu0 %v1331
        %1950 = vmatprep.mubr.bf16.mxu0 %v360
        %1951 = vmatmul.mubr.bf16.gmra.mxu0 %v359
        %v1952 = vpop.f32.mrf.mxu0
        %v1953 = vadd.f32 %v1880, %v1952
        %v1954 = vpop.f32.mrf.mxu0
        %v1955 = vadd.f32 %v1882, %v1954
        %v1956 = vpop.f32.mrf.mxu0
        %v1957 = vadd.f32 %v1884, %v1956
        %v1958 = vpop.f32.mrf.mxu0
        %v1959 = vadd.f32 %v1886, %v1958
        %1960 = vmatprep.mubr.bf16.mxu0 %v366
        %1961 = vmatmul.mubr.bf16.gmra.mxu0 %v365
        %v1962 = vpop.f32.mrf.mxu0
        %v1963 = vadd.f32 %v1890, %v1962
        %v1964 = vpop.f32.mrf.mxu0
        %v1965 = vadd.f32 %v1892, %v1964
        %v1966 = vpop.f32.mrf.mxu0
        %v1967 = vadd.f32 %v1894, %v1966
        %v1968 = vpop.f32.mrf.mxu0
        %v1969 = vadd.f32 %v1896, %v1968
        %1970 = vmatprep.mubr.bf16.mxu0 %v372
        %1971 = vmatmul.mubr.bf16.gmra.mxu0 %v371
        %v1972 = vpop.f32.mrf.mxu0
        %v1973 = vadd.f32 %v1900, %v1972
        %v1974 = vpop.f32.mrf.mxu0
        %v1975 = vadd.f32 %v1902, %v1974
        %v1976 = vpop.f32.mrf.mxu0
        %v1977 = vadd.f32 %v1904, %v1976
        %v1978 = vpop.f32.mrf.mxu0
        %v1979 = vadd.f32 %v1906, %v1978
        %1980 = vmatprep.mubr.bf16.mxu0 %v378
        %1981 = vmatmul.mubr.bf16.gmra.mxu0 %v377
        %v1982 = vpop.f32.mrf.mxu0
        %v1983 = vadd.f32 %v1910, %v1982
        %v1984 = vpop.f32.mrf.mxu0
        %v1985 = vadd.f32 %v1912, %v1984
        %v1986 = vpop.f32.mrf.mxu0
        %v1987 = vadd.f32 %v1914, %v1986
        %v1988 = vpop.f32.mrf.mxu0
        %v1989 = vadd.f32 %v1916, %v1988
        %1990 = vdwg.mxu0
        %1991 = vst [vmem:[#allocation2] sm:$0xff] %v1734
        %1992 = vst [vmem:[#allocation2 + $0x8] sm:$0xff] %v1736
        %1993 = vst [vmem:[#allocation2 + $0x10] sm:$0xff] %v1953
        %1994 = vst [vmem:[#allocation2 + $0x18] sm:$0xff] %v1955
        %1995 = vst [vmem:[#allocation2 + $0x20] sm:$0xff] %v1738
        %1996 = vst [vmem:[#allocation2 + $0x28] sm:$0xff] %v1740
        %1997 = vst [vmem:[#allocation2 + $0x30] sm:$0xff] %v1957
        %1998 = vst [vmem:[#allocation2 + $0x38] sm:$0xff] %v1959
        %1999 = vst [vmem:[#allocation2 + $0x40] sm:$0xff] %v1744
        %2000 = vst [vmem:[#allocation2 + $0x48] sm:$0xff] %v1746
        %2001 = vst [vmem:[#allocation2 + $0x50] sm:$0xff] %v1963
        %2002 = vst [vmem:[#allocation2 + $0x58] sm:$0xff] %v1965
        %2003 = vst [vmem:[#allocation2 + $0x60] sm:$0xff] %v1748
        %2004 = vst [vmem:[#allocation2 + $0x68] sm:$0xff] %v1750
        %2005 = vst [vmem:[#allocation2 + $0x70] sm:$0xff] %v1967
        %2006 = vst [vmem:[#allocation2 + $0x78] sm:$0xff] %v1969
        %2007 = vst [vmem:[#allocation2 + $0x80] sm:$0xff] %v1754
        %2008 = vst [vmem:[#allocation2 + $0x88] sm:$0xff] %v1756
        %2009 = vst [vmem:[#allocation2 + $0x90] sm:$0xff] %v1973
        %2010 = vst [vmem:[#allocation2 + $0x98] sm:$0xff] %v1975
        %2011 = vst [vmem:[#allocation2 + $0xa0] sm:$0xff] %v1758
        %2012 = vst [vmem:[#allocation2 + $0xa8] sm:$0xff] %v1760
        %2013 = vst [vmem:[#allocation2 + $0xb0] sm:$0xff] %v1977
        %2014 = vst [vmem:[#allocation2 + $0xb8] sm:$0xff] %v1979
        %2015 = vst [vmem:[#allocation2 + $0xc0] sm:$0xff] %v1764
        %2016 = vst [vmem:[#allocation2 + $0xc8] sm:$0xff] %v1766
        %2017 = vst [vmem:[#allocation2 + $0xd0] sm:$0xff] %v1983
        %2018 = vst [vmem:[#allocation2 + $0xd8] sm:$0xff] %v1985
        %2019 = vst [vmem:[#allocation2 + $0xe0] sm:$0xff] %v1768
        %2020 = vst [vmem:[#allocation2 + $0xe8] sm:$0xff] %v1770
        %2021 = vst [vmem:[#allocation2 + $0xf0] sm:$0xff] %v1987
        %2022 = vst [vmem:[#allocation2 + $0xf8] sm:$0xff] %v1989
        %v2023 = vld [vmem:[%s262] sm:$0xff]
        %v2024 = vld [vmem:[%s262 + $0x8] sm:$0xff]
        %v2025 = vld [vmem:[%s262 + $0x10] sm:$0xff]
        %v2026 = vld [vmem:[%s262 + $0x18] sm:$0xff]
        %v2027 = vld [vmem:[%s262 + $0x20] sm:$0xff]
        %v2028 = vld [vmem:[%s262 + $0x28] sm:$0xff]
        %v2029 = vld [vmem:[%s262 + $0x30] sm:$0xff]
        %v2030 = vld [vmem:[%s262 + $0x38] sm:$0xff]
        %v2031 = vld [vmem:[%s262 + $0x40] sm:$0xff]
        %v2032 = vld [vmem:[%s262 + $0x48] sm:$0xff]
        %v2033 = vld [vmem:[%s262 + $0x50] sm:$0xff]
        %v2034 = vld [vmem:[%s262 + $0x58] sm:$0xff]
        %v2035 = vld [vmem:[%s262 + $0x60] sm:$0xff]
        %v2036 = vld [vmem:[%s262 + $0x68] sm:$0xff]
        %v2037 = vld [vmem:[%s262 + $0x70] sm:$0xff]
        %v2038 = vld [vmem:[%s262 + $0x78] sm:$0xff]
        %v2039 = vld [vmem:[%s262 + $0x80] sm:$0xff]
        %v2040 = vld [vmem:[%s262 + $0x88] sm:$0xff]
        %v2041 = vld [vmem:[%s262 + $0x90] sm:$0xff]
        %v2042 = vld [vmem:[%s262 + $0x98] sm:$0xff]
        %v2043 = vld [vmem:[%s262 + $0xa0] sm:$0xff]
        %v2044 = vld [vmem:[%s262 + $0xa8] sm:$0xff]
        %v2045 = vld [vmem:[%s262 + $0xb0] sm:$0xff]
        %v2046 = vld [vmem:[%s262 + $0xb8] sm:$0xff]
        %v2047 = vld [vmem:[%s262 + $0xc0] sm:$0xff]
        %v2048 = vld [vmem:[%s262 + $0xc8] sm:$0xff]
        %v2049 = vld [vmem:[%s262 + $0xd0] sm:$0xff]
        %v2050 = vld [vmem:[%s262 + $0xd8] sm:$0xff]
        %v2051 = vld [vmem:[%s262 + $0xe0] sm:$0xff]
        %v2052 = vld [vmem:[%s262 + $0xe8] sm:$0xff]
        %v2053 = vld [vmem:[%s262 + $0xf0] sm:$0xff]
        %v2054 = vld [vmem:[%s262 + $0xf8] sm:$0xff]
        %p2055 = scmp.eq.s32.totalorder %s25, 0
        // Predicated region
        $region53: #{tpu_custom_call.1} parent=35 // pred_check
          %p2056 = pneg %p2055
        $region54: #{tpu_custom_call.1} parent=35 // pred_check_branch
          %2058 = sbr.rel (%p2056) target = $region56
        $region55: #{tpu_custom_call.1} parent=35 // pred_region
          %v2059 = vld [vmem:[#allocation2] sm:$0xff]
          %v2060 = vld [vmem:[#allocation2 + $0x8] sm:$0xff]
          %v2061 = vld [vmem:[#allocation2 + $0x10] sm:$0xff]
          %v2062 = vld [vmem:[#allocation2 + $0x18] sm:$0xff]
          %v2095 = vunpack.c.l.b16 %v2023
          %v2096 = vunpack.c.h.b16 %v2023
          %v2097 = vunpack.c.l.b16 %v2024
          %v2098 = vunpack.c.h.b16 %v2024
          %v2099 = vunpack.c.l.b16 %v2025
          %v2100 = vunpack.c.h.b16 %v2025
          %v2101 = vunpack.c.l.b16 %v2026
          %v2102 = vunpack.c.h.b16 %v2026
          %v2103 = vunpack.c.l.b16 %v2027
          %v2104 = vunpack.c.h.b16 %v2027
          %v2105 = vunpack.c.l.b16 %v2028
          %v2106 = vunpack.c.h.b16 %v2028
          %v2107 = vunpack.c.l.b16 %v2029
          %v2108 = vunpack.c.h.b16 %v2029
          %v2109 = vunpack.c.l.b16 %v2030
          %v2110 = vunpack.c.h.b16 %v2030
          %v2111 = vunpack.c.l.b16 %v2031
          %v2112 = vunpack.c.h.b16 %v2031
          %v2113 = vunpack.c.l.b16 %v2032
          %v2114 = vunpack.c.h.b16 %v2032
          %v2115 = vunpack.c.l.b16 %v2033
          %v2116 = vunpack.c.h.b16 %v2033
          %v2117 = vunpack.c.l.b16 %v2034
          %v2118 = vunpack.c.h.b16 %v2034
          %v2119 = vunpack.c.l.b16 %v2035
          %v2120 = vunpack.c.h.b16 %v2035
          %v2121 = vunpack.c.l.b16 %v2036
          %v2122 = vunpack.c.h.b16 %v2036
          %v2123 = vunpack.c.l.b16 %v2037
          %v2124 = vunpack.c.h.b16 %v2037
          %v2125 = vunpack.c.l.b16 %v2038
          %v2126 = vunpack.c.h.b16 %v2038
          %v2127 = vunpack.c.l.b16 %v2039
          %v2128 = vunpack.c.h.b16 %v2039
          %v2129 = vunpack.c.l.b16 %v2040
          %v2130 = vunpack.c.h.b16 %v2040
          %v2131 = vunpack.c.l.b16 %v2041
          %v2132 = vunpack.c.h.b16 %v2041
          %v2133 = vunpack.c.l.b16 %v2042
          %v2134 = vunpack.c.h.b16 %v2042
          %v2135 = vunpack.c.l.b16 %v2043
          %v2136 = vunpack.c.h.b16 %v2043
          %v2137 = vunpack.c.l.b16 %v2044
          %v2138 = vunpack.c.h.b16 %v2044
          %v2139 = vunpack.c.l.b16 %v2045
          %v2140 = vunpack.c.h.b16 %v2045
          %v2141 = vunpack.c.l.b16 %v2046
          %v2142 = vunpack.c.h.b16 %v2046
          %v2143 = vunpack.c.l.b16 %v2047
          %v2144 = vunpack.c.h.b16 %v2047
          %v2145 = vunpack.c.l.b16 %v2048
          %v2146 = vunpack.c.h.b16 %v2048
          %v2147 = vunpack.c.l.b16 %v2049
          %v2148 = vunpack.c.h.b16 %v2049
          %v2149 = vunpack.c.l.b16 %v2050
          %v2150 = vunpack.c.h.b16 %v2050
          %v2151 = vunpack.c.l.b16 %v2051
          %v2152 = vunpack.c.h.b16 %v2051
          %v2153 = vunpack.c.l.b16 %v2052
          %v2154 = vunpack.c.h.b16 %v2052
          %v2155 = vunpack.c.l.b16 %v2053
          %v2156 = vunpack.c.h.b16 %v2053
          %v2157 = vunpack.c.l.b16 %v2054
          %v2158 = vunpack.c.h.b16 %v2054
          %v2159 = vpack.c.b16 %v2099, %v2095
          %v2160 = vpack.c.b16 %v2100, %v2096
          %v2161 = vpack.c.b16 %v2101, %v2097
          %v2162 = vpack.c.b16 %v2102, %v2098
          %v2163 = vpack.c.b16 %v2107, %v2103
          %v2164 = vpack.c.b16 %v2108, %v2104
          %v2165 = vpack.c.b16 %v2109, %v2105
          %v2166 = vpack.c.b16 %v2110, %v2106
          %v2167 = vpack.c.b16 %v2115, %v2111
          %v2168 = vpack.c.b16 %v2116, %v2112
          %v2169 = vpack.c.b16 %v2117, %v2113
          %v2170 = vpack.c.b16 %v2118, %v2114
          %v2171 = vpack.c.b16 %v2123, %v2119
          %v2172 = vpack.c.b16 %v2124, %v2120
          %v2173 = vpack.c.b16 %v2125, %v2121
          %v2174 = vpack.c.b16 %v2126, %v2122
          %v2175 = vpack.c.b16 %v2131, %v2127
          %v2176 = vpack.c.b16 %v2132, %v2128
          %v2177 = vpack.c.b16 %v2133, %v2129
          %v2178 = vpack.c.b16 %v2134, %v2130
          %v2179 = vpack.c.b16 %v2139, %v2135
          %v2180 = vpack.c.b16 %v2140, %v2136
          %v2181 = vpack.c.b16 %v2141, %v2137
          %v2182 = vpack.c.b16 %v2142, %v2138
          %v2183 = vpack.c.b16 %v2147, %v2143
          %v2184 = vpack.c.b16 %v2148, %v2144
          %v2185 = vpack.c.b16 %v2149, %v2145
          %v2186 = vpack.c.b16 %v2150, %v2146
          %v2187 = vpack.c.b16 %v2155, %v2151
          %v2188 = vpack.c.b16 %v2156, %v2152
          %v2189 = vpack.c.b16 %v2157, %v2153
          %v2190 = vpack.c.b16 %v2158, %v2154
          %2223 = vmatprep.subr.bf16.mxu0 %v2188
          %2224 = vmatpush1.bf16.msra.mxu0 %v2187
          %2225 = vmatprep.subr.bf16.mxu0 %v2184
          %2226 = vmatpush1.bf16.msra.mxu0 %v2183
          %2227 = vmatprep.subr.bf16.mxu0 %v2180
          %2228 = vmatpush1.bf16.msra.mxu0 %v2179
          %2229 = vmatprep.subr.bf16.mxu0 %v2176
          %2230 = vmatpush1.bf16.msra.mxu0 %v2175
          %2231 = vmatprep.subr.bf16.mxu0 %v2172
          %2232 = vmatpush1.bf16.msra.mxu0 %v2171
          %2233 = vmatprep.subr.bf16.mxu0 %v2168
          %2234 = vmatpush1.bf16.msra.mxu0 %v2167
          %2235 = vmatprep.subr.bf16.mxu0 %v2164
          %2236 = vmatpush1.bf16.msra.mxu0 %v2163
          %2237 = vmatprep.subr.bf16.mxu0 %v2160
          %2238 = vmatpush1.bf16.msra.mxu0 %v2159
          %2239 = vmatprep.subr.bf16.mxu0 0
          %2240 = vmatpush2.bf16.msra.mxu0 0
          %2241 = vmatprep.subr.bf16.mxu0 0
          %2242 = vmatpush2.bf16.msra.mxu0 0
          %2243 = vmatprep.subr.bf16.mxu0 0
          %2244 = vmatpush2.bf16.msra.mxu0 0
          %2245 = vmatprep.subr.bf16.mxu0 0
          %2246 = vmatpush2.bf16.msra.mxu0 0
          %2247 = vmatprep.subr.bf16.mxu0 0
          %2248 = vmatpush2.bf16.msra.mxu0 0
          %2249 = vmatprep.subr.bf16.mxu0 0
          %2250 = vmatpush2.bf16.msra.mxu0 0
          %2251 = vmatprep.subr.bf16.mxu0 0
          %2252 = vmatpush2.bf16.msra.mxu0 0
          %2253 = vmatprep.subr.bf16.mxu0 0
          %2254 = vmatpush2.bf16.msra.mxu0 0
          %2255 = vmatprep.mubr.bf16.mxu0 0
          %2256 = vmatmul.mubr.bf16.gmra.mxu0 0
          %v2257 = vpop.f32.mrf.mxu0
          %v2258 = vadd.f32 0.0, %v2257
          %v2259 = vpop.f32.mrf.mxu0
          %v2260 = vadd.f32 0.0, %v2259
          %v2261 = vpop.f32.mrf.mxu0
          %v2262 = vpop.f32.mrf.mxu0
          %2263 = vdwg.mxu0
          %2264 = vmatprep.subr.bf16.mxu0 %v2190
          %2265 = vmatpush1.bf16.msra.mxu0 %v2189
          %2266 = vmatprep.subr.bf16.mxu0 %v2186
          %2267 = vmatpush1.bf16.msra.mxu0 %v2185
          %2268 = vmatprep.subr.bf16.mxu0 %v2182
          %2269 = vmatpush1.bf16.msra.mxu0 %v2181
          %2270 = vmatprep.subr.bf16.mxu0 %v2178
          %2271 = vmatpush1.bf16.msra.mxu0 %v2177
          %2272 = vmatprep.subr.bf16.mxu0 %v2174
          %2273 = vmatpush1.bf16.msra.mxu0 %v2173
          %2274 = vmatprep.subr.bf16.mxu0 %v2170
          %2275 = vmatpush1.bf16.msra.mxu0 %v2169
          %2276 = vmatprep.subr.bf16.mxu0 %v2166
          %2277 = vmatpush1.bf16.msra.mxu0 %v2165
          %2278 = vmatprep.subr.bf16.mxu0 %v2162
          %2279 = vmatpush1.bf16.msra.mxu0 %v2161
          %2280 = vmatprep.subr.bf16.mxu0 0
          %2281 = vmatpush2.bf16.msra.mxu0 0
          %2282 = vmatprep.subr.bf16.mxu0 0
          %2283 = vmatpush2.bf16.msra.mxu0 0
          %2284 = vmatprep.subr.bf16.mxu0 0
          %2285 = vmatpush2.bf16.msra.mxu0 0
          %2286 = vmatprep.subr.bf16.mxu0 0
          %2287 = vmatpush2.bf16.msra.mxu0 0
          %2288 = vmatprep.subr.bf16.mxu0 0
          %2289 = vmatpush2.bf16.msra.mxu0 0
          %2290 = vmatprep.subr.bf16.mxu0 0
          %2291 = vmatpush2.bf16.msra.mxu0 0
          %2292 = vmatprep.subr.bf16.mxu0 0
          %2293 = vmatpush2.bf16.msra.mxu0 0
          %2294 = vmatprep.subr.bf16.mxu0 0
          %2295 = vmatpush2.bf16.msra.mxu0 0
          %2296 = vmatprep.mubr.bf16.mxu0 0
          %2297 = vmatmul.mubr.bf16.gmra.mxu0 0
          %v2298 = vpop.f32.mrf.mxu0
          %v2299 = vadd.f32 0.0, %v2298
          %v2300 = vpop.f32.mrf.mxu0
          %v2301 = vadd.f32 0.0, %v2300
          %v2302 = vpop.f32.mrf.mxu0
          %v2303 = vpop.f32.mrf.mxu0
          %2304 = vdwg.mxu0
          %v2305 = vadd.f32 %v2059, %v2258
          %v2306 = vadd.f32 %v2060, %v2260
          %v2307 = vadd.f32 %v2061, %v2299
          %v2308 = vadd.f32 %v2062, %v2301
          %v2309 = vxor.u32 %v2305, 2147483648
          %v2310 = vmul.f32 %v2309, 1.442695
          %v2311 = vpow.pop %v2310
          %v2312 = vadd.f32 %v2311, 1.0
          %v2313 = vrcp.pop %v2312
          %v2314 = vmul.f32 1.0, %v2313
          %v2315 = vxor.u32 %v2306, 2147483648
          %v2316 = vmul.f32 %v2315, 1.442695
          %v2317 = vpow.pop %v2316
          %v2318 = vadd.f32 %v2317, 1.0
          %v2319 = vrcp.pop %v2318
          %v2320 = vmul.f32 1.0, %v2319
          %v2321 = vtanh.pop %v2307
          %v2322 = vxor.u32 %v2308, 2147483648
          %v2323 = vmul.f32 %v2322, 1.442695
          %v2324 = vpow.pop %v2323
          %v2325 = vadd.f32 %v2324, 1.0
          %v2326 = vrcp.pop %v2325
          %v2327 = vmul.f32 1.0, %v2326
          %v2328 = vmul.f32 %v2320, 0.0
          %v2329 = vmul.f32 %v2314, %v2321
          %v2330 = vadd.f32 %v2328, %v2329
          %v2331 = vtanh.pop %v2330
          %v2332 = vmul.f32 %v2327, %v2331
          %2333 = vst [vmem:[%s305] sm:$0xff] %v2332
          %v2334 = vld [vmem:[#allocation2 + $0x20] sm:$0xff]
          %v2335 = vld [vmem:[#allocation2 + $0x28] sm:$0xff]
          %v2336 = vld [vmem:[#allocation2 + $0x30] sm:$0xff]
          %v2337 = vld [vmem:[#allocation2 + $0x38] sm:$0xff]
          %v2338 = vpack.c.bf16 %v2332, %v2332
          %2339 = vmatprep.subr.bf16.mxu0 %v2188
          %2340 = vmatpush1.bf16.msra.mxu0 %v2187
          %2341 = vmatprep.subr.bf16.mxu0 %v2184
          %2342 = vmatpush1.bf16.msra.mxu0 %v2183
          %2343 = vmatprep.subr.bf16.mxu0 %v2180
          %2344 = vmatpush1.bf16.msra.mxu0 %v2179
          %2345 = vmatprep.subr.bf16.mxu0 %v2176
          %2346 = vmatpush1.bf16.msra.mxu0 %v2175
          %2347 = vmatprep.subr.bf16.mxu0 %v2172
          %2348 = vmatpush1.bf16.msra.mxu0 %v2171
          %2349 = vmatprep.subr.bf16.mxu0 %v2168
          %2350 = vmatpush1.bf16.msra.mxu0 %v2167
          %2351 = vmatprep.subr.bf16.mxu0 %v2164
          %2352 = vmatpush1.bf16.msra.mxu0 %v2163
          %2353 = vmatprep.subr.bf16.mxu0 %v2160
          %2354 = vmatpush1.bf16.msra.mxu0 %v2159
          %2355 = vmatprep.subr.bf16.mxu0 0
          %2356 = vmatpush2.bf16.msra.mxu0 0
          %2357 = vmatprep.subr.bf16.mxu0 0
          %2358 = vmatpush2.bf16.msra.mxu0 0
          %2359 = vmatprep.subr.bf16.mxu0 0
          %2360 = vmatpush2.bf16.msra.mxu0 0
          %2361 = vmatprep.subr.bf16.mxu0 0
          %2362 = vmatpush2.bf16.msra.mxu0 0
          %2363 = vmatprep.subr.bf16.mxu0 0
          %2364 = vmatpush2.bf16.msra.mxu0 0
          %2365 = vmatprep.subr.bf16.mxu0 0
          %2366 = vmatpush2.bf16.msra.mxu0 0
          %2367 = vmatprep.subr.bf16.mxu0 0
          %2368 = vmatpush2.bf16.msra.mxu0 0
          %2369 = vmatprep.subr.bf16.mxu0 0
          %2370 = vmatpush2.bf16.msra.mxu0 0
          %2371 = vmatprep.mubr.bf16.mxu0 0
          %2372 = vmatmul.mubr.bf16.gmra.mxu0 %v2338
          %v2373 = vpop.f32.mrf.mxu0
          %v2374 = vadd.f32 0.0, %v2373
          %v2375 = vpop.f32.mrf.mxu0
          %v2376 = vadd.f32 0.0, %v2375
          %v2377 = vpop.f32.mrf.mxu0
          %v2378 = vpop.f32.mrf.mxu0
          %2379 = vdwg.mxu0
          %2380 = vmatprep.subr.bf16.mxu0 %v2190
          %2381 = vmatpush1.bf16.msra.mxu0 %v2189
          %2382 = vmatprep.subr.bf16.mxu0 %v2186
          %2383 = vmatpush1.bf16.msra.mxu0 %v2185
          %2384 = vmatprep.subr.bf16.mxu0 %v2182
          %2385 = vmatpush1.bf16.msra.mxu0 %v2181
          %2386 = vmatprep.subr.bf16.mxu0 %v2178
          %2387 = vmatpush1.bf16.msra.mxu0 %v2177
          %2388 = vmatprep.subr.bf16.mxu0 %v2174
          %2389 = vmatpush1.bf16.msra.mxu0 %v2173
          %2390 = vmatprep.subr.bf16.mxu0 %v2170
          %2391 = vmatpush1.bf16.msra.mxu0 %v2169
          %2392 = vmatprep.subr.bf16.mxu0 %v2166
          %2393 = vmatpush1.bf16.msra.mxu0 %v2165
          %2394 = vmatprep.subr.bf16.mxu0 %v2162
          %2395 = vmatpush1.bf16.msra.mxu0 %v2161
          %2396 = vmatprep.subr.bf16.mxu0 0
          %2397 = vmatpush2.bf16.msra.mxu0 0
          %2398 = vmatprep.subr.bf16.mxu0 0
          %2399 = vmatpush2.bf16.msra.mxu0 0
          %2400 = vmatprep.subr.bf16.mxu0 0
          %2401 = vmatpush2.bf16.msra.mxu0 0
          %2402 = vmatprep.subr.bf16.mxu0 0
          %2403 = vmatpush2.bf16.msra.mxu0 0
          %2404 = vmatprep.subr.bf16.mxu0 0
          %2405 = vmatpush2.bf16.msra.mxu0 0
          %2406 = vmatprep.subr.bf16.mxu0 0
          %2407 = vmatpush2.bf16.msra.mxu0 0
          %2408 = vmatprep.subr.bf16.mxu0 0
          %2409 = vmatpush2.bf16.msra.mxu0 0
          %2410 = vmatprep.subr.bf16.mxu0 0
          %2411 = vmatpush2.bf16.msra.mxu0 0
          %2412 = vmatprep.mubr.bf16.mxu0 0
          %2413 = vmatmul.mubr.bf16.gmra.mxu0 %v2338
          %v2414 = vpop.f32.mrf.mxu0
          %v2415 = vadd.f32 0.0, %v2414
          %v2416 = vpop.f32.mrf.mxu0
          %v2417 = vadd.f32 0.0, %v2416
          %v2418 = vpop.f32.mrf.mxu0
          %v2419 = vpop.f32.mrf.mxu0
          %2420 = vdwg.mxu0
          %v2421 = vadd.f32 %v2334, %v2374
          %v2422 = vadd.f32 %v2335, %v2376
          %v2423 = vadd.f32 %v2336, %v2415
          %v2424 = vadd.f32 %v2337, %v2417
          %v2425 = vxor.u32 %v2421, 2147483648
          %v2426 = vmul.f32 %v2425, 1.442695
          %v2427 = vpow.pop %v2426
          %v2428 = vadd.f32 %v2427, 1.0
          %v2429 = vrcp.pop %v2428
          %v2430 = vmul.f32 1.0, %v2429
          %v2431 = vxor.u32 %v2422, 2147483648
          %v2432 = vmul.f32 %v2431, 1.442695
          %v2433 = vpow.pop %v2432
          %v2434 = vadd.f32 %v2433, 1.0
          %v2435 = vrcp.pop %v2434
          %v2436 = vmul.f32 1.0, %v2435
          %v2437 = vtanh.pop %v2423
          %v2438 = vxor.u32 %v2424, 2147483648
          %v2439 = vmul.f32 %v2438, 1.442695
          %v2440 = vpow.pop %v2439
          %v2441 = vadd.f32 %v2440, 1.0
          %v2442 = vrcp.pop %v2441
          %v2443 = vmul.f32 1.0, %v2442
          %v2444 = vmul.f32 %v2436, %v2330
          %v2445 = vmul.f32 %v2430, %v2437
          %v2446 = vadd.f32 %v2444, %v2445
          %v2447 = vtanh.pop %v2446
          %v2448 = vmul.f32 %v2443, %v2447
          %s2449 = scalar_lea.vmem %s305, 8 [#allocation11]
          %2450 = vst [vmem:[%s2449] sm:$0xff] %v2448
          %v2451 = vld [vmem:[#allocation2 + $0x40] sm:$0xff]
          %v2452 = vld [vmem:[#allocation2 + $0x48] sm:$0xff]
          %v2453 = vld [vmem:[#allocation2 + $0x50] sm:$0xff]
          %v2454 = vld [vmem:[#allocation2 + $0x58] sm:$0xff]
          %v2455 = vpack.c.bf16 %v2448, %v2448
          %2456 = vmatprep.subr.bf16.mxu0 %v2188
          %2457 = vmatpush1.bf16.msra.mxu0 %v2187
          %2458 = vmatprep.subr.bf16.mxu0 %v2184
          %2459 = vmatpush1.bf16.msra.mxu0 %v2183
          %2460 = vmatprep.subr.bf16.mxu0 %v2180
          %2461 = vmatpush1.bf16.msra.mxu0 %v2179
          %2462 = vmatprep.subr.bf16.mxu0 %v2176
          %2463 = vmatpush1.bf16.msra.mxu0 %v2175
          %2464 = vmatprep.subr.bf16.mxu0 %v2172
          %2465 = vmatpush1.bf16.msra.mxu0 %v2171
          %2466 = vmatprep.subr.bf16.mxu0 %v2168
          %2467 = vmatpush1.bf16.msra.mxu0 %v2167
          %2468 = vmatprep.subr.bf16.mxu0 %v2164
          %2469 = vmatpush1.bf16.msra.mxu0 %v2163
          %2470 = vmatprep.subr.bf16.mxu0 %v2160
          %2471 = vmatpush1.bf16.msra.mxu0 %v2159
          %2472 = vmatprep.subr.bf16.mxu0 0
          %2473 = vmatpush2.bf16.msra.mxu0 0
          %2474 = vmatprep.subr.bf16.mxu0 0
          %2475 = vmatpush2.bf16.msra.mxu0 0
          %2476 = vmatprep.subr.bf16.mxu0 0
          %2477 = vmatpush2.bf16.msra.mxu0 0
          %2478 = vmatprep.subr.bf16.mxu0 0
          %2479 = vmatpush2.bf16.msra.mxu0 0
          %2480 = vmatprep.subr.bf16.mxu0 0
          %2481 = vmatpush2.bf16.msra.mxu0 0
          %2482 = vmatprep.subr.bf16.mxu0 0
          %2483 = vmatpush2.bf16.msra.mxu0 0
          %2484 = vmatprep.subr.bf16.mxu0 0
          %2485 = vmatpush2.bf16.msra.mxu0 0
          %2486 = vmatprep.subr.bf16.mxu0 0
          %2487 = vmatpush2.bf16.msra.mxu0 0
          %2488 = vmatprep.mubr.bf16.mxu0 0
          %2489 = vmatmul.mubr.bf16.gmra.mxu0 %v2455
          %v2490 = vpop.f32.mrf.mxu0
          %v2491 = vadd.f32 0.0, %v2490
          %v2492 = vpop.f32.mrf.mxu0
          %v2493 = vadd.f32 0.0, %v2492
          %v2494 = vpop.f32.mrf.mxu0
          %v2495 = vpop.f32.mrf.mxu0
          %2496 = vdwg.mxu0
          %2497 = vmatprep.subr.bf16.mxu0 %v2190
          %2498 = vmatpush1.bf16.msra.mxu0 %v2189
          %2499 = vmatprep.subr.bf16.mxu0 %v2186
          %2500 = vmatpush1.bf16.msra.mxu0 %v2185
          %2501 = vmatprep.subr.bf16.mxu0 %v2182
          %2502 = vmatpush1.bf16.msra.mxu0 %v2181
          %2503 = vmatprep.subr.bf16.mxu0 %v2178
          %2504 = vmatpush1.bf16.msra.mxu0 %v2177
          %2505 = vmatprep.subr.bf16.mxu0 %v2174
          %2506 = vmatpush1.bf16.msra.mxu0 %v2173
          %2507 = vmatprep.subr.bf16.mxu0 %v2170
          %2508 = vmatpush1.bf16.msra.mxu0 %v2169
          %2509 = vmatprep.subr.bf16.mxu0 %v2166
          %2510 = vmatpush1.bf16.msra.mxu0 %v2165
          %2511 = vmatprep.subr.bf16.mxu0 %v2162
          %2512 = vmatpush1.bf16.msra.mxu0 %v2161
          %2513 = vmatprep.subr.bf16.mxu0 0
          %2514 = vmatpush2.bf16.msra.mxu0 0
          %2515 = vmatprep.subr.bf16.mxu0 0
          %2516 = vmatpush2.bf16.msra.mxu0 0
          %2517 = vmatprep.subr.bf16.mxu0 0
          %2518 = vmatpush2.bf16.msra.mxu0 0
          %2519 = vmatprep.subr.bf16.mxu0 0
          %2520 = vmatpush2.bf16.msra.mxu0 0
          %2521 = vmatprep.subr.bf16.mxu0 0
          %2522 = vmatpush2.bf16.msra.mxu0 0
          %2523 = vmatprep.subr.bf16.mxu0 0
          %2524 = vmatpush2.bf16.msra.mxu0 0
          %2525 = vmatprep.subr.bf16.mxu0 0
          %2526 = vmatpush2.bf16.msra.mxu0 0
          %2527 = vmatprep.subr.bf16.mxu0 0
          %2528 = vmatpush2.bf16.msra.mxu0 0
          %2529 = vmatprep.mubr.bf16.mxu0 0
          %2530 = vmatmul.mubr.bf16.gmra.mxu0 %v2455
          %v2531 = vpop.f32.mrf.mxu0
          %v2532 = vadd.f32 0.0, %v2531
          %v2533 = vpop.f32.mrf.mxu0
          %v2534 = vadd.f32 0.0, %v2533
          %v2535 = vpop.f32.mrf.mxu0
          %v2536 = vpop.f32.mrf.mxu0
          %2537 = vdwg.mxu0
          %v2538 = vadd.f32 %v2451, %v2491
          %v2539 = vadd.f32 %v2452, %v2493
          %v2540 = vadd.f32 %v2453, %v2532
          %v2541 = vadd.f32 %v2454, %v2534
          %v2542 = vxor.u32 %v2538, 2147483648
          %v2543 = vmul.f32 %v2542, 1.442695
          %v2544 = vpow.pop %v2543
          %v2545 = vadd.f32 %v2544, 1.0
          %v2546 = vrcp.pop %v2545
          %v2547 = vmul.f32 1.0, %v2546
          %v2548 = vxor.u32 %v2539, 2147483648
          %v2549 = vmul.f32 %v2548, 1.442695
          %v2550 = vpow.pop %v2549
          %v2551 = vadd.f32 %v2550, 1.0
          %v2552 = vrcp.pop %v2551
          %v2553 = vmul.f32 1.0, %v2552
          %v2554 = vtanh.pop %v2540
          %v2555 = vxor.u32 %v2541, 2147483648
          %v2556 = vmul.f32 %v2555, 1.442695
          %v2557 = vpow.pop %v2556
          %v2558 = vadd.f32 %v2557, 1.0
          %v2559 = vrcp.pop %v2558
          %v2560 = vmul.f32 1.0, %v2559
          %v2561 = vmul.f32 %v2553, %v2446
          %v2562 = vmul.f32 %v2547, %v2554
          %v2563 = vadd.f32 %v2561, %v2562
          %v2564 = vtanh.pop %v2563
          %v2565 = vmul.f32 %v2560, %v2564
          %s2566 = scalar_lea.vmem %s305, 16 [#allocation11]
          %2567 = vst [vmem:[%s2566] sm:$0xff] %v2565
          %v2568 = vld [vmem:[#allocation2 + $0x60] sm:$0xff]
          %v2569 = vld [vmem:[#allocation2 + $0x68] sm:$0xff]
          %v2570 = vld [vmem:[#allocation2 + $0x70] sm:$0xff]
          %v2571 = vld [vmem:[#allocation2 + $0x78] sm:$0xff]
          %v2572 = vpack.c.bf16 %v2565, %v2565
          %2573 = vmatprep.subr.bf16.mxu0 %v2188
          %2574 = vmatpush1.bf16.msra.mxu0 %v2187
          %2575 = vmatprep.subr.bf16.mxu0 %v2184
          %2576 = vmatpush1.bf16.msra.mxu0 %v2183
          %2577 = vmatprep.subr.bf16.mxu0 %v2180
          %2578 = vmatpush1.bf16.msra.mxu0 %v2179
          %2579 = vmatprep.subr.bf16.mxu0 %v2176
          %2580 = vmatpush1.bf16.msra.mxu0 %v2175
          %2581 = vmatprep.subr.bf16.mxu0 %v2172
          %2582 = vmatpush1.bf16.msra.mxu0 %v2171
          %2583 = vmatprep.subr.bf16.mxu0 %v2168
          %2584 = vmatpush1.bf16.msra.mxu0 %v2167
          %2585 = vmatprep.subr.bf16.mxu0 %v2164
          %2586 = vmatpush1.bf16.msra.mxu0 %v2163
          %2587 = vmatprep.subr.bf16.mxu0 %v2160
          %2588 = vmatpush1.bf16.msra.mxu0 %v2159
          %2589 = vmatprep.subr.bf16.mxu0 0
          %2590 = vmatpush2.bf16.msra.mxu0 0
          %2591 = vmatprep.subr.bf16.mxu0 0
          %2592 = vmatpush2.bf16.msra.mxu0 0
          %2593 = vmatprep.subr.bf16.mxu0 0
          %2594 = vmatpush2.bf16.msra.mxu0 0
          %2595 = vmatprep.subr.bf16.mxu0 0
          %2596 = vmatpush2.bf16.msra.mxu0 0
          %2597 = vmatprep.subr.bf16.mxu0 0
          %2598 = vmatpush2.bf16.msra.mxu0 0
          %2599 = vmatprep.subr.bf16.mxu0 0
          %2600 = vmatpush2.bf16.msra.mxu0 0
          %2601 = vmatprep.subr.bf16.mxu0 0
          %2602 = vmatpush2.bf16.msra.mxu0 0
          %2603 = vmatprep.subr.bf16.mxu0 0
          %2604 = vmatpush2.bf16.msra.mxu0 0
          %2605 = vmatprep.mubr.bf16.mxu0 0
          %2606 = vmatmul.mubr.bf16.gmra.mxu0 %v2572
          %v2607 = vpop.f32.mrf.mxu0
          %v2608 = vadd.f32 0.0, %v2607
          %v2609 = vpop.f32.mrf.mxu0
          %v2610 = vadd.f32 0.0, %v2609
          %v2611 = vpop.f32.mrf.mxu0
          %v2612 = vpop.f32.mrf.mxu0
          %2613 = vdwg.mxu0
          %2614 = vmatprep.subr.bf16.mxu0 %v2190
          %2615 = vmatpush1.bf16.msra.mxu0 %v2189
          %2616 = vmatprep.subr.bf16.mxu0 %v2186
          %2617 = vmatpush1.bf16.msra.mxu0 %v2185
          %2618 = vmatprep.subr.bf16.mxu0 %v2182
          %2619 = vmatpush1.bf16.msra.mxu0 %v2181
          %2620 = vmatprep.subr.bf16.mxu0 %v2178
          %2621 = vmatpush1.bf16.msra.mxu0 %v2177
          %2622 = vmatprep.subr.bf16.mxu0 %v2174
          %2623 = vmatpush1.bf16.msra.mxu0 %v2173
          %2624 = vmatprep.subr.bf16.mxu0 %v2170
          %2625 = vmatpush1.bf16.msra.mxu0 %v2169
          %2626 = vmatprep.subr.bf16.mxu0 %v2166
          %2627 = vmatpush1.bf16.msra.mxu0 %v2165
          %2628 = vmatprep.subr.bf16.mxu0 %v2162
          %2629 = vmatpush1.bf16.msra.mxu0 %v2161
          %2630 = vmatprep.subr.bf16.mxu0 0
          %2631 = vmatpush2.bf16.msra.mxu0 0
          %2632 = vmatprep.subr.bf16.mxu0 0
          %2633 = vmatpush2.bf16.msra.mxu0 0
          %2634 = vmatprep.subr.bf16.mxu0 0
          %2635 = vmatpush2.bf16.msra.mxu0 0
          %2636 = vmatprep.subr.bf16.mxu0 0
          %2637 = vmatpush2.bf16.msra.mxu0 0
          %2638 = vmatprep.subr.bf16.mxu0 0
          %2639 = vmatpush2.bf16.msra.mxu0 0
          %2640 = vmatprep.subr.bf16.mxu0 0
          %2641 = vmatpush2.bf16.msra.mxu0 0
          %2642 = vmatprep.subr.bf16.mxu0 0
          %2643 = vmatpush2.bf16.msra.mxu0 0
          %2644 = vmatprep.subr.bf16.mxu0 0
          %2645 = vmatpush2.bf16.msra.mxu0 0
          %2646 = vmatprep.mubr.bf16.mxu0 0
          %2647 = vmatmul.mubr.bf16.gmra.mxu0 %v2572
          %v2648 = vpop.f32.mrf.mxu0
          %v2649 = vadd.f32 0.0, %v2648
          %v2650 = vpop.f32.mrf.mxu0
          %v2651 = vadd.f32 0.0, %v2650
          %v2652 = vpop.f32.mrf.mxu0
          %v2653 = vpop.f32.mrf.mxu0
          %2654 = vdwg.mxu0
          %v2655 = vadd.f32 %v2568, %v2608
          %v2656 = vadd.f32 %v2569, %v2610
          %v2657 = vadd.f32 %v2570, %v2649
          %v2658 = vadd.f32 %v2571, %v2651
          %v2659 = vxor.u32 %v2655, 2147483648
          %v2660 = vmul.f32 %v2659, 1.442695
          %v2661 = vpow.pop %v2660
          %v2662 = vadd.f32 %v2661, 1.0
          %v2663 = vrcp.pop %v2662
          %v2664 = vmul.f32 1.0, %v2663
          %v2665 = vxor.u32 %v2656, 2147483648
          %v2666 = vmul.f32 %v2665, 1.442695
          %v2667 = vpow.pop %v2666
          %v2668 = vadd.f32 %v2667, 1.0
          %v2669 = vrcp.pop %v2668
          %v2670 = vmul.f32 1.0, %v2669
          %v2671 = vtanh.pop %v2657
          %v2672 = vxor.u32 %v2658, 2147483648
          %v2673 = vmul.f32 %v2672, 1.442695
          %v2674 = vpow.pop %v2673
          %v2675 = vadd.f32 %v2674, 1.0
          %v2676 = vrcp.pop %v2675
          %v2677 = vmul.f32 1.0, %v2676
          %v2678 = vmul.f32 %v2670, %v2563
          %v2679 = vmul.f32 %v2664, %v2671
          %v2680 = vadd.f32 %v2678, %v2679
          %v2681 = vtanh.pop %v2680
          %v2682 = vmul.f32 %v2677, %v2681
          %s2683 = scalar_lea.vmem %s305, 24 [#allocation11]
          %2684 = vst [vmem:[%s2683] sm:$0xff] %v2682
          %v2685 = vld [vmem:[#allocation2 + $0x80] sm:$0xff]
          %v2686 = vld [vmem:[#allocation2 + $0x88] sm:$0xff]
          %v2687 = vld [vmem:[#allocation2 + $0x90] sm:$0xff]
          %v2688 = vld [vmem:[#allocation2 + $0x98] sm:$0xff]
          %v2689 = vpack.c.bf16 %v2682, %v2682
          %2690 = vmatprep.subr.bf16.mxu0 %v2188
          %2691 = vmatpush1.bf16.msra.mxu0 %v2187
          %2692 = vmatprep.subr.bf16.mxu0 %v2184
          %2693 = vmatpush1.bf16.msra.mxu0 %v2183
          %2694 = vmatprep.subr.bf16.mxu0 %v2180
          %2695 = vmatpush1.bf16.msra.mxu0 %v2179
          %2696 = vmatprep.subr.bf16.mxu0 %v2176
          %2697 = vmatpush1.bf16.msra.mxu0 %v2175
          %2698 = vmatprep.subr.bf16.mxu0 %v2172
          %2699 = vmatpush1.bf16.msra.mxu0 %v2171
          %2700 = vmatprep.subr.bf16.mxu0 %v2168
          %2701 = vmatpush1.bf16.msra.mxu0 %v2167
          %2702 = vmatprep.subr.bf16.mxu0 %v2164
          %2703 = vmatpush1.bf16.msra.mxu0 %v2163
          %2704 = vmatprep.subr.bf16.mxu0 %v2160
          %2705 = vmatpush1.bf16.msra.mxu0 %v2159
          %2706 = vmatprep.subr.bf16.mxu0 0
          %2707 = vmatpush2.bf16.msra.mxu0 0
          %2708 = vmatprep.subr.bf16.mxu0 0
          %2709 = vmatpush2.bf16.msra.mxu0 0
          %2710 = vmatprep.subr.bf16.mxu0 0
          %2711 = vmatpush2.bf16.msra.mxu0 0
          %2712 = vmatprep.subr.bf16.mxu0 0
          %2713 = vmatpush2.bf16.msra.mxu0 0
          %2714 = vmatprep.subr.bf16.mxu0 0
          %2715 = vmatpush2.bf16.msra.mxu0 0
          %2716 = vmatprep.subr.bf16.mxu0 0
          %2717 = vmatpush2.bf16.msra.mxu0 0
          %2718 = vmatprep.subr.bf16.mxu0 0
          %2719 = vmatpush2.bf16.msra.mxu0 0
          %2720 = vmatprep.subr.bf16.mxu0 0
          %2721 = vmatpush2.bf16.msra.mxu0 0
          %2722 = vmatprep.mubr.bf16.mxu0 0
          %2723 = vmatmul.mubr.bf16.gmra.mxu0 %v2689
          %v2724 = vpop.f32.mrf.mxu0
          %v2725 = vadd.f32 0.0, %v2724
          %v2726 = vpop.f32.mrf.mxu0
          %v2727 = vadd.f32 0.0, %v2726
          %v2728 = vpop.f32.mrf.mxu0
          %v2729 = vpop.f32.mrf.mxu0
          %2730 = vdwg.mxu0
          %2731 = vmatprep.subr.bf16.mxu0 %v2190
          %2732 = vmatpush1.bf16.msra.mxu0 %v2189
          %2733 = vmatprep.subr.bf16.mxu0 %v2186
          %2734 = vmatpush1.bf16.msra.mxu0 %v2185
          %2735 = vmatprep.subr.bf16.mxu0 %v2182
          %2736 = vmatpush1.bf16.msra.mxu0 %v2181
          %2737 = vmatprep.subr.bf16.mxu0 %v2178
          %2738 = vmatpush1.bf16.msra.mxu0 %v2177
          %2739 = vmatprep.subr.bf16.mxu0 %v2174
          %2740 = vmatpush1.bf16.msra.mxu0 %v2173
          %2741 = vmatprep.subr.bf16.mxu0 %v2170
          %2742 = vmatpush1.bf16.msra.mxu0 %v2169
          %2743 = vmatprep.subr.bf16.mxu0 %v2166
          %2744 = vmatpush1.bf16.msra.mxu0 %v2165
          %2745 = vmatprep.subr.bf16.mxu0 %v2162
          %2746 = vmatpush1.bf16.msra.mxu0 %v2161
          %2747 = vmatprep.subr.bf16.mxu0 0
          %2748 = vmatpush2.bf16.msra.mxu0 0
          %2749 = vmatprep.subr.bf16.mxu0 0
          %2750 = vmatpush2.bf16.msra.mxu0 0
          %2751 = vmatprep.subr.bf16.mxu0 0
          %2752 = vmatpush2.bf16.msra.mxu0 0
          %2753 = vmatprep.subr.bf16.mxu0 0
          %2754 = vmatpush2.bf16.msra.mxu0 0
          %2755 = vmatprep.subr.bf16.mxu0 0
          %2756 = vmatpush2.bf16.msra.mxu0 0
          %2757 = vmatprep.subr.bf16.mxu0 0
          %2758 = vmatpush2.bf16.msra.mxu0 0
          %2759 = vmatprep.subr.bf16.mxu0 0
          %2760 = vmatpush2.bf16.msra.mxu0 0
          %2761 = vmatprep.subr.bf16.mxu0 0
          %2762 = vmatpush2.bf16.msra.mxu0 0
          %2763 = vmatprep.mubr.bf16.mxu0 0
          %2764 = vmatmul.mubr.bf16.gmra.mxu0 %v2689
          %v2765 = vpop.f32.mrf.mxu0
          %v2766 = vadd.f32 0.0, %v2765
          %v2767 = vpop.f32.mrf.mxu0
          %v2768 = vadd.f32 0.0, %v2767
          %v2769 = vpop.f32.mrf.mxu0
          %v2770 = vpop.f32.mrf.mxu0
          %2771 = vdwg.mxu0
          %v2772 = vadd.f32 %v2685, %v2725
          %v2773 = vadd.f32 %v2686, %v2727
          %v2774 = vadd.f32 %v2687, %v2766
          %v2775 = vadd.f32 %v2688, %v2768
          %v2776 = vxor.u32 %v2772, 2147483648
          %v2777 = vmul.f32 %v2776, 1.442695
          %v2778 = vpow.pop %v2777
          %v2779 = vadd.f32 %v2778, 1.0
          %v2780 = vrcp.pop %v2779
          %v2781 = vmul.f32 1.0, %v2780
          %v2782 = vxor.u32 %v2773, 2147483648
          %v2783 = vmul.f32 %v2782, 1.442695
          %v2784 = vpow.pop %v2783
          %v2785 = vadd.f32 %v2784, 1.0
          %v2786 = vrcp.pop %v2785
          %v2787 = vmul.f32 1.0, %v2786
          %v2788 = vtanh.pop %v2774
          %v2789 = vxor.u32 %v2775, 2147483648
          %v2790 = vmul.f32 %v2789, 1.442695
          %v2791 = vpow.pop %v2790
          %v2792 = vadd.f32 %v2791, 1.0
          %v2793 = vrcp.pop %v2792
          %v2794 = vmul.f32 1.0, %v2793
          %v2795 = vmul.f32 %v2787, %v2680
          %v2796 = vmul.f32 %v2781, %v2788
          %v2797 = vadd.f32 %v2795, %v2796
          %v2798 = vtanh.pop %v2797
          %v2799 = vmul.f32 %v2794, %v2798
          %s2800 = scalar_lea.vmem %s305, 32 [#allocation11]
          %2801 = vst [vmem:[%s2800] sm:$0xff] %v2799
          %v2802 = vld [vmem:[#allocation2 + $0xa0] sm:$0xff]
          %v2803 = vld [vmem:[#allocation2 + $0xa8] sm:$0xff]
          %v2804 = vld [vmem:[#allocation2 + $0xb0] sm:$0xff]
          %v2805 = vld [vmem:[#allocation2 + $0xb8] sm:$0xff]
          %v2806 = vpack.c.bf16 %v2799, %v2799
          %2807 = vmatprep.subr.bf16.mxu0 %v2188
          %2808 = vmatpush1.bf16.msra.mxu0 %v2187
          %2809 = vmatprep.subr.bf16.mxu0 %v2184
          %2810 = vmatpush1.bf16.msra.mxu0 %v2183
          %2811 = vmatprep.subr.bf16.mxu0 %v2180
          %2812 = vmatpush1.bf16.msra.mxu0 %v2179
          %2813 = vmatprep.subr.bf16.mxu0 %v2176
          %2814 = vmatpush1.bf16.msra.mxu0 %v2175
          %2815 = vmatprep.subr.bf16.mxu0 %v2172
          %2816 = vmatpush1.bf16.msra.mxu0 %v2171
          %2817 = vmatprep.subr.bf16.mxu0 %v2168
          %2818 = vmatpush1.bf16.msra.mxu0 %v2167
          %2819 = vmatprep.subr.bf16.mxu0 %v2164
          %2820 = vmatpush1.bf16.msra.mxu0 %v2163
          %2821 = vmatprep.subr.bf16.mxu0 %v2160
          %2822 = vmatpush1.bf16.msra.mxu0 %v2159
          %2823 = vmatprep.subr.bf16.mxu0 0
          %2824 = vmatpush2.bf16.msra.mxu0 0
          %2825 = vmatprep.subr.bf16.mxu0 0
          %2826 = vmatpush2.bf16.msra.mxu0 0
          %2827 = vmatprep.subr.bf16.mxu0 0
          %2828 = vmatpush2.bf16.msra.mxu0 0
          %2829 = vmatprep.subr.bf16.mxu0 0
          %2830 = vmatpush2.bf16.msra.mxu0 0
          %2831 = vmatprep.subr.bf16.mxu0 0
          %2832 = vmatpush2.bf16.msra.mxu0 0
          %2833 = vmatprep.subr.bf16.mxu0 0
          %2834 = vmatpush2.bf16.msra.mxu0 0
          %2835 = vmatprep.subr.bf16.mxu0 0
          %2836 = vmatpush2.bf16.msra.mxu0 0
          %2837 = vmatprep.subr.bf16.mxu0 0
          %2838 = vmatpush2.bf16.msra.mxu0 0
          %2839 = vmatprep.mubr.bf16.mxu0 0
          %2840 = vmatmul.mubr.bf16.gmra.mxu0 %v2806
          %v2841 = vpop.f32.mrf.mxu0
          %v2842 = vadd.f32 0.0, %v2841
          %v2843 = vpop.f32.mrf.mxu0
          %v2844 = vadd.f32 0.0, %v2843
          %v2845 = vpop.f32.mrf.mxu0
          %v2846 = vpop.f32.mrf.mxu0
          %2847 = vdwg.mxu0
          %2848 = vmatprep.subr.bf16.mxu0 %v2190
          %2849 = vmatpush1.bf16.msra.mxu0 %v2189
          %2850 = vmatprep.subr.bf16.mxu0 %v2186
          %2851 = vmatpush1.bf16.msra.mxu0 %v2185
          %2852 = vmatprep.subr.bf16.mxu0 %v2182
          %2853 = vmatpush1.bf16.msra.mxu0 %v2181
          %2854 = vmatprep.subr.bf16.mxu0 %v2178
          %2855 = vmatpush1.bf16.msra.mxu0 %v2177
          %2856 = vmatprep.subr.bf16.mxu0 %v2174
          %2857 = vmatpush1.bf16.msra.mxu0 %v2173
          %2858 = vmatprep.subr.bf16.mxu0 %v2170
          %2859 = vmatpush1.bf16.msra.mxu0 %v2169
          %2860 = vmatprep.subr.bf16.mxu0 %v2166
          %2861 = vmatpush1.bf16.msra.mxu0 %v2165
          %2862 = vmatprep.subr.bf16.mxu0 %v2162
          %2863 = vmatpush1.bf16.msra.mxu0 %v2161
          %2864 = vmatprep.subr.bf16.mxu0 0
          %2865 = vmatpush2.bf16.msra.mxu0 0
          %2866 = vmatprep.subr.bf16.mxu0 0
          %2867 = vmatpush2.bf16.msra.mxu0 0
          %2868 = vmatprep.subr.bf16.mxu0 0
          %2869 = vmatpush2.bf16.msra.mxu0 0
          %2870 = vmatprep.subr.bf16.mxu0 0
          %2871 = vmatpush2.bf16.msra.mxu0 0
          %2872 = vmatprep.subr.bf16.mxu0 0
          %2873 = vmatpush2.bf16.msra.mxu0 0
          %2874 = vmatprep.subr.bf16.mxu0 0
          %2875 = vmatpush2.bf16.msra.mxu0 0
          %2876 = vmatprep.subr.bf16.mxu0 0
          %2877 = vmatpush2.bf16.msra.mxu0 0
          %2878 = vmatprep.subr.bf16.mxu0 0
          %2879 = vmatpush2.bf16.msra.mxu0 0
          %2880 = vmatprep.mubr.bf16.mxu0 0
          %2881 = vmatmul.mubr.bf16.gmra.mxu0 %v2806
          %v2882 = vpop.f32.mrf.mxu0
          %v2883 = vadd.f32 0.0, %v2882
          %v2884 = vpop.f32.mrf.mxu0
          %v2885 = vadd.f32 0.0, %v2884
          %v2886 = vpop.f32.mrf.mxu0
          %v2887 = vpop.f32.mrf.mxu0
          %2888 = vdwg.mxu0
          %v2889 = vadd.f32 %v2802, %v2842
          %v2890 = vadd.f32 %v2803, %v2844
          %v2891 = vadd.f32 %v2804, %v2883
          %v2892 = vadd.f32 %v2805, %v2885
          %v2893 = vxor.u32 %v2889, 2147483648
          %v2894 = vmul.f32 %v2893, 1.442695
          %v2895 = vpow.pop %v2894
          %v2896 = vadd.f32 %v2895, 1.0
          %v2897 = vrcp.pop %v2896
          %v2898 = vmul.f32 1.0, %v2897
          %v2899 = vxor.u32 %v2890, 2147483648
          %v2900 = vmul.f32 %v2899, 1.442695
          %v2901 = vpow.pop %v2900
          %v2902 = vadd.f32 %v2901, 1.0
          %v2903 = vrcp.pop %v2902
          %v2904 = vmul.f32 1.0, %v2903
          %v2905 = vtanh.pop %v2891
          %v2906 = vxor.u32 %v2892, 2147483648
          %v2907 = vmul.f32 %v2906, 1.442695
          %v2908 = vpow.pop %v2907
          %v2909 = vadd.f32 %v2908, 1.0
          %v2910 = vrcp.pop %v2909
          %v2911 = vmul.f32 1.0, %v2910
          %v2912 = vmul.f32 %v2904, %v2797
          %v2913 = vmul.f32 %v2898, %v2905
          %v2914 = vadd.f32 %v2912, %v2913
          %v2915 = vtanh.pop %v2914
          %v2916 = vmul.f32 %v2911, %v2915
          %s2917 = scalar_lea.vmem %s305, 40 [#allocation11]
          %2918 = vst [vmem:[%s2917] sm:$0xff] %v2916
          %v2919 = vld [vmem:[#allocation2 + $0xc0] sm:$0xff]
          %v2920 = vld [vmem:[#allocation2 + $0xc8] sm:$0xff]
          %v2921 = vld [vmem:[#allocation2 + $0xd0] sm:$0xff]
          %v2922 = vld [vmem:[#allocation2 + $0xd8] sm:$0xff]
          %v2923 = vpack.c.bf16 %v2916, %v2916
          %2924 = vmatprep.subr.bf16.mxu0 %v2188
          %2925 = vmatpush1.bf16.msra.mxu0 %v2187
          %2926 = vmatprep.subr.bf16.mxu0 %v2184
          %2927 = vmatpush1.bf16.msra.mxu0 %v2183
          %2928 = vmatprep.subr.bf16.mxu0 %v2180
          %2929 = vmatpush1.bf16.msra.mxu0 %v2179
          %2930 = vmatprep.subr.bf16.mxu0 %v2176
          %2931 = vmatpush1.bf16.msra.mxu0 %v2175
          %2932 = vmatprep.subr.bf16.mxu0 %v2172
          %2933 = vmatpush1.bf16.msra.mxu0 %v2171
          %2934 = vmatprep.subr.bf16.mxu0 %v2168
          %2935 = vmatpush1.bf16.msra.mxu0 %v2167
          %2936 = vmatprep.subr.bf16.mxu0 %v2164
          %2937 = vmatpush1.bf16.msra.mxu0 %v2163
          %2938 = vmatprep.subr.bf16.mxu0 %v2160
          %2939 = vmatpush1.bf16.msra.mxu0 %v2159
          %2940 = vmatprep.subr.bf16.mxu0 0
          %2941 = vmatpush2.bf16.msra.mxu0 0
          %2942 = vmatprep.subr.bf16.mxu0 0
          %2943 = vmatpush2.bf16.msra.mxu0 0
          %2944 = vmatprep.subr.bf16.mxu0 0
          %2945 = vmatpush2.bf16.msra.mxu0 0
          %2946 = vmatprep.subr.bf16.mxu0 0
          %2947 = vmatpush2.bf16.msra.mxu0 0
          %2948 = vmatprep.subr.bf16.mxu0 0
          %2949 = vmatpush2.bf16.msra.mxu0 0
          %2950 = vmatprep.subr.bf16.mxu0 0
          %2951 = vmatpush2.bf16.msra.mxu0 0
          %2952 = vmatprep.subr.bf16.mxu0 0
          %2953 = vmatpush2.bf16.msra.mxu0 0
          %2954 = vmatprep.subr.bf16.mxu0 0
          %2955 = vmatpush2.bf16.msra.mxu0 0
          %2956 = vmatprep.mubr.bf16.mxu0 0
          %2957 = vmatmul.mubr.bf16.gmra.mxu0 %v2923
          %v2958 = vpop.f32.mrf.mxu0
          %v2959 = vadd.f32 0.0, %v2958
          %v2960 = vpop.f32.mrf.mxu0
          %v2961 = vadd.f32 0.0, %v2960
          %v2962 = vpop.f32.mrf.mxu0
          %v2963 = vpop.f32.mrf.mxu0
          %2964 = vdwg.mxu0
          %2965 = vmatprep.subr.bf16.mxu0 %v2190
          %2966 = vmatpush1.bf16.msra.mxu0 %v2189
          %2967 = vmatprep.subr.bf16.mxu0 %v2186
          %2968 = vmatpush1.bf16.msra.mxu0 %v2185
          %2969 = vmatprep.subr.bf16.mxu0 %v2182
          %2970 = vmatpush1.bf16.msra.mxu0 %v2181
          %2971 = vmatprep.subr.bf16.mxu0 %v2178
          %2972 = vmatpush1.bf16.msra.mxu0 %v2177
          %2973 = vmatprep.subr.bf16.mxu0 %v2174
          %2974 = vmatpush1.bf16.msra.mxu0 %v2173
          %2975 = vmatprep.subr.bf16.mxu0 %v2170
          %2976 = vmatpush1.bf16.msra.mxu0 %v2169
          %2977 = vmatprep.subr.bf16.mxu0 %v2166
          %2978 = vmatpush1.bf16.msra.mxu0 %v2165
          %2979 = vmatprep.subr.bf16.mxu0 %v2162
          %2980 = vmatpush1.bf16.msra.mxu0 %v2161
          %2981 = vmatprep.subr.bf16.mxu0 0
          %2982 = vmatpush2.bf16.msra.mxu0 0
          %2983 = vmatprep.subr.bf16.mxu0 0
          %2984 = vmatpush2.bf16.msra.mxu0 0
          %2985 = vmatprep.subr.bf16.mxu0 0
          %2986 = vmatpush2.bf16.msra.mxu0 0
          %2987 = vmatprep.subr.bf16.mxu0 0
          %2988 = vmatpush2.bf16.msra.mxu0 0
          %2989 = vmatprep.subr.bf16.mxu0 0
          %2990 = vmatpush2.bf16.msra.mxu0 0
          %2991 = vmatprep.subr.bf16.mxu0 0
          %2992 = vmatpush2.bf16.msra.mxu0 0
          %2993 = vmatprep.subr.bf16.mxu0 0
          %2994 = vmatpush2.bf16.msra.mxu0 0
          %2995 = vmatprep.subr.bf16.mxu0 0
          %2996 = vmatpush2.bf16.msra.mxu0 0
          %2997 = vmatprep.mubr.bf16.mxu0 0
          %2998 = vmatmul.mubr.bf16.gmra.mxu0 %v2923
          %v2999 = vpop.f32.mrf.mxu0
          %v3000 = vadd.f32 0.0, %v2999
          %v3001 = vpop.f32.mrf.mxu0
          %v3002 = vadd.f32 0.0, %v3001
          %v3003 = vpop.f32.mrf.mxu0
          %v3004 = vpop.f32.mrf.mxu0
          %3005 = vdwg.mxu0
          %v3006 = vadd.f32 %v2919, %v2959
          %v3007 = vadd.f32 %v2920, %v2961
          %v3008 = vadd.f32 %v2921, %v3000
          %v3009 = vadd.f32 %v2922, %v3002
          %v3010 = vxor.u32 %v3006, 2147483648
          %v3011 = vmul.f32 %v3010, 1.442695
          %v3012 = vpow.pop %v3011
          %v3013 = vadd.f32 %v3012, 1.0
          %v3014 = vrcp.pop %v3013
          %v3015 = vmul.f32 1.0, %v3014
          %v3016 = vxor.u32 %v3007, 2147483648
          %v3017 = vmul.f32 %v3016, 1.442695
          %v3018 = vpow.pop %v3017
          %v3019 = vadd.f32 %v3018, 1.0
          %v3020 = vrcp.pop %v3019
          %v3021 = vmul.f32 1.0, %v3020
          %v3022 = vtanh.pop %v3008
          %v3023 = vxor.u32 %v3009, 2147483648
          %v3024 = vmul.f32 %v3023, 1.442695
          %v3025 = vpow.pop %v3024
          %v3026 = vadd.f32 %v3025, 1.0
          %v3027 = vrcp.pop %v3026
          %v3028 = vmul.f32 1.0, %v3027
          %v3029 = vmul.f32 %v3021, %v2914
          %v3030 = vmul.f32 %v3015, %v3022
          %v3031 = vadd.f32 %v3029, %v3030
          %v3032 = vtanh.pop %v3031
          %v3033 = vmul.f32 %v3028, %v3032
          %s3034 = scalar_lea.vmem %s305, 48 [#allocation11]
          %3035 = vst [vmem:[%s3034] sm:$0xff] %v3033
          %v3036 = vld [vmem:[#allocation2 + $0xe0] sm:$0xff]
          %v3037 = vld [vmem:[#allocation2 + $0xe8] sm:$0xff]
          %v3038 = vld [vmem:[#allocation2 + $0xf0] sm:$0xff]
          %v3039 = vld [vmem:[#allocation2 + $0xf8] sm:$0xff]
          %v3040 = vpack.c.bf16 %v3033, %v3033
          %3041 = vmatprep.subr.bf16.mxu0 %v2188
          %3042 = vmatpush1.bf16.msra.mxu0 %v2187
          %3043 = vmatprep.subr.bf16.mxu0 %v2184
          %3044 = vmatpush1.bf16.msra.mxu0 %v2183
          %3045 = vmatprep.subr.bf16.mxu0 %v2180
          %3046 = vmatpush1.bf16.msra.mxu0 %v2179
          %3047 = vmatprep.subr.bf16.mxu0 %v2176
          %3048 = vmatpush1.bf16.msra.mxu0 %v2175
          %3049 = vmatprep.subr.bf16.mxu0 %v2172
          %3050 = vmatpush1.bf16.msra.mxu0 %v2171
          %3051 = vmatprep.subr.bf16.mxu0 %v2168
          %3052 = vmatpush1.bf16.msra.mxu0 %v2167
          %3053 = vmatprep.subr.bf16.mxu0 %v2164
          %3054 = vmatpush1.bf16.msra.mxu0 %v2163
          %3055 = vmatprep.subr.bf16.mxu0 %v2160
          %3056 = vmatpush1.bf16.msra.mxu0 %v2159
          %3057 = vmatprep.subr.bf16.mxu0 0
          %3058 = vmatpush2.bf16.msra.mxu0 0
          %3059 = vmatprep.subr.bf16.mxu0 0
          %3060 = vmatpush2.bf16.msra.mxu0 0
          %3061 = vmatprep.subr.bf16.mxu0 0
          %3062 = vmatpush2.bf16.msra.mxu0 0
          %3063 = vmatprep.subr.bf16.mxu0 0
          %3064 = vmatpush2.bf16.msra.mxu0 0
          %3065 = vmatprep.subr.bf16.mxu0 0
          %3066 = vmatpush2.bf16.msra.mxu0 0
          %3067 = vmatprep.subr.bf16.mxu0 0
          %3068 = vmatpush2.bf16.msra.mxu0 0
          %3069 = vmatprep.subr.bf16.mxu0 0
          %3070 = vmatpush2.bf16.msra.mxu0 0
          %3071 = vmatprep.subr.bf16.mxu0 0
          %3072 = vmatpush2.bf16.msra.mxu0 0
          %3073 = vmatprep.mubr.bf16.mxu0 0
          %3074 = vmatmul.mubr.bf16.gmra.mxu0 %v3040
          %v3075 = vpop.f32.mrf.mxu0
          %v3076 = vadd.f32 0.0, %v3075
          %v3077 = vpop.f32.mrf.mxu0
          %v3078 = vadd.f32 0.0, %v3077
          %v3079 = vpop.f32.mrf.mxu0
          %v3080 = vpop.f32.mrf.mxu0
          %3081 = vdwg.mxu0
          %3082 = vmatprep.subr.bf16.mxu0 %v2190
          %3083 = vmatpush1.bf16.msra.mxu0 %v2189
          %3084 = vmatprep.subr.bf16.mxu0 %v2186
          %3085 = vmatpush1.bf16.msra.mxu0 %v2185
          %3086 = vmatprep.subr.bf16.mxu0 %v2182
          %3087 = vmatpush1.bf16.msra.mxu0 %v2181
          %3088 = vmatprep.subr.bf16.mxu0 %v2178
          %3089 = vmatpush1.bf16.msra.mxu0 %v2177
          %3090 = vmatprep.subr.bf16.mxu0 %v2174
          %3091 = vmatpush1.bf16.msra.mxu0 %v2173
          %3092 = vmatprep.subr.bf16.mxu0 %v2170
          %3093 = vmatpush1.bf16.msra.mxu0 %v2169
          %3094 = vmatprep.subr.bf16.mxu0 %v2166
          %3095 = vmatpush1.bf16.msra.mxu0 %v2165
          %3096 = vmatprep.subr.bf16.mxu0 %v2162
          %3097 = vmatpush1.bf16.msra.mxu0 %v2161
          %3098 = vmatprep.subr.bf16.mxu0 0
          %3099 = vmatpush2.bf16.msra.mxu0 0
          %3100 = vmatprep.subr.bf16.mxu0 0
          %3101 = vmatpush2.bf16.msra.mxu0 0
          %3102 = vmatprep.subr.bf16.mxu0 0
          %3103 = vmatpush2.bf16.msra.mxu0 0
          %3104 = vmatprep.subr.bf16.mxu0 0
          %3105 = vmatpush2.bf16.msra.mxu0 0
          %3106 = vmatprep.subr.bf16.mxu0 0
          %3107 = vmatpush2.bf16.msra.mxu0 0
          %3108 = vmatprep.subr.bf16.mxu0 0
          %3109 = vmatpush2.bf16.msra.mxu0 0
          %3110 = vmatprep.subr.bf16.mxu0 0
          %3111 = vmatpush2.bf16.msra.mxu0 0
          %3112 = vmatprep.subr.bf16.mxu0 0
          %3113 = vmatpush2.bf16.msra.mxu0 0
          %3114 = vmatprep.mubr.bf16.mxu0 0
          %3115 = vmatmul.mubr.bf16.gmra.mxu0 %v3040
          %v3116 = vpop.f32.mrf.mxu0
          %v3117 = vadd.f32 0.0, %v3116
          %v3118 = vpop.f32.mrf.mxu0
          %v3119 = vadd.f32 0.0, %v3118
          %v3120 = vpop.f32.mrf.mxu0
          %v3121 = vpop.f32.mrf.mxu0
          %3122 = vdwg.mxu0
          %v3123 = vadd.f32 %v3036, %v3076
          %v3124 = vadd.f32 %v3037, %v3078
          %v3125 = vadd.f32 %v3038, %v3117
          %v3126 = vadd.f32 %v3039, %v3119
          %v3127 = vxor.u32 %v3123, 2147483648
          %v3128 = vmul.f32 %v3127, 1.442695
          %v3129 = vpow.pop %v3128
          %v3130 = vadd.f32 %v3129, 1.0
          %v3131 = vrcp.pop %v3130
          %v3132 = vmul.f32 1.0, %v3131
          %v3133 = vxor.u32 %v3124, 2147483648
          %v3134 = vmul.f32 %v3133, 1.442695
          %v3135 = vpow.pop %v3134
          %v3136 = vadd.f32 %v3135, 1.0
          %v3137 = vrcp.pop %v3136
          %v3138 = vmul.f32 1.0, %v3137
          %v3139 = vtanh.pop %v3125
          %v3140 = vxor.u32 %v3126, 2147483648
          %v3141 = vmul.f32 %v3140, 1.442695
          %v3142 = vpow.pop %v3141
          %v3143 = vadd.f32 %v3142, 1.0
          %v3144 = vrcp.pop %v3143
          %v3145 = vmul.f32 1.0, %v3144
          %v3146 = vmul.f32 %v3138, %v3031
          %v3147 = vmul.f32 %v3132, %v3139
          %v3148 = vadd.f32 %v3146, %v3147
          %v3149 = vtanh.pop %v3148
          %v3150 = vmul.f32 %v3145, %v3149
          %s3151 = scalar_lea.vmem %s305, 56 [#allocation11]
          %3152 = vst [vmem:[%s3151] sm:$0xff] %v3150
        $region56: #{tpu_custom_call.1} parent=35 // pred_fallthru
          _
        %p3153 = scmp.eq.s32.totalorder %s25, 1
        // Predicated region
        $region57: #{tpu_custom_call.1} parent=35 // pred_check
          %p3154 = pneg %p3153
        $region58: #{tpu_custom_call.1} parent=35 // pred_check_branch
          %3156 = sbr.rel (%p3154) target = $region60
        $region59: #{tpu_custom_call.1} parent=35 // pred_region
          %v3157 = vld [vmem:[#allocation2 + $0xe0] sm:$0xff]
          %v3158 = vld [vmem:[#allocation2 + $0xe8] sm:$0xff]
          %v3159 = vld [vmem:[#allocation2 + $0xf0] sm:$0xff]
          %v3160 = vld [vmem:[#allocation2 + $0xf8] sm:$0xff]
          %v3193 = vunpack.c.l.b16 %v2023
          %v3194 = vunpack.c.h.b16 %v2023
          %v3195 = vunpack.c.l.b16 %v2024
          %v3196 = vunpack.c.h.b16 %v2024
          %v3197 = vunpack.c.l.b16 %v2025
          %v3198 = vunpack.c.h.b16 %v2025
          %v3199 = vunpack.c.l.b16 %v2026
          %v3200 = vunpack.c.h.b16 %v2026
          %v3201 = vunpack.c.l.b16 %v2027
          %v3202 = vunpack.c.h.b16 %v2027
          %v3203 = vunpack.c.l.b16 %v2028
          %v3204 = vunpack.c.h.b16 %v2028
          %v3205 = vunpack.c.l.b16 %v2029
          %v3206 = vunpack.c.h.b16 %v2029
          %v3207 = vunpack.c.l.b16 %v2030
          %v3208 = vunpack.c.h.b16 %v2030
          %v3209 = vunpack.c.l.b16 %v2031
          %v3210 = vunpack.c.h.b16 %v2031
          %v3211 = vunpack.c.l.b16 %v2032
          %v3212 = vunpack.c.h.b16 %v2032
          %v3213 = vunpack.c.l.b16 %v2033
          %v3214 = vunpack.c.h.b16 %v2033
          %v3215 = vunpack.c.l.b16 %v2034
          %v3216 = vunpack.c.h.b16 %v2034
          %v3217 = vunpack.c.l.b16 %v2035
          %v3218 = vunpack.c.h.b16 %v2035
          %v3219 = vunpack.c.l.b16 %v2036
          %v3220 = vunpack.c.h.b16 %v2036
          %v3221 = vunpack.c.l.b16 %v2037
          %v3222 = vunpack.c.h.b16 %v2037
          %v3223 = vunpack.c.l.b16 %v2038
          %v3224 = vunpack.c.h.b16 %v2038
          %v3225 = vunpack.c.l.b16 %v2039
          %v3226 = vunpack.c.h.b16 %v2039
          %v3227 = vunpack.c.l.b16 %v2040
          %v3228 = vunpack.c.h.b16 %v2040
          %v3229 = vunpack.c.l.b16 %v2041
          %v3230 = vunpack.c.h.b16 %v2041
          %v3231 = vunpack.c.l.b16 %v2042
          %v3232 = vunpack.c.h.b16 %v2042
          %v3233 = vunpack.c.l.b16 %v2043
          %v3234 = vunpack.c.h.b16 %v2043
          %v3235 = vunpack.c.l.b16 %v2044
          %v3236 = vunpack.c.h.b16 %v2044
          %v3237 = vunpack.c.l.b16 %v2045
          %v3238 = vunpack.c.h.b16 %v2045
          %v3239 = vunpack.c.l.b16 %v2046
          %v3240 = vunpack.c.h.b16 %v2046
          %v3241 = vunpack.c.l.b16 %v2047
          %v3242 = vunpack.c.h.b16 %v2047
          %v3243 = vunpack.c.l.b16 %v2048
          %v3244 = vunpack.c.h.b16 %v2048
          %v3245 = vunpack.c.l.b16 %v2049
          %v3246 = vunpack.c.h.b16 %v2049
          %v3247 = vunpack.c.l.b16 %v2050
          %v3248 = vunpack.c.h.b16 %v2050
          %v3249 = vunpack.c.l.b16 %v2051
          %v3250 = vunpack.c.h.b16 %v2051
          %v3251 = vunpack.c.l.b16 %v2052
          %v3252 = vunpack.c.h.b16 %v2052
          %v3253 = vunpack.c.l.b16 %v2053
          %v3254 = vunpack.c.h.b16 %v2053
          %v3255 = vunpack.c.l.b16 %v2054
          %v3256 = vunpack.c.h.b16 %v2054
          %v3257 = vpack.c.b16 %v3197, %v3193
          %v3258 = vpack.c.b16 %v3198, %v3194
          %v3259 = vpack.c.b16 %v3199, %v3195
          %v3260 = vpack.c.b16 %v3200, %v3196
          %v3261 = vpack.c.b16 %v3205, %v3201
          %v3262 = vpack.c.b16 %v3206, %v3202
          %v3263 = vpack.c.b16 %v3207, %v3203
          %v3264 = vpack.c.b16 %v3208, %v3204
          %v3265 = vpack.c.b16 %v3213, %v3209
          %v3266 = vpack.c.b16 %v3214, %v3210
          %v3267 = vpack.c.b16 %v3215, %v3211
          %v3268 = vpack.c.b16 %v3216, %v3212
          %v3269 = vpack.c.b16 %v3221, %v3217
          %v3270 = vpack.c.b16 %v3222, %v3218
          %v3271 = vpack.c.b16 %v3223, %v3219
          %v3272 = vpack.c.b16 %v3224, %v3220
          %v3273 = vpack.c.b16 %v3229, %v3225
          %v3274 = vpack.c.b16 %v3230, %v3226
          %v3275 = vpack.c.b16 %v3231, %v3227
          %v3276 = vpack.c.b16 %v3232, %v3228
          %v3277 = vpack.c.b16 %v3237, %v3233
          %v3278 = vpack.c.b16 %v3238, %v3234
          %v3279 = vpack.c.b16 %v3239, %v3235
          %v3280 = vpack.c.b16 %v3240, %v3236
          %v3281 = vpack.c.b16 %v3245, %v3241
          %v3282 = vpack.c.b16 %v3246, %v3242
          %v3283 = vpack.c.b16 %v3247, %v3243
          %v3284 = vpack.c.b16 %v3248, %v3244
          %v3285 = vpack.c.b16 %v3253, %v3249
          %v3286 = vpack.c.b16 %v3254, %v3250
          %v3287 = vpack.c.b16 %v3255, %v3251
          %v3288 = vpack.c.b16 %v3256, %v3252
          %3321 = vmatprep.subr.bf16.mxu0 %v3286
          %3322 = vmatpush1.bf16.msra.mxu0 %v3285
          %3323 = vmatprep.subr.bf16.mxu0 %v3282
          %3324 = vmatpush1.bf16.msra.mxu0 %v3281
          %3325 = vmatprep.subr.bf16.mxu0 %v3278
          %3326 = vmatpush1.bf16.msra.mxu0 %v3277
          %3327 = vmatprep.subr.bf16.mxu0 %v3274
          %3328 = vmatpush1.bf16.msra.mxu0 %v3273
          %3329 = vmatprep.subr.bf16.mxu0 %v3270
          %3330 = vmatpush1.bf16.msra.mxu0 %v3269
          %3331 = vmatprep.subr.bf16.mxu0 %v3266
          %3332 = vmatpush1.bf16.msra.mxu0 %v3265
          %3333 = vmatprep.subr.bf16.mxu0 %v3262
          %3334 = vmatpush1.bf16.msra.mxu0 %v3261
          %3335 = vmatprep.subr.bf16.mxu0 %v3258
          %3336 = vmatpush1.bf16.msra.mxu0 %v3257
          %3337 = vmatprep.subr.bf16.mxu0 0
          %3338 = vmatpush2.bf16.msra.mxu0 0
          %3339 = vmatprep.subr.bf16.mxu0 0
          %3340 = vmatpush2.bf16.msra.mxu0 0
          %3341 = vmatprep.subr.bf16.mxu0 0
          %3342 = vmatpush2.bf16.msra.mxu0 0
          %3343 = vmatprep.subr.bf16.mxu0 0
          %3344 = vmatpush2.bf16.msra.mxu0 0
          %3345 = vmatprep.subr.bf16.mxu0 0
          %3346 = vmatpush2.bf16.msra.mxu0 0
          %3347 = vmatprep.subr.bf16.mxu0 0
          %3348 = vmatpush2.bf16.msra.mxu0 0
          %3349 = vmatprep.subr.bf16.mxu0 0
          %3350 = vmatpush2.bf16.msra.mxu0 0
          %3351 = vmatprep.subr.bf16.mxu0 0
          %3352 = vmatpush2.bf16.msra.mxu0 0
          %3353 = vmatprep.mubr.bf16.mxu0 0
          %3354 = vmatmul.mubr.bf16.gmra.mxu0 0
          %v3355 = vpop.f32.mrf.mxu0
          %v3356 = vadd.f32 0.0, %v3355
          %v3357 = vpop.f32.mrf.mxu0
          %v3358 = vadd.f32 0.0, %v3357
          %v3359 = vpop.f32.mrf.mxu0
          %v3360 = vpop.f32.mrf.mxu0
          %3361 = vdwg.mxu0
          %3362 = vmatprep.subr.bf16.mxu0 %v3288
          %3363 = vmatpush1.bf16.msra.mxu0 %v3287
          %3364 = vmatprep.subr.bf16.mxu0 %v3284
          %3365 = vmatpush1.bf16.msra.mxu0 %v3283
          %3366 = vmatprep.subr.bf16.mxu0 %v3280
          %3367 = vmatpush1.bf16.msra.mxu0 %v3279
          %3368 = vmatprep.subr.bf16.mxu0 %v3276
          %3369 = vmatpush1.bf16.msra.mxu0 %v3275
          %3370 = vmatprep.subr.bf16.mxu0 %v3272
          %3371 = vmatpush1.bf16.msra.mxu0 %v3271
          %3372 = vmatprep.subr.bf16.mxu0 %v3268
          %3373 = vmatpush1.bf16.msra.mxu0 %v3267
          %3374 = vmatprep.subr.bf16.mxu0 %v3264
          %3375 = vmatpush1.bf16.msra.mxu0 %v3263
          %3376 = vmatprep.subr.bf16.mxu0 %v3260
          %3377 = vmatpush1.bf16.msra.mxu0 %v3259
          %3378 = vmatprep.subr.bf16.mxu0 0
          %3379 = vmatpush2.bf16.msra.mxu0 0
          %3380 = vmatprep.subr.bf16.mxu0 0
          %3381 = vmatpush2.bf16.msra.mxu0 0
          %3382 = vmatprep.subr.bf16.mxu0 0
          %3383 = vmatpush2.bf16.msra.mxu0 0
          %3384 = vmatprep.subr.bf16.mxu0 0
          %3385 = vmatpush2.bf16.msra.mxu0 0
          %3386 = vmatprep.subr.bf16.mxu0 0
          %3387 = vmatpush2.bf16.msra.mxu0 0
          %3388 = vmatprep.subr.bf16.mxu0 0
          %3389 = vmatpush2.bf16.msra.mxu0 0
          %3390 = vmatprep.subr.bf16.mxu0 0
          %3391 = vmatpush2.bf16.msra.mxu0 0
          %3392 = vmatprep.subr.bf16.mxu0 0
          %3393 = vmatpush2.bf16.msra.mxu0 0
          %3394 = vmatprep.mubr.bf16.mxu0 0
          %3395 = vmatmul.mubr.bf16.gmra.mxu0 0
          %v3396 = vpop.f32.mrf.mxu0
          %v3397 = vadd.f32 0.0, %v3396
          %v3398 = vpop.f32.mrf.mxu0
          %v3399 = vadd.f32 0.0, %v3398
          %v3400 = vpop.f32.mrf.mxu0
          %v3401 = vpop.f32.mrf.mxu0
          %3402 = vdwg.mxu0
          %v3403 = vadd.f32 %v3157, %v3356
          %v3404 = vadd.f32 %v3158, %v3358
          %v3405 = vadd.f32 %v3159, %v3397
          %v3406 = vadd.f32 %v3160, %v3399
          %v3407 = vxor.u32 %v3403, 2147483648
          %v3408 = vmul.f32 %v3407, 1.442695
          %v3409 = vpow.pop %v3408
          %v3410 = vadd.f32 %v3409, 1.0
          %v3411 = vrcp.pop %v3410
          %v3412 = vmul.f32 1.0, %v3411
          %v3413 = vxor.u32 %v3404, 2147483648
          %v3414 = vmul.f32 %v3413, 1.442695
          %v3415 = vpow.pop %v3414
          %v3416 = vadd.f32 %v3415, 1.0
          %v3417 = vrcp.pop %v3416
          %v3418 = vmul.f32 1.0, %v3417
          %v3419 = vtanh.pop %v3405
          %v3420 = vxor.u32 %v3406, 2147483648
          %v3421 = vmul.f32 %v3420, 1.442695
          %v3422 = vpow.pop %v3421
          %v3423 = vadd.f32 %v3422, 1.0
          %v3424 = vrcp.pop %v3423
          %v3425 = vmul.f32 1.0, %v3424
          %v3426 = vmul.f32 %v3418, 0.0
          %v3427 = vmul.f32 %v3412, %v3419
          %v3428 = vadd.f32 %v3426, %v3427
          %v3429 = vtanh.pop %v3428
          %v3430 = vmul.f32 %v3425, %v3429
          %s3431 = scalar_lea.vmem %s305, 56 [#allocation11]
          %3432 = vst [vmem:[%s3431] sm:$0xff] %v3430
          %v3433 = vld [vmem:[#allocation2 + $0xc0] sm:$0xff]
          %v3434 = vld [vmem:[#allocation2 + $0xc8] sm:$0xff]
          %v3435 = vld [vmem:[#allocation2 + $0xd0] sm:$0xff]
          %v3436 = vld [vmem:[#allocation2 + $0xd8] sm:$0xff]
          %v3437 = vpack.c.bf16 %v3430, %v3430
          %3438 = vmatprep.subr.bf16.mxu0 %v3286
          %3439 = vmatpush1.bf16.msra.mxu0 %v3285
          %3440 = vmatprep.subr.bf16.mxu0 %v3282
          %3441 = vmatpush1.bf16.msra.mxu0 %v3281
          %3442 = vmatprep.subr.bf16.mxu0 %v3278
          %3443 = vmatpush1.bf16.msra.mxu0 %v3277
          %3444 = vmatprep.subr.bf16.mxu0 %v3274
          %3445 = vmatpush1.bf16.msra.mxu0 %v3273
          %3446 = vmatprep.subr.bf16.mxu0 %v3270
          %3447 = vmatpush1.bf16.msra.mxu0 %v3269
          %3448 = vmatprep.subr.bf16.mxu0 %v3266
          %3449 = vmatpush1.bf16.msra.mxu0 %v3265
          %3450 = vmatprep.subr.bf16.mxu0 %v3262
          %3451 = vmatpush1.bf16.msra.mxu0 %v3261
          %3452 = vmatprep.subr.bf16.mxu0 %v3258
          %3453 = vmatpush1.bf16.msra.mxu0 %v3257
          %3454 = vmatprep.subr.bf16.mxu0 0
          %3455 = vmatpush2.bf16.msra.mxu0 0
          %3456 = vmatprep.subr.bf16.mxu0 0
          %3457 = vmatpush2.bf16.msra.mxu0 0
          %3458 = vmatprep.subr.bf16.mxu0 0
          %3459 = vmatpush2.bf16.msra.mxu0 0
          %3460 = vmatprep.subr.bf16.mxu0 0
          %3461 = vmatpush2.bf16.msra.mxu0 0
          %3462 = vmatprep.subr.bf16.mxu0 0
          %3463 = vmatpush2.bf16.msra.mxu0 0
          %3464 = vmatprep.subr.bf16.mxu0 0
          %3465 = vmatpush2.bf16.msra.mxu0 0
          %3466 = vmatprep.subr.bf16.mxu0 0
          %3467 = vmatpush2.bf16.msra.mxu0 0
          %3468 = vmatprep.subr.bf16.mxu0 0
          %3469 = vmatpush2.bf16.msra.mxu0 0
          %3470 = vmatprep.mubr.bf16.mxu0 0
          %3471 = vmatmul.mubr.bf16.gmra.mxu0 %v3437
          %v3472 = vpop.f32.mrf.mxu0
          %v3473 = vadd.f32 0.0, %v3472
          %v3474 = vpop.f32.mrf.mxu0
          %v3475 = vadd.f32 0.0, %v3474
          %v3476 = vpop.f32.mrf.mxu0
          %v3477 = vpop.f32.mrf.mxu0
          %3478 = vdwg.mxu0
          %3479 = vmatprep.subr.bf16.mxu0 %v3288
          %3480 = vmatpush1.bf16.msra.mxu0 %v3287
          %3481 = vmatprep.subr.bf16.mxu0 %v3284
          %3482 = vmatpush1.bf16.msra.mxu0 %v3283
          %3483 = vmatprep.subr.bf16.mxu0 %v3280
          %3484 = vmatpush1.bf16.msra.mxu0 %v3279
          %3485 = vmatprep.subr.bf16.mxu0 %v3276
          %3486 = vmatpush1.bf16.msra.mxu0 %v3275
          %3487 = vmatprep.subr.bf16.mxu0 %v3272
          %3488 = vmatpush1.bf16.msra.mxu0 %v3271
          %3489 = vmatprep.subr.bf16.mxu0 %v3268
          %3490 = vmatpush1.bf16.msra.mxu0 %v3267
          %3491 = vmatprep.subr.bf16.mxu0 %v3264
          %3492 = vmatpush1.bf16.msra.mxu0 %v3263
          %3493 = vmatprep.subr.bf16.mxu0 %v3260
          %3494 = vmatpush1.bf16.msra.mxu0 %v3259
          %3495 = vmatprep.subr.bf16.mxu0 0
          %3496 = vmatpush2.bf16.msra.mxu0 0
          %3497 = vmatprep.subr.bf16.mxu0 0
          %3498 = vmatpush2.bf16.msra.mxu0 0
          %3499 = vmatprep.subr.bf16.mxu0 0
          %3500 = vmatpush2.bf16.msra.mxu0 0
          %3501 = vmatprep.subr.bf16.mxu0 0
          %3502 = vmatpush2.bf16.msra.mxu0 0
          %3503 = vmatprep.subr.bf16.mxu0 0
          %3504 = vmatpush2.bf16.msra.mxu0 0
          %3505 = vmatprep.subr.bf16.mxu0 0
          %3506 = vmatpush2.bf16.msra.mxu0 0
          %3507 = vmatprep.subr.bf16.mxu0 0
          %3508 = vmatpush2.bf16.msra.mxu0 0
          %3509 = vmatprep.subr.bf16.mxu0 0
          %3510 = vmatpush2.bf16.msra.mxu0 0
          %3511 = vmatprep.mubr.bf16.mxu0 0
          %3512 = vmatmul.mubr.bf16.gmra.mxu0 %v3437
          %v3513 = vpop.f32.mrf.mxu0
          %v3514 = vadd.f32 0.0, %v3513
          %v3515 = vpop.f32.mrf.mxu0
          %v3516 = vadd.f32 0.0, %v3515
          %v3517 = vpop.f32.mrf.mxu0
          %v3518 = vpop.f32.mrf.mxu0
          %3519 = vdwg.mxu0
          %v3520 = vadd.f32 %v3433, %v3473
          %v3521 = vadd.f32 %v3434, %v3475
          %v3522 = vadd.f32 %v3435, %v3514
          %v3523 = vadd.f32 %v3436, %v3516
          %v3524 = vxor.u32 %v3520, 2147483648
          %v3525 = vmul.f32 %v3524, 1.442695
          %v3526 = vpow.pop %v3525
          %v3527 = vadd.f32 %v3526, 1.0
          %v3528 = vrcp.pop %v3527
          %v3529 = vmul.f32 1.0, %v3528
          %v3530 = vxor.u32 %v3521, 2147483648
          %v3531 = vmul.f32 %v3530, 1.442695
          %v3532 = vpow.pop %v3531
          %v3533 = vadd.f32 %v3532, 1.0
          %v3534 = vrcp.pop %v3533
          %v3535 = vmul.f32 1.0, %v3534
          %v3536 = vtanh.pop %v3522
          %v3537 = vxor.u32 %v3523, 2147483648
          %v3538 = vmul.f32 %v3537, 1.442695
          %v3539 = vpow.pop %v3538
          %v3540 = vadd.f32 %v3539, 1.0
          %v3541 = vrcp.pop %v3540
          %v3542 = vmul.f32 1.0, %v3541
          %v3543 = vmul.f32 %v3535, %v3428
          %v3544 = vmul.f32 %v3529, %v3536
          %v3545 = vadd.f32 %v3543, %v3544
          %v3546 = vtanh.pop %v3545
          %v3547 = vmul.f32 %v3542, %v3546
          %s3548 = scalar_lea.vmem %s305, 48 [#allocation11]
          %3549 = vst [vmem:[%s3548] sm:$0xff] %v3547
          %v3550 = vld [vmem:[#allocation2 + $0xa0] sm:$0xff]
          %v3551 = vld [vmem:[#allocation2 + $0xa8] sm:$0xff]
          %v3552 = vld [vmem:[#allocation2 + $0xb0] sm:$0xff]
          %v3553 = vld [vmem:[#allocation2 + $0xb8] sm:$0xff]
          %v3554 = vpack.c.bf16 %v3547, %v3547
          %3555 = vmatprep.subr.bf16.mxu0 %v3286
          %3556 = vmatpush1.bf16.msra.mxu0 %v3285
          %3557 = vmatprep.subr.bf16.mxu0 %v3282
          %3558 = vmatpush1.bf16.msra.mxu0 %v3281
          %3559 = vmatprep.subr.bf16.mxu0 %v3278
          %3560 = vmatpush1.bf16.msra.mxu0 %v3277
          %3561 = vmatprep.subr.bf16.mxu0 %v3274
          %3562 = vmatpush1.bf16.msra.mxu0 %v3273
          %3563 = vmatprep.subr.bf16.mxu0 %v3270
          %3564 = vmatpush1.bf16.msra.mxu0 %v3269
          %3565 = vmatprep.subr.bf16.mxu0 %v3266
          %3566 = vmatpush1.bf16.msra.mxu0 %v3265
          %3567 = vmatprep.subr.bf16.mxu0 %v3262
          %3568 = vmatpush1.bf16.msra.mxu0 %v3261
          %3569 = vmatprep.subr.bf16.mxu0 %v3258
          %3570 = vmatpush1.bf16.msra.mxu0 %v3257
          %3571 = vmatprep.subr.bf16.mxu0 0
          %3572 = vmatpush2.bf16.msra.mxu0 0
          %3573 = vmatprep.subr.bf16.mxu0 0
          %3574 = vmatpush2.bf16.msra.mxu0 0
          %3575 = vmatprep.subr.bf16.mxu0 0
          %3576 = vmatpush2.bf16.msra.mxu0 0
          %3577 = vmatprep.subr.bf16.mxu0 0
          %3578 = vmatpush2.bf16.msra.mxu0 0
          %3579 = vmatprep.subr.bf16.mxu0 0
          %3580 = vmatpush2.bf16.msra.mxu0 0
          %3581 = vmatprep.subr.bf16.mxu0 0
          %3582 = vmatpush2.bf16.msra.mxu0 0
          %3583 = vmatprep.subr.bf16.mxu0 0
          %3584 = vmatpush2.bf16.msra.mxu0 0
          %3585 = vmatprep.subr.bf16.mxu0 0
          %3586 = vmatpush2.bf16.msra.mxu0 0
          %3587 = vmatprep.mubr.bf16.mxu0 0
          %3588 = vmatmul.mubr.bf16.gmra.mxu0 %v3554
          %v3589 = vpop.f32.mrf.mxu0
          %v3590 = vadd.f32 0.0, %v3589
          %v3591 = vpop.f32.mrf.mxu0
          %v3592 = vadd.f32 0.0, %v3591
          %v3593 = vpop.f32.mrf.mxu0
          %v3594 = vpop.f32.mrf.mxu0
          %3595 = vdwg.mxu0
          %3596 = vmatprep.subr.bf16.mxu0 %v3288
          %3597 = vmatpush1.bf16.msra.mxu0 %v3287
          %3598 = vmatprep.subr.bf16.mxu0 %v3284
          %3599 = vmatpush1.bf16.msra.mxu0 %v3283
          %3600 = vmatprep.subr.bf16.mxu0 %v3280
          %3601 = vmatpush1.bf16.msra.mxu0 %v3279
          %3602 = vmatprep.subr.bf16.mxu0 %v3276
          %3603 = vmatpush1.bf16.msra.mxu0 %v3275
          %3604 = vmatprep.subr.bf16.mxu0 %v3272
          %3605 = vmatpush1.bf16.msra.mxu0 %v3271
          %3606 = vmatprep.subr.bf16.mxu0 %v3268
          %3607 = vmatpush1.bf16.msra.mxu0 %v3267
          %3608 = vmatprep.subr.bf16.mxu0 %v3264
          %3609 = vmatpush1.bf16.msra.mxu0 %v3263
          %3610 = vmatprep.subr.bf16.mxu0 %v3260
          %3611 = vmatpush1.bf16.msra.mxu0 %v3259
          %3612 = vmatprep.subr.bf16.mxu0 0
          %3613 = vmatpush2.bf16.msra.mxu0 0
          %3614 = vmatprep.subr.bf16.mxu0 0
          %3615 = vmatpush2.bf16.msra.mxu0 0
          %3616 = vmatprep.subr.bf16.mxu0 0
          %3617 = vmatpush2.bf16.msra.mxu0 0
          %3618 = vmatprep.subr.bf16.mxu0 0
          %3619 = vmatpush2.bf16.msra.mxu0 0
          %3620 = vmatprep.subr.bf16.mxu0 0
          %3621 = vmatpush2.bf16.msra.mxu0 0
          %3622 = vmatprep.subr.bf16.mxu0 0
          %3623 = vmatpush2.bf16.msra.mxu0 0
          %3624 = vmatprep.subr.bf16.mxu0 0
          %3625 = vmatpush2.bf16.msra.mxu0 0
          %3626 = vmatprep.subr.bf16.mxu0 0
          %3627 = vmatpush2.bf16.msra.mxu0 0
          %3628 = vmatprep.mubr.bf16.mxu0 0
          %3629 = vmatmul.mubr.bf16.gmra.mxu0 %v3554
          %v3630 = vpop.f32.mrf.mxu0
          %v3631 = vadd.f32 0.0, %v3630
          %v3632 = vpop.f32.mrf.mxu0
          %v3633 = vadd.f32 0.0, %v3632
          %v3634 = vpop.f32.mrf.mxu0
          %v3635 = vpop.f32.mrf.mxu0
          %3636 = vdwg.mxu0
          %v3637 = vadd.f32 %v3550, %v3590
          %v3638 = vadd.f32 %v3551, %v3592
          %v3639 = vadd.f32 %v3552, %v3631
          %v3640 = vadd.f32 %v3553, %v3633
          %v3641 = vxor.u32 %v3637, 2147483648
          %v3642 = vmul.f32 %v3641, 1.442695
          %v3643 = vpow.pop %v3642
          %v3644 = vadd.f32 %v3643, 1.0
          %v3645 = vrcp.pop %v3644
          %v3646 = vmul.f32 1.0, %v3645
          %v3647 = vxor.u32 %v3638, 2147483648
          %v3648 = vmul.f32 %v3647, 1.442695
          %v3649 = vpow.pop %v3648
          %v3650 = vadd.f32 %v3649, 1.0
          %v3651 = vrcp.pop %v3650
          %v3652 = vmul.f32 1.0, %v3651
          %v3653 = vtanh.pop %v3639
          %v3654 = vxor.u32 %v3640, 2147483648
          %v3655 = vmul.f32 %v3654, 1.442695
          %v3656 = vpow.pop %v3655
          %v3657 = vadd.f32 %v3656, 1.0
          %v3658 = vrcp.pop %v3657
          %v3659 = vmul.f32 1.0, %v3658
          %v3660 = vmul.f32 %v3652, %v3545
          %v3661 = vmul.f32 %v3646, %v3653
          %v3662 = vadd.f32 %v3660, %v3661
          %v3663 = vtanh.pop %v3662
          %v3664 = vmul.f32 %v3659, %v3663
          %s3665 = scalar_lea.vmem %s305, 40 [#allocation11]
          %3666 = vst [vmem:[%s3665] sm:$0xff] %v3664
          %v3667 = vld [vmem:[#allocation2 + $0x80] sm:$0xff]
          %v3668 = vld [vmem:[#allocation2 + $0x88] sm:$0xff]
          %v3669 = vld [vmem:[#allocation2 + $0x90] sm:$0xff]
          %v3670 = vld [vmem:[#allocation2 + $0x98] sm:$0xff]
          %v3671 = vpack.c.bf16 %v3664, %v3664
          %3672 = vmatprep.subr.bf16.mxu0 %v3286
          %3673 = vmatpush1.bf16.msra.mxu0 %v3285
          %3674 = vmatprep.subr.bf16.mxu0 %v3282
          %3675 = vmatpush1.bf16.msra.mxu0 %v3281
          %3676 = vmatprep.subr.bf16.mxu0 %v3278
          %3677 = vmatpush1.bf16.msra.mxu0 %v3277
          %3678 = vmatprep.subr.bf16.mxu0 %v3274
          %3679 = vmatpush1.bf16.msra.mxu0 %v3273
          %3680 = vmatprep.subr.bf16.mxu0 %v3270
          %3681 = vmatpush1.bf16.msra.mxu0 %v3269
          %3682 = vmatprep.subr.bf16.mxu0 %v3266
          %3683 = vmatpush1.bf16.msra.mxu0 %v3265
          %3684 = vmatprep.subr.bf16.mxu0 %v3262
          %3685 = vmatpush1.bf16.msra.mxu0 %v3261
          %3686 = vmatprep.subr.bf16.mxu0 %v3258
          %3687 = vmatpush1.bf16.msra.mxu0 %v3257
          %3688 = vmatprep.subr.bf16.mxu0 0
          %3689 = vmatpush2.bf16.msra.mxu0 0
          %3690 = vmatprep.subr.bf16.mxu0 0
          %3691 = vmatpush2.bf16.msra.mxu0 0
          %3692 = vmatprep.subr.bf16.mxu0 0
          %3693 = vmatpush2.bf16.msra.mxu0 0
          %3694 = vmatprep.subr.bf16.mxu0 0
          %3695 = vmatpush2.bf16.msra.mxu0 0
          %3696 = vmatprep.subr.bf16.mxu0 0
          %3697 = vmatpush2.bf16.msra.mxu0 0
          %3698 = vmatprep.subr.bf16.mxu0 0
          %3699 = vmatpush2.bf16.msra.mxu0 0
          %3700 = vmatprep.subr.bf16.mxu0 0
          %3701 = vmatpush2.bf16.msra.mxu0 0
          %3702 = vmatprep.subr.bf16.mxu0 0
          %3703 = vmatpush2.bf16.msra.mxu0 0
          %3704 = vmatprep.mubr.bf16.mxu0 0
          %3705 = vmatmul.mubr.bf16.gmra.mxu0 %v3671
          %v3706 = vpop.f32.mrf.mxu0
          %v3707 = vadd.f32 0.0, %v3706
          %v3708 = vpop.f32.mrf.mxu0
          %v3709 = vadd.f32 0.0, %v3708
          %v3710 = vpop.f32.mrf.mxu0
          %v3711 = vpop.f32.mrf.mxu0
          %3712 = vdwg.mxu0
          %3713 = vmatprep.subr.bf16.mxu0 %v3288
          %3714 = vmatpush1.bf16.msra.mxu0 %v3287
          %3715 = vmatprep.subr.bf16.mxu0 %v3284
          %3716 = vmatpush1.bf16.msra.mxu0 %v3283
          %3717 = vmatprep.subr.bf16.mxu0 %v3280
          %3718 = vmatpush1.bf16.msra.mxu0 %v3279
          %3719 = vmatprep.subr.bf16.mxu0 %v3276
          %3720 = vmatpush1.bf16.msra.mxu0 %v3275
          %3721 = vmatprep.subr.bf16.mxu0 %v3272
          %3722 = vmatpush1.bf16.msra.mxu0 %v3271
          %3723 = vmatprep.subr.bf16.mxu0 %v3268
          %3724 = vmatpush1.bf16.msra.mxu0 %v3267
          %3725 = vmatprep.subr.bf16.mxu0 %v3264
          %3726 = vmatpush1.bf16.msra.mxu0 %v3263
          %3727 = vmatprep.subr.bf16.mxu0 %v3260
          %3728 = vmatpush1.bf16.msra.mxu0 %v3259
          %3729 = vmatprep.subr.bf16.mxu0 0
          %3730 = vmatpush2.bf16.msra.mxu0 0
          %3731 = vmatprep.subr.bf16.mxu0 0
          %3732 = vmatpush2.bf16.msra.mxu0 0
          %3733 = vmatprep.subr.bf16.mxu0 0
          %3734 = vmatpush2.bf16.msra.mxu0 0
          %3735 = vmatprep.subr.bf16.mxu0 0
          %3736 = vmatpush2.bf16.msra.mxu0 0
          %3737 = vmatprep.subr.bf16.mxu0 0
          %3738 = vmatpush2.bf16.msra.mxu0 0
          %3739 = vmatprep.subr.bf16.mxu0 0
          %3740 = vmatpush2.bf16.msra.mxu0 0
          %3741 = vmatprep.subr.bf16.mxu0 0
          %3742 = vmatpush2.bf16.msra.mxu0 0
          %3743 = vmatprep.subr.bf16.mxu0 0
          %3744 = vmatpush2.bf16.msra.mxu0 0
          %3745 = vmatprep.mubr.bf16.mxu0 0
          %3746 = vmatmul.mubr.bf16.gmra.mxu0 %v3671
          %v3747 = vpop.f32.mrf.mxu0
          %v3748 = vadd.f32 0.0, %v3747
          %v3749 = vpop.f32.mrf.mxu0
          %v3750 = vadd.f32 0.0, %v3749
          %v3751 = vpop.f32.mrf.mxu0
          %v3752 = vpop.f32.mrf.mxu0
          %3753 = vdwg.mxu0
          %v3754 = vadd.f32 %v3667, %v3707
          %v3755 = vadd.f32 %v3668, %v3709
          %v3756 = vadd.f32 %v3669, %v3748
          %v3757 = vadd.f32 %v3670, %v3750
          %v3758 = vxor.u32 %v3754, 2147483648
          %v3759 = vmul.f32 %v3758, 1.442695
          %v3760 = vpow.pop %v3759
          %v3761 = vadd.f32 %v3760, 1.0
          %v3762 = vrcp.pop %v3761
          %v3763 = vmul.f32 1.0, %v3762
          %v3764 = vxor.u32 %v3755, 2147483648
          %v3765 = vmul.f32 %v3764, 1.442695
          %v3766 = vpow.pop %v3765
          %v3767 = vadd.f32 %v3766, 1.0
          %v3768 = vrcp.pop %v3767
          %v3769 = vmul.f32 1.0, %v3768
          %v3770 = vtanh.pop %v3756
          %v3771 = vxor.u32 %v3757, 2147483648
          %v3772 = vmul.f32 %v3771, 1.442695
          %v3773 = vpow.pop %v3772
          %v3774 = vadd.f32 %v3773, 1.0
          %v3775 = vrcp.pop %v3774
          %v3776 = vmul.f32 1.0, %v3775
          %v3777 = vmul.f32 %v3769, %v3662
          %v3778 = vmul.f32 %v3763, %v3770
          %v3779 = vadd.f32 %v3777, %v3778
          %v3780 = vtanh.pop %v3779
          %v3781 = vmul.f32 %v3776, %v3780
          %s3782 = scalar_lea.vmem %s305, 32 [#allocation11]
          %3783 = vst [vmem:[%s3782] sm:$0xff] %v3781
          %v3784 = vld [vmem:[#allocation2 + $0x60] sm:$0xff]
          %v3785 = vld [vmem:[#allocation2 + $0x68] sm:$0xff]
          %v3786 = vld [vmem:[#allocation2 + $0x70] sm:$0xff]
          %v3787 = vld [vmem:[#allocation2 + $0x78] sm:$0xff]
          %v3788 = vpack.c.bf16 %v3781, %v3781
          %3789 = vmatprep.subr.bf16.mxu0 %v3286
          %3790 = vmatpush1.bf16.msra.mxu0 %v3285
          %3791 = vmatprep.subr.bf16.mxu0 %v3282
          %3792 = vmatpush1.bf16.msra.mxu0 %v3281
          %3793 = vmatprep.subr.bf16.mxu0 %v3278
          %3794 = vmatpush1.bf16.msra.mxu0 %v3277
          %3795 = vmatprep.subr.bf16.mxu0 %v3274
          %3796 = vmatpush1.bf16.msra.mxu0 %v3273
          %3797 = vmatprep.subr.bf16.mxu0 %v3270
          %3798 = vmatpush1.bf16.msra.mxu0 %v3269
          %3799 = vmatprep.subr.bf16.mxu0 %v3266
          %3800 = vmatpush1.bf16.msra.mxu0 %v3265
          %3801 = vmatprep.subr.bf16.mxu0 %v3262
          %3802 = vmatpush1.bf16.msra.mxu0 %v3261
          %3803 = vmatprep.subr.bf16.mxu0 %v3258
          %3804 = vmatpush1.bf16.msra.mxu0 %v3257
          %3805 = vmatprep.subr.bf16.mxu0 0
          %3806 = vmatpush2.bf16.msra.mxu0 0
          %3807 = vmatprep.subr.bf16.mxu0 0
          %3808 = vmatpush2.bf16.msra.mxu0 0
          %3809 = vmatprep.subr.bf16.mxu0 0
          %3810 = vmatpush2.bf16.msra.mxu0 0
          %3811 = vmatprep.subr.bf16.mxu0 0
          %3812 = vmatpush2.bf16.msra.mxu0 0
          %3813 = vmatprep.subr.bf16.mxu0 0
          %3814 = vmatpush2.bf16.msra.mxu0 0
          %3815 = vmatprep.subr.bf16.mxu0 0
          %3816 = vmatpush2.bf16.msra.mxu0 0
          %3817 = vmatprep.subr.bf16.mxu0 0
          %3818 = vmatpush2.bf16.msra.mxu0 0
          %3819 = vmatprep.subr.bf16.mxu0 0
          %3820 = vmatpush2.bf16.msra.mxu0 0
          %3821 = vmatprep.mubr.bf16.mxu0 0
          %3822 = vmatmul.mubr.bf16.gmra.mxu0 %v3788
          %v3823 = vpop.f32.mrf.mxu0
          %v3824 = vadd.f32 0.0, %v3823
          %v3825 = vpop.f32.mrf.mxu0
          %v3826 = vadd.f32 0.0, %v3825
          %v3827 = vpop.f32.mrf.mxu0
          %v3828 = vpop.f32.mrf.mxu0
          %3829 = vdwg.mxu0
          %3830 = vmatprep.subr.bf16.mxu0 %v3288
          %3831 = vmatpush1.bf16.msra.mxu0 %v3287
          %3832 = vmatprep.subr.bf16.mxu0 %v3284
          %3833 = vmatpush1.bf16.msra.mxu0 %v3283
          %3834 = vmatprep.subr.bf16.mxu0 %v3280
          %3835 = vmatpush1.bf16.msra.mxu0 %v3279
          %3836 = vmatprep.subr.bf16.mxu0 %v3276
          %3837 = vmatpush1.bf16.msra.mxu0 %v3275
          %3838 = vmatprep.subr.bf16.mxu0 %v3272
          %3839 = vmatpush1.bf16.msra.mxu0 %v3271
          %3840 = vmatprep.subr.bf16.mxu0 %v3268
          %3841 = vmatpush1.bf16.msra.mxu0 %v3267
          %3842 = vmatprep.subr.bf16.mxu0 %v3264
          %3843 = vmatpush1.bf16.msra.mxu0 %v3263
          %3844 = vmatprep.subr.bf16.mxu0 %v3260
          %3845 = vmatpush1.bf16.msra.mxu0 %v3259
          %3846 = vmatprep.subr.bf16.mxu0 0
          %3847 = vmatpush2.bf16.msra.mxu0 0
          %3848 = vmatprep.subr.bf16.mxu0 0
          %3849 = vmatpush2.bf16.msra.mxu0 0
          %3850 = vmatprep.subr.bf16.mxu0 0
          %3851 = vmatpush2.bf16.msra.mxu0 0
          %3852 = vmatprep.subr.bf16.mxu0 0
          %3853 = vmatpush2.bf16.msra.mxu0 0
          %3854 = vmatprep.subr.bf16.mxu0 0
          %3855 = vmatpush2.bf16.msra.mxu0 0
          %3856 = vmatprep.subr.bf16.mxu0 0
          %3857 = vmatpush2.bf16.msra.mxu0 0
          %3858 = vmatprep.subr.bf16.mxu0 0
          %3859 = vmatpush2.bf16.msra.mxu0 0
          %3860 = vmatprep.subr.bf16.mxu0 0
          %3861 = vmatpush2.bf16.msra.mxu0 0
          %3862 = vmatprep.mubr.bf16.mxu0 0
          %3863 = vmatmul.mubr.bf16.gmra.mxu0 %v3788
          %v3864 = vpop.f32.mrf.mxu0
          %v3865 = vadd.f32 0.0, %v3864
          %v3866 = vpop.f32.mrf.mxu0
          %v3867 = vadd.f32 0.0, %v3866
          %v3868 = vpop.f32.mrf.mxu0
          %v3869 = vpop.f32.mrf.mxu0
          %3870 = vdwg.mxu0
          %v3871 = vadd.f32 %v3784, %v3824
          %v3872 = vadd.f32 %v3785, %v3826
          %v3873 = vadd.f32 %v3786, %v3865
          %v3874 = vadd.f32 %v3787, %v3867
          %v3875 = vxor.u32 %v3871, 2147483648
          %v3876 = vmul.f32 %v3875, 1.442695
          %v3877 = vpow.pop %v3876
          %v3878 = vadd.f32 %v3877, 1.0
          %v3879 = vrcp.pop %v3878
          %v3880 = vmul.f32 1.0, %v3879
          %v3881 = vxor.u32 %v3872, 2147483648
          %v3882 = vmul.f32 %v3881, 1.442695
          %v3883 = vpow.pop %v3882
          %v3884 = vadd.f32 %v3883, 1.0
          %v3885 = vrcp.pop %v3884
          %v3886 = vmul.f32 1.0, %v3885
          %v3887 = vtanh.pop %v3873
          %v3888 = vxor.u32 %v3874, 2147483648
          %v3889 = vmul.f32 %v3888, 1.442695
          %v3890 = vpow.pop %v3889
          %v3891 = vadd.f32 %v3890, 1.0
          %v3892 = vrcp.pop %v3891
          %v3893 = vmul.f32 1.0, %v3892
          %v3894 = vmul.f32 %v3886, %v3779
          %v3895 = vmul.f32 %v3880, %v3887
          %v3896 = vadd.f32 %v3894, %v3895
          %v3897 = vtanh.pop %v3896
          %v3898 = vmul.f32 %v3893, %v3897
          %s3899 = scalar_lea.vmem %s305, 24 [#allocation11]
          %3900 = vst [vmem:[%s3899] sm:$0xff] %v3898
          %v3901 = vld [vmem:[#allocation2 + $0x40] sm:$0xff]
          %v3902 = vld [vmem:[#allocation2 + $0x48] sm:$0xff]
          %v3903 = vld [vmem:[#allocation2 + $0x50] sm:$0xff]
          %v3904 = vld [vmem:[#allocation2 + $0x58] sm:$0xff]
          %v3905 = vpack.c.bf16 %v3898, %v3898
          %3906 = vmatprep.subr.bf16.mxu0 %v3286
          %3907 = vmatpush1.bf16.msra.mxu0 %v3285
          %3908 = vmatprep.subr.bf16.mxu0 %v3282
          %3909 = vmatpush1.bf16.msra.mxu0 %v3281
          %3910 = vmatprep.subr.bf16.mxu0 %v3278
          %3911 = vmatpush1.bf16.msra.mxu0 %v3277
          %3912 = vmatprep.subr.bf16.mxu0 %v3274
          %3913 = vmatpush1.bf16.msra.mxu0 %v3273
          %3914 = vmatprep.subr.bf16.mxu0 %v3270
          %3915 = vmatpush1.bf16.msra.mxu0 %v3269
          %3916 = vmatprep.subr.bf16.mxu0 %v3266
          %3917 = vmatpush1.bf16.msra.mxu0 %v3265
          %3918 = vmatprep.subr.bf16.mxu0 %v3262
          %3919 = vmatpush1.bf16.msra.mxu0 %v3261
          %3920 = vmatprep.subr.bf16.mxu0 %v3258
          %3921 = vmatpush1.bf16.msra.mxu0 %v3257
          %3922 = vmatprep.subr.bf16.mxu0 0
          %3923 = vmatpush2.bf16.msra.mxu0 0
          %3924 = vmatprep.subr.bf16.mxu0 0
          %3925 = vmatpush2.bf16.msra.mxu0 0
          %3926 = vmatprep.subr.bf16.mxu0 0
          %3927 = vmatpush2.bf16.msra.mxu0 0
          %3928 = vmatprep.subr.bf16.mxu0 0
          %3929 = vmatpush2.bf16.msra.mxu0 0
          %3930 = vmatprep.subr.bf16.mxu0 0
          %3931 = vmatpush2.bf16.msra.mxu0 0
          %3932 = vmatprep.subr.bf16.mxu0 0
          %3933 = vmatpush2.bf16.msra.mxu0 0
          %3934 = vmatprep.subr.bf16.mxu0 0
          %3935 = vmatpush2.bf16.msra.mxu0 0
          %3936 = vmatprep.subr.bf16.mxu0 0
          %3937 = vmatpush2.bf16.msra.mxu0 0
          %3938 = vmatprep.mubr.bf16.mxu0 0
          %3939 = vmatmul.mubr.bf16.gmra.mxu0 %v3905
          %v3940 = vpop.f32.mrf.mxu0
          %v3941 = vadd.f32 0.0, %v3940
          %v3942 = vpop.f32.mrf.mxu0
          %v3943 = vadd.f32 0.0, %v3942
          %v3944 = vpop.f32.mrf.mxu0
          %v3945 = vpop.f32.mrf.mxu0
          %3946 = vdwg.mxu0
          %3947 = vmatprep.subr.bf16.mxu0 %v3288
          %3948 = vmatpush1.bf16.msra.mxu0 %v3287
          %3949 = vmatprep.subr.bf16.mxu0 %v3284
          %3950 = vmatpush1.bf16.msra.mxu0 %v3283
          %3951 = vmatprep.subr.bf16.mxu0 %v3280
          %3952 = vmatpush1.bf16.msra.mxu0 %v3279
          %3953 = vmatprep.subr.bf16.mxu0 %v3276
          %3954 = vmatpush1.bf16.msra.mxu0 %v3275
          %3955 = vmatprep.subr.bf16.mxu0 %v3272
          %3956 = vmatpush1.bf16.msra.mxu0 %v3271
          %3957 = vmatprep.subr.bf16.mxu0 %v3268
          %3958 = vmatpush1.bf16.msra.mxu0 %v3267
          %3959 = vmatprep.subr.bf16.mxu0 %v3264
          %3960 = vmatpush1.bf16.msra.mxu0 %v3263
          %3961 = vmatprep.subr.bf16.mxu0 %v3260
          %3962 = vmatpush1.bf16.msra.mxu0 %v3259
          %3963 = vmatprep.subr.bf16.mxu0 0
          %3964 = vmatpush2.bf16.msra.mxu0 0
          %3965 = vmatprep.subr.bf16.mxu0 0
          %3966 = vmatpush2.bf16.msra.mxu0 0
          %3967 = vmatprep.subr.bf16.mxu0 0
          %3968 = vmatpush2.bf16.msra.mxu0 0
          %3969 = vmatprep.subr.bf16.mxu0 0
          %3970 = vmatpush2.bf16.msra.mxu0 0
          %3971 = vmatprep.subr.bf16.mxu0 0
          %3972 = vmatpush2.bf16.msra.mxu0 0
          %3973 = vmatprep.subr.bf16.mxu0 0
          %3974 = vmatpush2.bf16.msra.mxu0 0
          %3975 = vmatprep.subr.bf16.mxu0 0
          %3976 = vmatpush2.bf16.msra.mxu0 0
          %3977 = vmatprep.subr.bf16.mxu0 0
          %3978 = vmatpush2.bf16.msra.mxu0 0
          %3979 = vmatprep.mubr.bf16.mxu0 0
          %3980 = vmatmul.mubr.bf16.gmra.mxu0 %v3905
          %v3981 = vpop.f32.mrf.mxu0
          %v3982 = vadd.f32 0.0, %v3981
          %v3983 = vpop.f32.mrf.mxu0
          %v3984 = vadd.f32 0.0, %v3983
          %v3985 = vpop.f32.mrf.mxu0
          %v3986 = vpop.f32.mrf.mxu0
          %3987 = vdwg.mxu0
          %v3988 = vadd.f32 %v3901, %v3941
          %v3989 = vadd.f32 %v3902, %v3943
          %v3990 = vadd.f32 %v3903, %v3982
          %v3991 = vadd.f32 %v3904, %v3984
          %v3992 = vxor.u32 %v3988, 2147483648
          %v3993 = vmul.f32 %v3992, 1.442695
          %v3994 = vpow.pop %v3993
          %v3995 = vadd.f32 %v3994, 1.0
          %v3996 = vrcp.pop %v3995
          %v3997 = vmul.f32 1.0, %v3996
          %v3998 = vxor.u32 %v3989, 2147483648
          %v3999 = vmul.f32 %v3998, 1.442695
          %v4000 = vpow.pop %v3999
          %v4001 = vadd.f32 %v4000, 1.0
          %v4002 = vrcp.pop %v4001
          %v4003 = vmul.f32 1.0, %v4002
          %v4004 = vtanh.pop %v3990
          %v4005 = vxor.u32 %v3991, 2147483648
          %v4006 = vmul.f32 %v4005, 1.442695
          %v4007 = vpow.pop %v4006
          %v4008 = vadd.f32 %v4007, 1.0
          %v4009 = vrcp.pop %v4008
          %v4010 = vmul.f32 1.0, %v4009
          %v4011 = vmul.f32 %v4003, %v3896
          %v4012 = vmul.f32 %v3997, %v4004
          %v4013 = vadd.f32 %v4011, %v4012
          %v4014 = vtanh.pop %v4013
          %v4015 = vmul.f32 %v4010, %v4014
          %s4016 = scalar_lea.vmem %s305, 16 [#allocation11]
          %4017 = vst [vmem:[%s4016] sm:$0xff] %v4015
          %v4018 = vld [vmem:[#allocation2 + $0x20] sm:$0xff]
          %v4019 = vld [vmem:[#allocation2 + $0x28] sm:$0xff]
          %v4020 = vld [vmem:[#allocation2 + $0x30] sm:$0xff]
          %v4021 = vld [vmem:[#allocation2 + $0x38] sm:$0xff]
          %v4022 = vpack.c.bf16 %v4015, %v4015
          %4023 = vmatprep.subr.bf16.mxu0 %v3286
          %4024 = vmatpush1.bf16.msra.mxu0 %v3285
          %4025 = vmatprep.subr.bf16.mxu0 %v3282
          %4026 = vmatpush1.bf16.msra.mxu0 %v3281
          %4027 = vmatprep.subr.bf16.mxu0 %v3278
          %4028 = vmatpush1.bf16.msra.mxu0 %v3277
          %4029 = vmatprep.subr.bf16.mxu0 %v3274
          %4030 = vmatpush1.bf16.msra.mxu0 %v3273
          %4031 = vmatprep.subr.bf16.mxu0 %v3270
          %4032 = vmatpush1.bf16.msra.mxu0 %v3269
          %4033 = vmatprep.subr.bf16.mxu0 %v3266
          %4034 = vmatpush1.bf16.msra.mxu0 %v3265
          %4035 = vmatprep.subr.bf16.mxu0 %v3262
          %4036 = vmatpush1.bf16.msra.mxu0 %v3261
          %4037 = vmatprep.subr.bf16.mxu0 %v3258
          %4038 = vmatpush1.bf16.msra.mxu0 %v3257
          %4039 = vmatprep.subr.bf16.mxu0 0
          %4040 = vmatpush2.bf16.msra.mxu0 0
          %4041 = vmatprep.subr.bf16.mxu0 0
          %4042 = vmatpush2.bf16.msra.mxu0 0
          %4043 = vmatprep.subr.bf16.mxu0 0
          %4044 = vmatpush2.bf16.msra.mxu0 0
          %4045 = vmatprep.subr.bf16.mxu0 0
          %4046 = vmatpush2.bf16.msra.mxu0 0
          %4047 = vmatprep.subr.bf16.mxu0 0
          %4048 = vmatpush2.bf16.msra.mxu0 0
          %4049 = vmatprep.subr.bf16.mxu0 0
          %4050 = vmatpush2.bf16.msra.mxu0 0
          %4051 = vmatprep.subr.bf16.mxu0 0
          %4052 = vmatpush2.bf16.msra.mxu0 0
          %4053 = vmatprep.subr.bf16.mxu0 0
          %4054 = vmatpush2.bf16.msra.mxu0 0
          %4055 = vmatprep.mubr.bf16.mxu0 0
          %4056 = vmatmul.mubr.bf16.gmra.mxu0 %v4022
          %v4057 = vpop.f32.mrf.mxu0
          %v4058 = vadd.f32 0.0, %v4057
          %v4059 = vpop.f32.mrf.mxu0
          %v4060 = vadd.f32 0.0, %v4059
          %v4061 = vpop.f32.mrf.mxu0
          %v4062 = vpop.f32.mrf.mxu0
          %4063 = vdwg.mxu0
          %4064 = vmatprep.subr.bf16.mxu0 %v3288
          %4065 = vmatpush1.bf16.msra.mxu0 %v3287
          %4066 = vmatprep.subr.bf16.mxu0 %v3284
          %4067 = vmatpush1.bf16.msra.mxu0 %v3283
          %4068 = vmatprep.subr.bf16.mxu0 %v3280
          %4069 = vmatpush1.bf16.msra.mxu0 %v3279
          %4070 = vmatprep.subr.bf16.mxu0 %v3276
          %4071 = vmatpush1.bf16.msra.mxu0 %v3275
          %4072 = vmatprep.subr.bf16.mxu0 %v3272
          %4073 = vmatpush1.bf16.msra.mxu0 %v3271
          %4074 = vmatprep.subr.bf16.mxu0 %v3268
          %4075 = vmatpush1.bf16.msra.mxu0 %v3267
          %4076 = vmatprep.subr.bf16.mxu0 %v3264
          %4077 = vmatpush1.bf16.msra.mxu0 %v3263
          %4078 = vmatprep.subr.bf16.mxu0 %v3260
          %4079 = vmatpush1.bf16.msra.mxu0 %v3259
          %4080 = vmatprep.subr.bf16.mxu0 0
          %4081 = vmatpush2.bf16.msra.mxu0 0
          %4082 = vmatprep.subr.bf16.mxu0 0
          %4083 = vmatpush2.bf16.msra.mxu0 0
          %4084 = vmatprep.subr.bf16.mxu0 0
          %4085 = vmatpush2.bf16.msra.mxu0 0
          %4086 = vmatprep.subr.bf16.mxu0 0
          %4087 = vmatpush2.bf16.msra.mxu0 0
          %4088 = vmatprep.subr.bf16.mxu0 0
          %4089 = vmatpush2.bf16.msra.mxu0 0
          %4090 = vmatprep.subr.bf16.mxu0 0
          %4091 = vmatpush2.bf16.msra.mxu0 0
          %4092 = vmatprep.subr.bf16.mxu0 0
          %4093 = vmatpush2.bf16.msra.mxu0 0
          %4094 = vmatprep.subr.bf16.mxu0 0
          %4095 = vmatpush2.bf16.msra.mxu0 0
          %4096 = vmatprep.mubr.bf16.mxu0 0
          %4097 = vmatmul.mubr.bf16.gmra.mxu0 %v4022
          %v4098 = vpop.f32.mrf.mxu0
          %v4099 = vadd.f32 0.0, %v4098
          %v4100 = vpop.f32.mrf.mxu0
          %v4101 = vadd.f32 0.0, %v4100
          %v4102 = vpop.f32.mrf.mxu0
          %v4103 = vpop.f32.mrf.mxu0
          %4104 = vdwg.mxu0
          %v4105 = vadd.f32 %v4018, %v4058
          %v4106 = vadd.f32 %v4019, %v4060
          %v4107 = vadd.f32 %v4020, %v4099
          %v4108 = vadd.f32 %v4021, %v4101
          %v4109 = vxor.u32 %v4105, 2147483648
          %v4110 = vmul.f32 %v4109, 1.442695
          %v4111 = vpow.pop %v4110
          %v4112 = vadd.f32 %v4111, 1.0
          %v4113 = vrcp.pop %v4112
          %v4114 = vmul.f32 1.0, %v4113
          %v4115 = vxor.u32 %v4106, 2147483648
          %v4116 = vmul.f32 %v4115, 1.442695
          %v4117 = vpow.pop %v4116
          %v4118 = vadd.f32 %v4117, 1.0
          %v4119 = vrcp.pop %v4118
          %v4120 = vmul.f32 1.0, %v4119
          %v4121 = vtanh.pop %v4107
          %v4122 = vxor.u32 %v4108, 2147483648
          %v4123 = vmul.f32 %v4122, 1.442695
          %v4124 = vpow.pop %v4123
          %v4125 = vadd.f32 %v4124, 1.0
          %v4126 = vrcp.pop %v4125
          %v4127 = vmul.f32 1.0, %v4126
          %v4128 = vmul.f32 %v4120, %v4013
          %v4129 = vmul.f32 %v4114, %v4121
          %v4130 = vadd.f32 %v4128, %v4129
          %v4131 = vtanh.pop %v4130
          %v4132 = vmul.f32 %v4127, %v4131
          %s4133 = scalar_lea.vmem %s305, 8 [#allocation11]
          %4134 = vst [vmem:[%s4133] sm:$0xff] %v4132
          %v4135 = vld [vmem:[#allocation2] sm:$0xff]
          %v4136 = vld [vmem:[#allocation2 + $0x8] sm:$0xff]
          %v4137 = vld [vmem:[#allocation2 + $0x10] sm:$0xff]
          %v4138 = vld [vmem:[#allocation2 + $0x18] sm:$0xff]
          %v4139 = vpack.c.bf16 %v4132, %v4132
          %4140 = vmatprep.subr.bf16.mxu0 %v3286
          %4141 = vmatpush1.bf16.msra.mxu0 %v3285
          %4142 = vmatprep.subr.bf16.mxu0 %v3282
          %4143 = vmatpush1.bf16.msra.mxu0 %v3281
          %4144 = vmatprep.subr.bf16.mxu0 %v3278
          %4145 = vmatpush1.bf16.msra.mxu0 %v3277
          %4146 = vmatprep.subr.bf16.mxu0 %v3274
          %4147 = vmatpush1.bf16.msra.mxu0 %v3273
          %4148 = vmatprep.subr.bf16.mxu0 %v3270
          %4149 = vmatpush1.bf16.msra.mxu0 %v3269
          %4150 = vmatprep.subr.bf16.mxu0 %v3266
          %4151 = vmatpush1.bf16.msra.mxu0 %v3265
          %4152 = vmatprep.subr.bf16.mxu0 %v3262
          %4153 = vmatpush1.bf16.msra.mxu0 %v3261
          %4154 = vmatprep.subr.bf16.mxu0 %v3258
          %4155 = vmatpush1.bf16.msra.mxu0 %v3257
          %4156 = vmatprep.subr.bf16.mxu0 0
          %4157 = vmatpush2.bf16.msra.mxu0 0
          %4158 = vmatprep.subr.bf16.mxu0 0
          %4159 = vmatpush2.bf16.msra.mxu0 0
          %4160 = vmatprep.subr.bf16.mxu0 0
          %4161 = vmatpush2.bf16.msra.mxu0 0
          %4162 = vmatprep.subr.bf16.mxu0 0
          %4163 = vmatpush2.bf16.msra.mxu0 0
          %4164 = vmatprep.subr.bf16.mxu0 0
          %4165 = vmatpush2.bf16.msra.mxu0 0
          %4166 = vmatprep.subr.bf16.mxu0 0
          %4167 = vmatpush2.bf16.msra.mxu0 0
          %4168 = vmatprep.subr.bf16.mxu0 0
          %4169 = vmatpush2.bf16.msra.mxu0 0
          %4170 = vmatprep.subr.bf16.mxu0 0
          %4171 = vmatpush2.bf16.msra.mxu0 0
          %4172 = vmatprep.mubr.bf16.mxu0 0
          %4173 = vmatmul.mubr.bf16.gmra.mxu0 %v4139
          %v4174 = vpop.f32.mrf.mxu0
          %v4175 = vadd.f32 0.0, %v4174
          %v4176 = vpop.f32.mrf.mxu0
          %v4177 = vadd.f32 0.0, %v4176
          %v4178 = vpop.f32.mrf.mxu0
          %v4179 = vpop.f32.mrf.mxu0
          %4180 = vdwg.mxu0
          %4181 = vmatprep.subr.bf16.mxu0 %v3288
          %4182 = vmatpush1.bf16.msra.mxu0 %v3287
          %4183 = vmatprep.subr.bf16.mxu0 %v3284
          %4184 = vmatpush1.bf16.msra.mxu0 %v3283
          %4185 = vmatprep.subr.bf16.mxu0 %v3280
          %4186 = vmatpush1.bf16.msra.mxu0 %v3279
          %4187 = vmatprep.subr.bf16.mxu0 %v3276
          %4188 = vmatpush1.bf16.msra.mxu0 %v3275
          %4189 = vmatprep.subr.bf16.mxu0 %v3272
          %4190 = vmatpush1.bf16.msra.mxu0 %v3271
          %4191 = vmatprep.subr.bf16.mxu0 %v3268
          %4192 = vmatpush1.bf16.msra.mxu0 %v3267
          %4193 = vmatprep.subr.bf16.mxu0 %v3264
          %4194 = vmatpush1.bf16.msra.mxu0 %v3263
          %4195 = vmatprep.subr.bf16.mxu0 %v3260
          %4196 = vmatpush1.bf16.msra.mxu0 %v3259
          %4197 = vmatprep.subr.bf16.mxu0 0
          %4198 = vmatpush2.bf16.msra.mxu0 0
          %4199 = vmatprep.subr.bf16.mxu0 0
          %4200 = vmatpush2.bf16.msra.mxu0 0
          %4201 = vmatprep.subr.bf16.mxu0 0
          %4202 = vmatpush2.bf16.msra.mxu0 0
          %4203 = vmatprep.subr.bf16.mxu0 0
          %4204 = vmatpush2.bf16.msra.mxu0 0
          %4205 = vmatprep.subr.bf16.mxu0 0
          %4206 = vmatpush2.bf16.msra.mxu0 0
          %4207 = vmatprep.subr.bf16.mxu0 0
          %4208 = vmatpush2.bf16.msra.mxu0 0
          %4209 = vmatprep.subr.bf16.mxu0 0
          %4210 = vmatpush2.bf16.msra.mxu0 0
          %4211 = vmatprep.subr.bf16.mxu0 0
          %4212 = vmatpush2.bf16.msra.mxu0 0
          %4213 = vmatprep.mubr.bf16.mxu0 0
          %4214 = vmatmul.mubr.bf16.gmra.mxu0 %v4139
          %v4215 = vpop.f32.mrf.mxu0
          %v4216 = vadd.f32 0.0, %v4215
          %v4217 = vpop.f32.mrf.mxu0
          %v4218 = vadd.f32 0.0, %v4217
          %v4219 = vpop.f32.mrf.mxu0
          %v4220 = vpop.f32.mrf.mxu0
          %4221 = vdwg.mxu0
          %v4222 = vadd.f32 %v4135, %v4175
          %v4223 = vadd.f32 %v4136, %v4177
          %v4224 = vadd.f32 %v4137, %v4216
          %v4225 = vadd.f32 %v4138, %v4218
          %v4226 = vxor.u32 %v4222, 2147483648
          %v4227 = vmul.f32 %v4226, 1.442695
          %v4228 = vpow.pop %v4227
          %v4229 = vadd.f32 %v4228, 1.0
          %v4230 = vrcp.pop %v4229
          %v4231 = vmul.f32 1.0, %v4230
          %v4232 = vxor.u32 %v4223, 2147483648
          %v4233 = vmul.f32 %v4232, 1.442695
          %v4234 = vpow.pop %v4233
          %v4235 = vadd.f32 %v4234, 1.0
          %v4236 = vrcp.pop %v4235
          %v4237 = vmul.f32 1.0, %v4236
          %v4238 = vtanh.pop %v4224
          %v4239 = vxor.u32 %v4225, 2147483648
          %v4240 = vmul.f32 %v4239, 1.442695
          %v4241 = vpow.pop %v4240
          %v4242 = vadd.f32 %v4241, 1.0
          %v4243 = vrcp.pop %v4242
          %v4244 = vmul.f32 1.0, %v4243
          %v4245 = vmul.f32 %v4237, %v4130
          %v4246 = vmul.f32 %v4231, %v4238
          %v4247 = vadd.f32 %v4245, %v4246
          %v4248 = vtanh.pop %v4247
          %v4249 = vmul.f32 %v4244, %v4248
          %4250 = vst [vmem:[%s305] sm:$0xff] %v4249
        $region60: #{tpu_custom_call.1} parent=35 // pred_fallthru
          _
        %s4251 = sand.u32 %s132, 1
        %s4252 = scalar_lea.sflag [#allocation5], %s4251
        %s4253 = sand.u32 %s132, 1
        %s4254 = smul.addr %s4253, 64
        %s4255 = scalar_lea.vmem [#allocation11], %s4254
        // Predicated region
        $region61: #{tpu_custom_call.1} parent=35 // pred_check
          %p4256 = pneg %p142
        $region62: #{tpu_custom_call.1} parent=35 // pred_check_branch
          %4258 = sbr.rel (%p4256) target = $region64
        $region63: #{tpu_custom_call.1} parent=35 // pred_region
          %s4260 = ssub.s32 1024, 1024
          %4261 = vsyncadd %s4252, %s4260
          %s4262 = smul.addr %s25, 8
          %s4263 = smul.addr %s4262, 128
          %s4264 = scalar_lea.hbm %s4, %s4263
          %s4265 = sshll.u32 %s4255, 4
          %s4266 = int_to_ptr.vmem [resolvable:$true] %s4265
          %4271 = dma.vmem_to_hbm [thread:$0]  %s4266, 1024, %s4264, %s4252, 128, 128, 8
        $region64: #{tpu_custom_call.1} parent=35 // pred_fallthru
          _
      $region36: #{tpu_custom_call.1} parent=5 // pred_fallthru
        _
      %p4272 = scmp.le.s32.totalorder 2, %s20
      // Predicated region
      $region65: #{tpu_custom_call.1} parent=5 // pred_check
        %p4273 = pneg %p4272
      $region66: #{tpu_custom_call.1} parent=5 // pred_check_branch
        %4275 = sbr.rel (%p4273) target = $region68
      $region67: #{tpu_custom_call.1} parent=5 // pred_region
        %s4276 = ssub.s32 %s20, 2
        // Predicated region
        $region69: #{tpu_custom_call.1} parent=67 // pred_check
          %p4277 = pneg %p148
        $region70: #{tpu_custom_call.1} parent=67 // pred_check_branch
          %4279 = sbr.rel (%p4277) target = $region72
        $region71: #{tpu_custom_call.1} parent=67 // pred_region
          %s4280 = sand.u32 %s133, 1
          %s4281 = scalar_lea.sflag [#allocation5], %s4280
          %s4282 = sand.u32 %s133, 1
          %s4283 = smul.addr %s4282, 64
          %s4284 = scalar_lea.vmem [#allocation11], %s4283
          %4285 = dma.done %s4281, 1024
        $region72: #{tpu_custom_call.1} parent=67 // pred_fallthru
          _
      $region68: #{tpu_custom_call.1} parent=5 // pred_fallthru
        _
    $region6: #{tpu_custom_call.1} parent=1 // loop_footer
      %s24 = sadd.s32 1, %s20
    $region7: #{tpu_custom_call.1} parent=1 // loop_footer_branch
      %19 = sbr.rel target = $region3
    $region8: #{tpu_custom_call.1} parent=1 // loop_exit
      _
    %4286 = vsyncpa [#allocation4], 1
    %s4287 = scalar_lea.sflag [#allocation4], 1
    %4288 = vsyncpa %s4287, 1
    %4289 = vsyncpa [#allocation7], 1
    %s4290 = scalar_lea.sflag [#allocation7], 1
    %4291 = vsyncpa %s4290, 1
    %4292 = vsyncpa [#allocation10], 1
    %s4293 = scalar_lea.sflag [#allocation10], 1
    %4294 = vsyncpa %s4293, 1
    %4295 = vsyncpa [#allocation5], 1
    %s4296 = scalar_lea.sflag [#allocation5], 1
    %4297 = vsyncpa %s4296, 1

</llo_original>
